<compile_context>
chip_gen: v6e
topology: v6e:2x2x1
jax: 0.10.0
libtpu: 0.0.40
codegen_flags: <defaults>
</compile_context>

<pallas_src>
import functools

import jax
import jax.numpy as jnp
from jax import lax
from jax.experimental import pallas as pl
from jax.experimental.pallas import tpu as pltpu

SELU_ALPHA = 1.6732632423543772
SELU_SCALE = 1.0507009873554805
NUM_CLASSES = 47

TILE_M = 512                 # row tile for matmul-style kernels
LSTM_TIME_BLOCK = 16         # timesteps per LSTM grid step
VMEM_LIMIT = 32 * 1024 * 1024


def _round_up(x, m):
    return ((x + m - 1) // m) * m


def _elu(y):
    return jnp.where(y > 0, y, jnp.exp(y) - 1.0)


def _selu(y):
    return SELU_SCALE * jnp.where(y > 0, y, SELU_ALPHA * (jnp.exp(y) - 1.0))


# ----------------------------- Pallas kernels ------------------------------

def _linear_kernel(x_ref, w_ref, b_ref, o_ref, *, act):
    """Row-tiled  act(x @ w + b).  bf16 operands, f32 accumulation."""
    y = jnp.dot(x_ref[...], w_ref[...], preferred_element_type=jnp.float32)
    y = y + b_ref[...]
    if act == "elu":
        y = _elu(y)
    elif act == "selu":
        y = _selu(y)
    o_ref[...] = y.astype(o_ref.dtype)


def linear(x, w, b, act="none", out_dtype=jnp.float32, tile_m=TILE_M):
    """y = act(x @ w + b).  x:(M,K), w:(K,N), b:(N,)."""
    M, K = x.shape
    N = w.shape[1]
    tm = tile_m if M >= tile_m else _round_up(M, 16)
    Mp = _round_up(M, tm)
    xp = jnp.pad(x, ((0, Mp - M), (0, 0))) if Mp != M else x
    out = pl.pallas_call(
        functools.partial(_linear_kernel, act=act),
        out_shape=jax.ShapeDtypeStruct((Mp, N), out_dtype),
        grid=(Mp // tm,),
        in_specs=[
            pl.BlockSpec((tm, K), lambda i: (i, 0)),
            pl.BlockSpec((K, N), lambda i: (0, 0)),
            pl.BlockSpec((1, N), lambda i: (0, 0)),
        ],
        out_specs=pl.BlockSpec((tm, N), lambda i: (i, 0)),
        compiler_params=pltpu.CompilerParams(
            dimension_semantics=("parallel",),
            vmem_limit_bytes=VMEM_LIMIT),
    )(xp.astype(jnp.bfloat16), w.astype(jnp.bfloat16),
      b.reshape(1, N).astype(jnp.float32))
    return out[:M]


def _conv3_kernel(x0_ref, x1_ref, x2_ref, w0_ref, w1_ref, w2_ref, b_ref, o_ref):
    """K=3 tap-accumulated Conv1d + folded eval-BatchNorm + ELU."""
    y = jnp.dot(x0_ref[...], w0_ref[...], preferred_element_type=jnp.float32)
    y = y + jnp.dot(x1_ref[...], w1_ref[...], preferred_element_type=jnp.float32)
    y = y + jnp.dot(x2_ref[...], w2_ref[...], preferred_element_type=jnp.float32)
    y = y + b_ref[...]
    o_ref[...] = _elu(y).astype(o_ref.dtype)


def conv1d_bn_elu_tm(x, w, bn, stride, padding, tile_m=TILE_M):
    """Time-major Conv1d(bias=False)+BN(eval)+ELU.
    x: (L, B, Cin) -> (Lout, B, Cout) in bf16.  Taps are cheap strided slices
    (no im2col expansion, no NCL transposes)."""
    L, B, Cin = x.shape
    Cout, _, K = w.shape
    assert K == 3
    gamma, beta, mean, var = bn
    s = gamma / jnp.sqrt(var + 1e-5)
    w_f = w.astype(jnp.float32) * s[:, None, None]
    b_f = beta - mean * s
    if padding:
        x = jnp.pad(x, ((padding, padding), (0, 0), (0, 0)))
    Lp = x.shape[0]
    Lout = (Lp - K) // stride + 1
    M = Lout * B
    taps = [x[k: k + stride * (Lout - 1) + 1: stride]
            .reshape(M, Cin).astype(jnp.bfloat16) for k in range(K)]
    wks = [w_f[:, :, k].T.astype(jnp.bfloat16) for k in range(K)]   # (Cin, Cout)

    tm = tile_m if M >= tile_m else _round_up(M, 16)
    Mp = _round_up(M, tm)
    if Mp != M:
        taps = [jnp.pad(t, ((0, Mp - M), (0, 0))) for t in taps]

    y = pl.pallas_call(
        _conv3_kernel,
        out_shape=jax.ShapeDtypeStruct((Mp, Cout), jnp.bfloat16),
        grid=(Mp // tm,),
        in_specs=[pl.BlockSpec((tm, Cin), lambda i: (i, 0))] * 3
                 + [pl.BlockSpec((Cin, Cout), lambda i: (0, 0))] * 3
                 + [pl.BlockSpec((1, Cout), lambda i: (0, 0))],
        out_specs=pl.BlockSpec((tm, Cout), lambda i: (i, 0)),
        compiler_params=pltpu.CompilerParams(
            dimension_semantics=("parallel",),
            vmem_limit_bytes=VMEM_LIMIT),
    )(*taps, *wks, b_f.reshape(1, Cout).astype(jnp.float32))
    return y[:M].reshape(Lout, B, Cout)


def _bilstm_block_kernel(bounds_ref, xg_ref, whh_ref, o_ref, h_sc, c_sc, *, H, TS, B):
    """TS timesteps of the fused (fwd|bwd) LSTM recurrence per grid step.
    Rows 0..B-1 are the forward direction; rows B..2B-1 are the (time-flipped)
    backward direction.  Per-row [start, end) bounds emulate packed sequences."""
    blk = pl.program_id(0)

    @pl.when(blk == 0)
    def _():
        h_sc[...] = jnp.zeros_like(h_sc)
        c_sc[...] = jnp.zeros_like(c_sc)

    start = bounds_ref[:, 0:1]                     # (2B, 1) int32
    end = bounds_ref[:, 1:2]                       # (2B, 1) int32
    whh = whh_ref[...]                             # (H, 8H) bf16: [W_hh_fwd | W_hh_bwd]
    twoB = 2 * B
    is_fwd = lax.broadcasted_iota(jnp.int32, (twoB, 1), 0) < B

    def step(s, carry):
        h, c = carry                               # (2B, H) f32
        t = blk * TS + s
        # one wide recurrent matmul; each row keeps only its direction's 4H half
        rec8 = jnp.dot(h.astype(jnp.bfloat16), whh,
                       preferred_element_type=jnp.float32)       # (2B, 8H)
        rec = jnp.where(is_fwd, rec8[:, :4 * H], rec8[:, 4 * H:])
        gates = xg_ref[s].astype(jnp.float32) + rec              # (2B, 4H) order i,f,o,g
        sig = jax.nn.sigmoid(gates[:, :3 * H])
        i_g = sig[:, :H]
        f_g = sig[:, H:2 * H]
        o_g = sig[:, 2 * H:3 * H]
        g_g = jnp.tanh(gates[:, 3 * H:])
        c_new = f_g * c + i_g * g_g
        h_new = o_g * jnp.tanh(c_new)
        m = jnp.logical_and(t >= start, t < end).astype(jnp.float32)   # (2B, 1)
        c = m * c_new + (1.0 - m) * c
        h = m * h_new + (1.0 - m) * h
        o_ref[s] = (h * m).astype(o_ref.dtype)     # zero outside valid window
        return (h, c)

    h, c = lax.fori_loop(0, TS, step, (h_sc[...], c_sc[...]), unroll=True)
    h_sc[...] = h
    c_sc[...] = c


def bilstm_scan(xg_cat, whh_cat, bounds, *, H, TS):
    """xg_cat: (T1p, 2B, 4H) bf16, whh_cat: (H, 8H) bf16, bounds: (2B, 2) int32."""
    T1p, twoB, G = xg_cat.shape
    B = twoB // 2
    return pl.pallas_call(
        functools.partial(_bilstm_block_kernel, H=H, TS=TS, B=B),
        out_shape=jax.ShapeDtypeStruct((T1p, twoB, H), jnp.float32),
        grid=(T1p // TS,),
        in_specs=[
            pl.BlockSpec((twoB, 2), lambda i: (0, 0)),
            pl.BlockSpec((TS, twoB, G), lambda i: (i, 0, 0)),
            pl.BlockSpec((H, 2 * G), lambda i: (0, 0)),
        ],
        out_specs=pl.BlockSpec((TS, twoB, H), lambda i: (i, 0, 0)),
        scratch_shapes=[pltpu.VMEM((twoB, H), jnp.float32),
                        pltpu.VMEM((twoB, H), jnp.float32)],
        compiler_params=pltpu.CompilerParams(
            dimension_semantics=("arbitrary",),
            vmem_limit_bytes=VMEM_LIMIT),
    )(bounds, xg_cat, whh_cat)


def _mlp_head_kernel(z_ref, w1_ref, b1_ref, w2_ref, b2_ref, wc_ref, bc_ref, o_ref):
    """Fused transformer MLP + classifier: SELU(zW1+b1) -> SELU(.W2+b2) -> .Wc+bc.
    Dropout(0.2) is identity in eval mode."""
    a = jnp.dot(z_ref[...], w1_ref[...], preferred_element_type=jnp.float32) + b1_ref[...]
    a = _selu(a)
    a = jnp.dot(a.astype(jnp.bfloat16), w2_ref[...],
                preferred_element_type=jnp.float32) + b2_ref[...]
    a = _selu(a)
    y = jnp.dot(a.astype(jnp.bfloat16), wc_ref[...],
                preferred_element_type=jnp.float32) + bc_ref[...]
    o_ref[...] = y.astype(o_ref.dtype)


def mlp_head(z, w1, b1, w2, b2, wc, bc, tile_m=TILE_M):
    M, H = z.shape
    C = wc.shape[1]
    Cp = _round_up(C, 128)                         # lane-dense output stores
    wc_p = jnp.pad(wc, ((0, 0), (0, Cp - C)))
    bc_p = jnp.pad(bc, ((0, Cp - C),))
    tm = tile_m if M >= tile_m else _round_up(M, 16)
    Mp = _round_up(M, tm)
    zp = jnp.pad(z, ((0, Mp - M), (0, 0))) if Mp != M else z
    out = pl.pallas_call(
        _mlp_head_kernel,
        out_shape=jax.ShapeDtypeStruct((Mp, Cp), jnp.float32),
        grid=(Mp // tm,),
        in_specs=[
            pl.BlockSpec((tm, H), lambda i: (i, 0)),
            pl.BlockSpec((H, H), lambda i: (0, 0)),
            pl.BlockSpec((1, H), lambda i: (0, 0)),
            pl.BlockSpec((H, H), lambda i: (0, 0)),
            pl.BlockSpec((1, H), lambda i: (0, 0)),
            pl.BlockSpec((H, Cp), lambda i: (0, 0)),
            pl.BlockSpec((1, Cp), lambda i: (0, 0)),
        ],
        out_specs=pl.BlockSpec((tm, Cp), lambda i: (i, 0)),
        compiler_params=pltpu.CompilerParams(
            dimension_semantics=("parallel",),
            vmem_limit_bytes=VMEM_LIMIT),
    )(zp.astype(jnp.bfloat16),
      w1.astype(jnp.bfloat16), b1.reshape(1, H).astype(jnp.float32),
      w2.astype(jnp.bfloat16), b2.reshape(1, H).astype(jnp.float32),
      wc_p.astype(jnp.bfloat16), bc_p.reshape(1, Cp).astype(jnp.float32))
    return out[:M, :C]


# ------------------------------ model pieces -------------------------------

def _permute_gates(a, H):
    """PyTorch gate order (i, f, g, o) -> kernel order (i, f, o, g) along dim 0."""
    return jnp.concatenate([a[:2 * H], a[3 * H:4 * H], a[2 * H:3 * H]], axis=0)


def a_base_forward(params, utterance_batch, utterance_len_batch):
    H = params["hidden_size"]
    T, B, _ = utterance_batch.shape

    # Feature extractor runs directly in time-major (T, B, C) layout; torch's
    # permute(1,2,0) to NCL is only a layout choice -- results are identical.
    f1 = conv1d_bn_elu_tm(utterance_batch, params["conv1_w"], params["bn1"],
                          stride=2, padding=0)          # (T1, B, H//4)
    f2 = conv1d_bn_elu_tm(f1, params["conv2_w"], params["bn2"],
                          stride=1, padding=1)          # (T1, B, H//2)

    feat_len = ((utterance_len_batch - 3) // 2 + 1).astype(jnp.int32)    # (B,)
    T1 = f2.shape[0]
    TS = min(LSTM_TIME_BLOCK, T1)
    T1p = _round_up(T1, TS)

    # per-row valid-time bounds for the fused (fwd | time-flipped-bwd) scan
    start = jnp.concatenate([jnp.zeros((B,), jnp.int32), T1p - feat_len])
    end = jnp.concatenate([feat_len, jnp.full((B,), T1p, jnp.int32)])
    bounds = jnp.stack([start, end], axis=1)                             # (2B, 2)

    h = f2
    for layer in params["lstm"]:
        (w_ih_f, w_hh_f, b_ih_f, b_hh_f), (w_ih_b, w_hh_b, b_ih_b, b_hh_b) = layer
        # fuse both directions' input projections into one (In, 8H) matmul
        w_ih_cat = jnp.concatenate([_permute_gates(w_ih_f, H).T,
                                    _permute_gates(w_ih_b, H).T], axis=1)
        whh_cat = jnp.concatenate([_permute_gates(w_hh_f, H).T,
                                   _permute_gates(w_hh_b, H).T], axis=1)  # (H, 8H)
        b_cat = jnp.concatenate([_permute_gates(b_ih_f + b_hh_f, H),
                                 _permute_gates(b_ih_b + b_hh_b, H)])     # (8H,)

        In = h.shape[-1]
        xg = linear(h.reshape(T1 * B, In), w_ih_cat, b_cat, out_dtype=jnp.bfloat16)
        xg = xg.reshape(T1, B, 8 * H)
        xg_f, xg_b = xg[:, :, :4 * H], xg[:, :, 4 * H:]
        if T1p != T1:
            pad = ((0, T1p - T1), (0, 0), (0, 0))
            xg_f = jnp.pad(xg_f, pad)
            xg_b = jnp.pad(xg_b, pad)
        xg_cat = jnp.concatenate([xg_f, jnp.flip(xg_b, axis=0)], axis=1)  # (T1p, 2B, 4H)

        out = bilstm_scan(xg_cat, whh_cat, bounds, H=H, TS=TS)            # (T1p, 2B, H)
        out_f = out[:T1, :B]
        out_b = jnp.flip(out[:, B:], axis=0)[:T1]
        h = jnp.concatenate([out_f, out_b], axis=-1)                      # (T1, B, 2H)

    # TODO(synk): torch module feeds the 2H-wide biLSTM output into Linear(H, H);
    # we sum the forward/backward halves before the H-wide head.
    z = (h[..., :H] + h[..., H:]).reshape(T1 * B, H)
    logits = mlp_head(z, params["t_w1"].T, params["t_b1"],
                      params["t_w2"].T, params["t_b2"],
                      params["cls_w"].T, params["cls_b"])                 # (T1*B, 47)
    return logits.reshape(T1, B, NUM_CLASSES), feat_len


# ----------------------------- parameter init ------------------------------

def init_params(key, H):
    keys = iter(jax.random.split(key, 64))

    def nrm(shape, scale=0.1):
        return scale * jax.random.normal(next(keys), shape, dtype=jnp.float32)

    def bn(c):
        gamma = 1.0 + 0.1 * jax.random.normal(next(keys), (c,), dtype=jnp.float32)
        return (gamma, nrm((c,)), nrm((c,)), jnp.ones((c,), jnp.float32))

    p = {"hidden_size": H}
    p["conv1_w"] = nrm((H // 4, 40, 3))
    p["bn1"] = bn(H // 4)
    p["conv2_w"] = nrm((H // 2, H // 4, 3))
    p["bn2"] = bn(H // 2)

    lstm = []
    for in_size in (H // 2, 2 * H, 2 * H):
        layer = []
        for _ in range(2):  # forward, backward directions (PyTorch layout, gate order i,f,g,o)
            layer.append((nrm((4 * H, in_size)), nrm((4 * H, H)),
                          nrm((4 * H,)), nrm((4 * H,))))
        lstm.append(layer)
    p["lstm"] = lstm

    p["t_w1"], p["t_b1"] = nrm((H, H)), nrm((H,))
    p["t_w2"], p["t_b2"] = nrm((H, H)), nrm((H,))
    p["cls_w"], p["cls_b"] = nrm((NUM_CLASSES, H)), nrm((NUM_CLASSES,))
    return p


if __name__ == "__main__":
    key = jax.random.PRNGKey(0)
    kp, kx = jax.random.split(key)

    H = 32           # hidden_size
    T, B = 16, 2     # seq length (frames), batch
    params = init_params(kp, H)

    utterance_batch = jax.random.normal(kx, (T, B, 40), dtype=jnp.float32)
    utterance_len_batch = jnp.array([16, 12], dtype=jnp.int32)

    fwd = jax.jit(functools.partial(a_base_forward, params))
    logits, feat_len = fwd(utterance_batch, utterance_len_batch)
    jax.block_until_ready((logits, feat_len))

    T1 = (T - 3) // 2 + 1
    assert logits.shape == (T1, B, NUM_CLASSES), logits.shape
    assert feat_len.shape == (B,) and feat_len.dtype == jnp.int32
    assert bool(jnp.all(jnp.isfinite(logits)))
    print("KERNEL_OK")
</pallas_src>

<mosaic_0001>
module attributes {stable_mosaic.version = 11 : i64} {
  func.func @_conv3_kernel(%arg0: i32, %arg1: memref<16x8xbf16, #tpu.memory_space<vmem>>, %arg2: memref<16x8xbf16, #tpu.memory_space<vmem>>, %arg3: memref<16x8xbf16, #tpu.memory_space<vmem>>, %arg4: memref<8x16xbf16, #tpu.memory_space<vmem>>, %arg5: memref<8x16xbf16, #tpu.memory_space<vmem>>, %arg6: memref<8x16xbf16, #tpu.memory_space<vmem>>, %arg7: memref<1x16xf32, #tpu.memory_space<vmem>>, %arg8: memref<16x16xbf16, #tpu.memory_space<vmem>>) attributes {dimension_semantics = [#tpu.dimension_semantics<parallel>], iteration_bounds = array<i64: 1>, scalar_prefetch = 0 : i64, scratch_operands = 0 : i64, tpu.core_type = #tpu.core_type<tc>, window_params = [{transform_indices = @transform_0, window_bounds = array<i64: 16, 8>}, {transform_indices = @transform_1, window_bounds = array<i64: 16, 8>}, {transform_indices = @transform_2, window_bounds = array<i64: 16, 8>}, {pipeline_mode = #tpu.pipeline_mode<synchronous>, transform_indices = @transform_3, window_bounds = array<i64: 8, 16>}, {pipeline_mode = #tpu.pipeline_mode<synchronous>, transform_indices = @transform_4, window_bounds = array<i64: 8, 16>}, {pipeline_mode = #tpu.pipeline_mode<synchronous>, transform_indices = @transform_5, window_bounds = array<i64: 8, 16>}, {pipeline_mode = #tpu.pipeline_mode<synchronous>, transform_indices = @transform_6, window_bounds = array<i64: 1, 16>}, {transform_indices = @transform_7, window_bounds = array<i64: 16, 16>}]} {
    %c0 = arith.constant 0 : index
    %c0_0 = arith.constant 0 : index
    %0 = vector.load %arg1[%c0, %c0_0] : memref<16x8xbf16, #tpu.memory_space<vmem>>, vector<16x8xbf16>
    %c0_1 = arith.constant 0 : index
    %c0_2 = arith.constant 0 : index
    %1 = vector.load %arg4[%c0_1, %c0_2] : memref<8x16xbf16, #tpu.memory_space<vmem>>, vector<8x16xbf16>
    %cst = arith.constant dense<0.000000e+00> : vector<16x16xf32>
    %2 = tpu.matmul %0, %1, %cst {dimension_numbers = #tpu.dot_dimension_numbers<[1], [0], [0], [1], [0, 0, 1, 1], [], []>} : vector<16x8xbf16>, vector<8x16xbf16>, vector<16x16xf32> -> vector<16x16xf32>
    %c0_3 = arith.constant 0 : index
    %c0_4 = arith.constant 0 : index
    %3 = vector.load %arg2[%c0_3, %c0_4] : memref<16x8xbf16, #tpu.memory_space<vmem>>, vector<16x8xbf16>
    %c0_5 = arith.constant 0 : index
    %c0_6 = arith.constant 0 : index
    %4 = vector.load %arg5[%c0_5, %c0_6] : memref<8x16xbf16, #tpu.memory_space<vmem>>, vector<8x16xbf16>
    %cst_7 = arith.constant dense<0.000000e+00> : vector<16x16xf32>
    %5 = tpu.matmul %3, %4, %cst_7 {dimension_numbers = #tpu.dot_dimension_numbers<[1], [0], [0], [1], [0, 0, 1, 1], [], []>} : vector<16x8xbf16>, vector<8x16xbf16>, vector<16x16xf32> -> vector<16x16xf32>
    %6 = arith.addf %2, %5 : vector<16x16xf32>
    %c0_8 = arith.constant 0 : index
    %c0_9 = arith.constant 0 : index
    %7 = vector.load %arg3[%c0_8, %c0_9] : memref<16x8xbf16, #tpu.memory_space<vmem>>, vector<16x8xbf16>
    %c0_10 = arith.constant 0 : index
    %c0_11 = arith.constant 0 : index
    %8 = vector.load %arg6[%c0_10, %c0_11] : memref<8x16xbf16, #tpu.memory_space<vmem>>, vector<8x16xbf16>
    %cst_12 = arith.constant dense<0.000000e+00> : vector<16x16xf32>
    %9 = tpu.matmul %7, %8, %cst_12 {dimension_numbers = #tpu.dot_dimension_numbers<[1], [0], [0], [1], [0, 0, 1, 1], [], []>} : vector<16x8xbf16>, vector<8x16xbf16>, vector<16x16xf32> -> vector<16x16xf32>
    %10 = arith.addf %6, %9 : vector<16x16xf32>
    %c0_13 = arith.constant 0 : index
    %c0_14 = arith.constant 0 : index
    %11 = vector.load %arg7[%c0_13, %c0_14] : memref<1x16xf32, #tpu.memory_space<vmem>>, vector<1x16xf32>
    %12 = vector.broadcast %11 : vector<1x16xf32> to vector<16x16xf32>
    %13 = arith.addf %10, %12 : vector<16x16xf32>
    %cst_15 = arith.constant 0.000000e+00 : f32
    %14 = vector.broadcast %cst_15 : f32 to vector<16x16xf32>
    %15 = arith.cmpf ogt, %13, %14 : vector<16x16xf32>
    %16 = math.exp %13 : vector<16x16xf32>
    %cst_16 = arith.constant 1.000000e+00 : f32
    %17 = vector.broadcast %cst_16 : f32 to vector<16x16xf32>
    %18 = arith.subf %16, %17 : vector<16x16xf32>
    %19 = arith.select %15, %13, %18 : vector<16x16xi1>, vector<16x16xf32>
    %20 = arith.truncf %19 : vector<16x16xf32> to vector<16x16xbf16>
    %c0_17 = arith.constant 0 : index
    %c0_18 = arith.constant 0 : index
    %21 = vector.load %arg8[%c0_17, %c0_18] : memref<16x16xbf16, #tpu.memory_space<vmem>>, vector<16x16xbf16>
    tpu.vector_store %arg8[%c0_17, %c0_18], %20 {strides = array<i32>} : memref<16x16xbf16, #tpu.memory_space<vmem>>, vector<16x16xbf16>,
    return
  }
  func.func @transform_0(%arg0: i32) -> (i32, i32) {
    %c0_i32 = arith.constant 0 : i32
    %c0_i32_0 = arith.constant 0 : i32
    return %arg0, %c0_i32 : i32, i32
  }
  func.func @transform_1(%arg0: i32) -> (i32, i32) {
    %c0_i32 = arith.constant 0 : i32
    %c0_i32_0 = arith.constant 0 : i32
    return %arg0, %c0_i32 : i32, i32
  }
  func.func @transform_2(%arg0: i32) -> (i32, i32) {
    %c0_i32 = arith.constant 0 : i32
    %c0_i32_0 = arith.constant 0 : i32
    return %arg0, %c0_i32 : i32, i32
  }
  func.func @transform_3(%arg0: i32) -> (i32, i32) {
    %c0_i32 = arith.constant 0 : i32
    %c0_i32_0 = arith.constant 0 : i32
    %c0_i32_1 = arith.constant 0 : i32
    return %c0_i32, %c0_i32_0 : i32, i32
  }
  func.func @transform_4(%arg0: i32) -> (i32, i32) {
    %c0_i32 = arith.constant 0 : i32
    %c0_i32_0 = arith.constant 0 : i32
    %c0_i32_1 = arith.constant 0 : i32
    return %c0_i32, %c0_i32_0 : i32, i32
  }
  func.func @transform_5(%arg0: i32) -> (i32, i32) {
    %c0_i32 = arith.constant 0 : i32
    %c0_i32_0 = arith.constant 0 : i32
    %c0_i32_1 = arith.constant 0 : i32
    return %c0_i32, %c0_i32_0 : i32, i32
  }
  func.func @transform_6(%arg0: i32) -> (i32, i32) {
    %c0_i32 = arith.constant 0 : i32
    %c0_i32_0 = arith.constant 0 : i32
    %c0_i32_1 = arith.constant 0 : i32
    return %c0_i32, %c0_i32_0 : i32, i32
  }
  func.func @transform_7(%arg0: i32) -> (i32, i32) {
    %c0_i32 = arith.constant 0 : i32
    %c0_i32_0 = arith.constant 0 : i32
    return %arg0, %c0_i32 : i32, i32
  }
}

module attributes {stable_mosaic.version = 11 : i64} {
  func.func @_linear_kernel(%arg0: i32, %arg1: memref<16x16xbf16, #tpu.memory_space<vmem>>, %arg2: memref<16x256xbf16, #tpu.memory_space<vmem>>, %arg3: memref<1x256xf32, #tpu.memory_space<vmem>>, %arg4: memref<16x256xbf16, #tpu.memory_space<vmem>>) attributes {dimension_semantics = [#tpu.dimension_semantics<parallel>], iteration_bounds = array<i64: 1>, scalar_prefetch = 0 : i64, scratch_operands = 0 : i64, tpu.core_type = #tpu.core_type<tc>, window_params = [{transform_indices = @transform_0, window_bounds = array<i64: 16, 16>}, {pipeline_mode = #tpu.pipeline_mode<synchronous>, transform_indices = @transform_1, window_bounds = array<i64: 16, 256>}, {pipeline_mode = #tpu.pipeline_mode<synchronous>, transform_indices = @transform_2, window_bounds = array<i64: 1, 256>}, {transform_indices = @transform_3, window_bounds = array<i64: 16, 256>}]} {
    %c0 = arith.constant 0 : index
    %c0_0 = arith.constant 0 : index
    %0 = vector.load %arg1[%c0, %c0_0] : memref<16x16xbf16, #tpu.memory_space<vmem>>, vector<16x16xbf16>
    %c0_1 = arith.constant 0 : index
    %c0_2 = arith.constant 0 : index
    %1 = vector.load %arg2[%c0_1, %c0_2] : memref<16x256xbf16, #tpu.memory_space<vmem>>, vector<16x256xbf16>
    %cst = arith.constant dense<0.000000e+00> : vector<16x256xf32>
    %2 = tpu.matmul %0, %1, %cst {dimension_numbers = #tpu.dot_dimension_numbers<[1], [0], [0], [1], [0, 0, 1, 1], [], []>} : vector<16x16xbf16>, vector<16x256xbf16>, vector<16x256xf32> -> vector<16x256xf32>
    %c0_3 = arith.constant 0 : index
    %c0_4 = arith.constant 0 : index
    %3 = vector.load %arg3[%c0_3, %c0_4] : memref<1x256xf32, #tpu.memory_space<vmem>>, vector<1x256xf32>
    %4 = vector.broadcast %3 : vector<1x256xf32> to vector<16x256xf32>
    %5 = arith.addf %2, %4 : vector<16x256xf32>
    %6 = arith.truncf %5 : vector<16x256xf32> to vector<16x256xbf16>
    %c0_5 = arith.constant 0 : index
    %c0_6 = arith.constant 0 : index
    %7 = vector.load %arg4[%c0_5, %c0_6] : memref<16x256xbf16, #tpu.memory_space<vmem>>, vector<16x256xbf16>
    tpu.vector_store %arg4[%c0_5, %c0_6], %6 {strides = array<i32>} : memref<16x256xbf16, #tpu.memory_space<vmem>>, vector<16x256xbf16>,
    return
  }
  func.func @transform_0(%arg0: i32) -> (i32, i32) {
    %c0_i32 = arith.constant 0 : i32
    %c0_i32_0 = arith.constant 0 : i32
    return %arg0, %c0_i32 : i32, i32
  }
  func.func @transform_1(%arg0: i32) -> (i32, i32) {
    %c0_i32 = arith.constant 0 : i32
    %c0_i32_0 = arith.constant 0 : i32
    %c0_i32_1 = arith.constant 0 : i32
    return %c0_i32, %c0_i32_0 : i32, i32
  }
  func.func @transform_2(%arg0: i32) -> (i32, i32) {
    %c0_i32 = arith.constant 0 : i32
    %c0_i32_0 = arith.constant 0 : i32
    %c0_i32_1 = arith.constant 0 : i32
    return %c0_i32, %c0_i32_0 : i32, i32
  }
  func.func @transform_3(%arg0: i32) -> (i32, i32) {
    %c0_i32 = arith.constant 0 : i32
    %c0_i32_0 = arith.constant 0 : i32
    return %arg0, %c0_i32 : i32, i32
  }
}

module attributes {stable_mosaic.version = 11 : i64} {
  func.func @_conv3_kernel(%arg0: i32, %arg1: memref<16x40xbf16, #tpu.memory_space<vmem>>, %arg2: memref<16x40xbf16, #tpu.memory_space<vmem>>, %arg3: memref<16x40xbf16, #tpu.memory_space<vmem>>, %arg4: memref<40x8xbf16, #tpu.memory_space<vmem>>, %arg5: memref<40x8xbf16, #tpu.memory_space<vmem>>, %arg6: memref<40x8xbf16, #tpu.memory_space<vmem>>, %arg7: memref<1x8xf32, #tpu.memory_space<vmem>>, %arg8: memref<16x8xbf16, #tpu.memory_space<vmem>>) attributes {dimension_semantics = [#tpu.dimension_semantics<parallel>], iteration_bounds = array<i64: 1>, scalar_prefetch = 0 : i64, scratch_operands = 0 : i64, tpu.core_type = #tpu.core_type<tc>, window_params = [{transform_indices = @transform_0, window_bounds = array<i64: 16, 40>}, {transform_indices = @transform_1, window_bounds = array<i64: 16, 40>}, {transform_indices = @transform_2, window_bounds = array<i64: 16, 40>}, {pipeline_mode = #tpu.pipeline_mode<synchronous>, transform_indices = @transform_3, window_bounds = array<i64: 40, 8>}, {pipeline_mode = #tpu.pipeline_mode<synchronous>, transform_indices = @transform_4, window_bounds = array<i64: 40, 8>}, {pipeline_mode = #tpu.pipeline_mode<synchronous>, transform_indices = @transform_5, window_bounds = array<i64: 40, 8>}, {pipeline_mode = #tpu.pipeline_mode<synchronous>, transform_indices = @transform_6, window_bounds = array<i64: 1, 8>}, {transform_indices = @transform_7, window_bounds = array<i64: 16, 8>}]} {
    %c0 = arith.constant 0 : index
    %c0_0 = arith.constant 0 : index
    %0 = vector.load %arg1[%c0, %c0_0] : memref<16x40xbf16, #tpu.memory_space<vmem>>, vector<16x40xbf16>
    %c0_1 = arith.constant 0 : index
    %c0_2 = arith.constant 0 : index
    %1 = vector.load %arg4[%c0_1, %c0_2] : memref<40x8xbf16, #tpu.memory_space<vmem>>, vector<40x8xbf16>
    %cst = arith.constant dense<0.000000e+00> : vector<16x8xf32>
    %2 = tpu.matmul %0, %1, %cst {dimension_numbers = #tpu.dot_dimension_numbers<[1], [0], [0], [1], [0, 0, 1, 1], [], []>} : vector<16x40xbf16>, vector<40x8xbf16>, vector<16x8xf32> -> vector<16x8xf32>
    %c0_3 = arith.constant 0 : index
    %c0_4 = arith.constant 0 : index
    %3 = vector.load %arg2[%c0_3, %c0_4] : memref<16x40xbf16, #tpu.memory_space<vmem>>, vector<16x40xbf16>
    %c0_5 = arith.constant 0 : index
    %c0_6 = arith.constant 0 : index
    %4 = vector.load %arg5[%c0_5, %c0_6] : memref<40x8xbf16, #tpu.memory_space<vmem>>, vector<40x8xbf16>
    %cst_7 = arith.constant dense<0.000000e+00> : vector<16x8xf32>
    %5 = tpu.matmul %3, %4, %cst_7 {dimension_numbers = #tpu.dot_dimension_numbers<[1], [0], [0], [1], [0, 0, 1, 1], [], []>} : vector<16x40xbf16>, vector<40x8xbf16>, vector<16x8xf32> -> vector<16x8xf32>
    %6 = arith.addf %2, %5 : vector<16x8xf32>
    %c0_8 = arith.constant 0 : index
    %c0_9 = arith.constant 0 : index
    %7 = vector.load %arg3[%c0_8, %c0_9] : memref<16x40xbf16, #tpu.memory_space<vmem>>, vector<16x40xbf16>
    %c0_10 = arith.constant 0 : index
    %c0_11 = arith.constant 0 : index
    %8 = vector.load %arg6[%c0_10, %c0_11] : memref<40x8xbf16, #tpu.memory_space<vmem>>, vector<40x8xbf16>
    %cst_12 = arith.constant dense<0.000000e+00> : vector<16x8xf32>
    %9 = tpu.matmul %7, %8, %cst_12 {dimension_numbers = #tpu.dot_dimension_numbers<[1], [0], [0], [1], [0, 0, 1, 1], [], []>} : vector<16x40xbf16>, vector<40x8xbf16>, vector<16x8xf32> -> vector<16x8xf32>
    %10 = arith.addf %6, %9 : vector<16x8xf32>
    %c0_13 = arith.constant 0 : index
    %c0_14 = arith.constant 0 : index
    %11 = vector.load %arg7[%c0_13, %c0_14] : memref<1x8xf32, #tpu.memory_space<vmem>>, vector<1x8xf32>
    %12 = vector.broadcast %11 : vector<1x8xf32> to vector<16x8xf32>
    %13 = arith.addf %10, %12 : vector<16x8xf32>
    %cst_15 = arith.constant 0.000000e+00 : f32
    %14 = vector.broadcast %cst_15 : f32 to vector<16x8xf32>
    %15 = arith.cmpf ogt, %13, %14 : vector<16x8xf32>
    %16 = math.exp %13 : vector<16x8xf32>
    %cst_16 = arith.constant 1.000000e+00 : f32
    %17 = vector.broadcast %cst_16 : f32 to vector<16x8xf32>
    %18 = arith.subf %16, %17 : vector<16x8xf32>
    %19 = arith.select %15, %13, %18 : vector<16x8xi1>, vector<16x8xf32>
    %20 = arith.truncf %19 : vector<16x8xf32> to vector<16x8xbf16>
    %c0_17 = arith.constant 0 : index
    %c0_18 = arith.constant 0 : index
    %21 = vector.load %arg8[%c0_17, %c0_18] : memref<16x8xbf16, #tpu.memory_space<vmem>>, vector<16x8xbf16>
    tpu.vector_store %arg8[%c0_17, %c0_18], %20 {strides = array<i32>} : memref<16x8xbf16, #tpu.memory_space<vmem>>, vector<16x8xbf16>,
    return
  }
  func.func @transform_0(%arg0: i32) -> (i32, i32) {
    %c0_i32 = arith.constant 0 : i32
    %c0_i32_0 = arith.constant 0 : i32
    return %arg0, %c0_i32 : i32, i32
  }
  func.func @transform_1(%arg0: i32) -> (i32, i32) {
    %c0_i32 = arith.constant 0 : i32
    %c0_i32_0 = arith.constant 0 : i32
    return %arg0, %c0_i32 : i32, i32
  }
  func.func @transform_2(%arg0: i32) -> (i32, i32) {
    %c0_i32 = arith.constant 0 : i32
    %c0_i32_0 = arith.constant 0 : i32
    return %arg0, %c0_i32 : i32, i32
  }
  func.func @transform_3(%arg0: i32) -> (i32, i32) {
    %c0_i32 = arith.constant 0 : i32
    %c0_i32_0 = arith.constant 0 : i32
    %c0_i32_1 = arith.constant 0 : i32
    return %c0_i32, %c0_i32_0 : i32, i32
  }
  func.func @transform_4(%arg0: i32) -> (i32, i32) {
    %c0_i32 = arith.constant 0 : i32
    %c0_i32_0 = arith.constant 0 : i32
    %c0_i32_1 = arith.constant 0 : i32
    return %c0_i32, %c0_i32_0 : i32, i32
  }
  func.func @transform_5(%arg0: i32) -> (i32, i32) {
    %c0_i32 = arith.constant 0 : i32
    %c0_i32_0 = arith.constant 0 : i32
    %c0_i32_1 = arith.constant 0 : i32
    return %c0_i32, %c0_i32_0 : i32, i32
  }
  func.func @transform_6(%arg0: i32) -> (i32, i32) {
    %c0_i32 = arith.constant 0 : i32
    %c0_i32_0 = arith.constant 0 : i32
    %c0_i32_1 = arith.constant 0 : i32
    return %c0_i32, %c0_i32_0 : i32, i32
  }
  func.func @transform_7(%arg0: i32) -> (i32, i32) {
    %c0_i32 = arith.constant 0 : i32
    %c0_i32_0 = arith.constant 0 : i32
    return %arg0, %c0_i32 : i32, i32
  }
}

module attributes {stable_mosaic.version = 11 : i64} {
  func.func @_bilstm_block_kernel(%arg0: i32, %arg1: memref<4x2xi32, #tpu.memory_space<vmem>>, %arg2: memref<7x4x128xbf16, #tpu.memory_space<vmem>>, %arg3: memref<32x256xf32, #tpu.memory_space<vmem>>, %arg4: memref<7x4x32xf32, #tpu.memory_space<vmem>>, %arg5: memref<4x32xf32, #tpu.memory_space<vmem>>, %arg6: memref<4x32xf32, #tpu.memory_space<vmem>>) attributes {dimension_semantics = [#tpu.dimension_semantics<arbitrary>], iteration_bounds = array<i64: 1>, scalar_prefetch = 0 : i64, scratch_operands = 2 : i64, tpu.core_type = #tpu.core_type<tc>, window_params = [{pipeline_mode = #tpu.pipeline_mode<synchronous>, transform_indices = @transform_0, window_bounds = array<i64: 4, 2>}, {transform_indices = @transform_1, window_bounds = array<i64: 7, 4, 128>}, {pipeline_mode = #tpu.pipeline_mode<synchronous>, transform_indices = @transform_2, window_bounds = array<i64: 32, 256>}, {transform_indices = @transform_3, window_bounds = array<i64: 7, 4, 32>}]} {
    %c0_i32 = arith.constant 0 : i32
    %0 = arith.cmpi eq, %arg0, %c0_i32 : i32
    %1 = arith.extui %0 : i1 to i32
    %c0_i32_0 = arith.constant 0 : i32
    %2 = arith.cmpi ne, %1, %c0_i32_0 : i32
    scf.if %2 {
      %cst_77 = arith.constant 0.000000e+00 : f32
      %412 = vector.broadcast %cst_77 : f32 to vector<4x32xf32>
      %c0_78 = arith.constant 0 : index
      %c0_79 = arith.constant 0 : index
      %413 = vector.load %arg5[%c0_78, %c0_79] : memref<4x32xf32, #tpu.memory_space<vmem>>, vector<4x32xf32>
      tpu.vector_store %arg5[%c0_78, %c0_79], %412 {strides = array<i32>} : memref<4x32xf32, #tpu.memory_space<vmem>>, vector<4x32xf32>,
      %cst_80 = arith.constant 0.000000e+00 : f32
      %414 = vector.broadcast %cst_80 : f32 to vector<4x32xf32>
      %c0_81 = arith.constant 0 : index
      %c0_82 = arith.constant 0 : index
      %415 = vector.load %arg6[%c0_81, %c0_82] : memref<4x32xf32, #tpu.memory_space<vmem>>, vector<4x32xf32>
      tpu.vector_store %arg6[%c0_81, %c0_82], %414 {strides = array<i32>} : memref<4x32xf32, #tpu.memory_space<vmem>>, vector<4x32xf32>,
    } else {
    }
    %c0 = arith.constant 0 : index
    %c0_1 = arith.constant 0 : index
    %3 = vector.load %arg1[%c0, %c0_1] : memref<4x2xi32, #tpu.memory_space<vmem>>, vector<4x1xi32>
    %c0_2 = arith.constant 0 : index
    %c1 = arith.constant 1 : index
    %4 = vector.load %arg1[%c0_2, %c1] : memref<4x2xi32, #tpu.memory_space<vmem>>, vector<4x1xi32>
    %c0_3 = arith.constant 0 : index
    %c0_4 = arith.constant 0 : index
    %5 = vector.load %arg3[%c0_3, %c0_4] : memref<32x256xf32, #tpu.memory_space<vmem>>, vector<32x256xf32>
    %6 = tpu.iota {dimensions = array<i32: 0>} : vector<4x1xi32>
    %c2_i32 = arith.constant 2 : i32
    %7 = vector.broadcast %c2_i32 : i32 to vector<4x1xi32>
    %8 = arith.cmpi slt, %6, %7 : vector<4x1xi32>
    %c0_5 = arith.constant 0 : index
    %c0_6 = arith.constant 0 : index
    %9 = vector.load %arg5[%c0_5, %c0_6] : memref<4x32xf32, #tpu.memory_space<vmem>>, vector<4x32xf32>
    %c0_7 = arith.constant 0 : index
    %c0_8 = arith.constant 0 : index
    %10 = vector.load %arg6[%c0_7, %c0_8] : memref<4x32xf32, #tpu.memory_space<vmem>>, vector<4x32xf32>
    %c0_i32_9 = arith.constant 0 : i32
    %c7_i32 = arith.constant 7 : i32
    %11 = arith.muli %arg0, %c7_i32 : i32
    %12 = arith.addi %11, %c0_i32_9 : i32
    %13 = arith.truncf %9 : vector<4x32xf32> to vector<4x32xbf16>
    %cst = arith.constant dense<0.000000e+00> : vector<4x256xf32>
    %14 = tpu.matmul %13, %5, %cst {dimension_numbers = #tpu.dot_dimension_numbers<[1], [0], [0], [1], [0, 0, 1, 1], [], []>} : vector<4x32xbf16>, vector<32x256xf32>, vector<4x256xf32> -> vector<4x256xf32>
    %15 = vector.extract_strided_slice %14 {offsets = [0, 0], sizes = [4, 128], strides = [1, 1]} : vector<4x256xf32> to vector<4x128xf32>
    %16 = vector.extract_strided_slice %14 {offsets = [0, 128], sizes = [4, 128], strides = [1, 1]} : vector<4x256xf32> to vector<4x128xf32>
    %17 = vector.shape_cast %8 : vector<4x1xi1> to vector<4x1xi1>
    %18 = vector.broadcast %17 : vector<4x1xi1> to vector<4x128xi1>
    %19 = arith.select %18, %15, %16 : vector<4x128xi1>, vector<4x128xf32>
    %20 = arith.index_cast %c0_i32_9 : i32 to index
    %c0_10 = arith.constant 0 : index
    %c0_11 = arith.constant 0 : index
    %21 = vector.load %arg2[%20, %c0_10, %c0_11] : memref<7x4x128xbf16, #tpu.memory_space<vmem>>, vector<1x4x128xbf16>
    %22 = vector.shape_cast %21 : vector<1x4x128xbf16> to vector<4x128xbf16>
    %23 = arith.extf %22 : vector<4x128xbf16> to vector<4x128xf32>
    %24 = arith.addf %23, %19 : vector<4x128xf32>
    %25 = vector.extract_strided_slice %24 {offsets = [0, 0], sizes = [4, 96], strides = [1, 1]} : vector<4x128xf32> to vector<4x96xf32>
    %26 = arith.negf %25 : vector<4x96xf32>
    %27 = math.exp %26 : vector<4x96xf32>
    %cst_12 = arith.constant 1.000000e+00 : f32
    %28 = vector.broadcast %cst_12 : f32 to vector<4x96xf32>
    %29 = arith.addf %28, %27 : vector<4x96xf32>
    %30 = arith.divf %28, %29 : vector<4x96xf32>
    %31 = vector.extract_strided_slice %30 {offsets = [0, 0], sizes = [4, 32], strides = [1, 1]} : vector<4x96xf32> to vector<4x32xf32>
    %32 = vector.extract_strided_slice %30 {offsets = [0, 32], sizes = [4, 32], strides = [1, 1]} : vector<4x96xf32> to vector<4x32xf32>
    %33 = vector.extract_strided_slice %30 {offsets = [0, 64], sizes = [4, 32], strides = [1, 1]} : vector<4x96xf32> to vector<4x32xf32>
    %34 = vector.extract_strided_slice %24 {offsets = [0, 96], sizes = [4, 32], strides = [1, 1]} : vector<4x128xf32> to vector<4x32xf32>
    %35 = math.tanh %34 : vector<4x32xf32>
    %36 = arith.mulf %32, %10 : vector<4x32xf32>
    %37 = arith.mulf %31, %35 : vector<4x32xf32>
    %38 = arith.addf %36, %37 : vector<4x32xf32>
    %39 = math.tanh %38 : vector<4x32xf32>
    %40 = arith.mulf %33, %39 : vector<4x32xf32>
    %41 = vector.broadcast %12 : i32 to vector<4x1xi32>
    %42 = arith.cmpi sge, %41, %3 : vector<4x1xi32>
    %43 = vector.broadcast %12 : i32 to vector<4x1xi32>
    %44 = arith.cmpi slt, %43, %4 : vector<4x1xi32>
    %45 = arith.andi %42, %44 : vector<4x1xi1>
    %46 = arith.extui %45 : vector<4x1xi1> to vector<4x1xi32>
    %47 = arith.sitofp %46 : vector<4x1xi32> to vector<4x1xf32>
    %48 = vector.broadcast %47 : vector<4x1xf32> to vector<4x32xf32>
    %49 = arith.mulf %48, %38 : vector<4x32xf32>
    %cst_13 = arith.constant 1.000000e+00 : f32
    %50 = vector.broadcast %cst_13 : f32 to vector<4x1xf32>
    %51 = arith.subf %50, %47 : vector<4x1xf32>
    %52 = vector.broadcast %51 : vector<4x1xf32> to vector<4x32xf32>
    %53 = arith.mulf %52, %10 : vector<4x32xf32>
    %54 = arith.addf %49, %53 : vector<4x32xf32>
    %55 = vector.broadcast %47 : vector<4x1xf32> to vector<4x32xf32>
    %56 = arith.mulf %55, %40 : vector<4x32xf32>
    %cst_14 = arith.constant 1.000000e+00 : f32
    %57 = vector.broadcast %cst_14 : f32 to vector<4x1xf32>
    %58 = arith.subf %57, %47 : vector<4x1xf32>
    %59 = vector.broadcast %58 : vector<4x1xf32> to vector<4x32xf32>
    %60 = arith.mulf %59, %9 : vector<4x32xf32>
    %61 = arith.addf %56, %60 : vector<4x32xf32>
    %62 = vector.broadcast %47 : vector<4x1xf32> to vector<4x32xf32>
    %63 = arith.mulf %61, %62 : vector<4x32xf32>
    %64 = arith.index_cast %c0_i32_9 : i32 to index
    %c0_15 = arith.constant 0 : index
    %c0_16 = arith.constant 0 : index
    %65 = vector.load %arg4[%64, %c0_15, %c0_16] : memref<7x4x32xf32, #tpu.memory_space<vmem>>, vector<1x4x32xf32>
    %66 = vector.shape_cast %65 : vector<1x4x32xf32> to vector<4x32xf32>
    %67 = vector.shape_cast %63 : vector<4x32xf32> to vector<1x4x32xf32>
    tpu.vector_store %arg4[%64, %c0_15, %c0_16], %67 {strides = array<i32>} : memref<7x4x32xf32, #tpu.memory_space<vmem>>, vector<1x4x32xf32>,
    %c1_i32 = arith.constant 1 : i32
    %c7_i32_17 = arith.constant 7 : i32
    %68 = arith.muli %arg0, %c7_i32_17 : i32
    %69 = arith.addi %68, %c1_i32 : i32
    %70 = arith.truncf %61 : vector<4x32xf32> to vector<4x32xbf16>
    %cst_18 = arith.constant dense<0.000000e+00> : vector<4x256xf32>
    %71 = tpu.matmul %70, %5, %cst_18 {dimension_numbers = #tpu.dot_dimension_numbers<[1], [0], [0], [1], [0, 0, 1, 1], [], []>} : vector<4x32xbf16>, vector<32x256xf32>, vector<4x256xf32> -> vector<4x256xf32>
    %72 = vector.extract_strided_slice %71 {offsets = [0, 0], sizes = [4, 128], strides = [1, 1]} : vector<4x256xf32> to vector<4x128xf32>
    %73 = vector.extract_strided_slice %71 {offsets = [0, 128], sizes = [4, 128], strides = [1, 1]} : vector<4x256xf32> to vector<4x128xf32>
    %74 = vector.shape_cast %8 : vector<4x1xi1> to vector<4x1xi1>
    %75 = vector.broadcast %74 : vector<4x1xi1> to vector<4x128xi1>
    %76 = arith.select %75, %72, %73 : vector<4x128xi1>, vector<4x128xf32>
    %77 = arith.index_cast %c1_i32 : i32 to index
    %c0_19 = arith.constant 0 : index
    %c0_20 = arith.constant 0 : index
    %78 = vector.load %arg2[%77, %c0_19, %c0_20] : memref<7x4x128xbf16, #tpu.memory_space<vmem>>, vector<1x4x128xbf16>
    %79 = vector.shape_cast %78 : vector<1x4x128xbf16> to vector<4x128xbf16>
    %80 = arith.extf %79 : vector<4x128xbf16> to vector<4x128xf32>
    %81 = arith.addf %80, %76 : vector<4x128xf32>
    %82 = vector.extract_strided_slice %81 {offsets = [0, 0], sizes = [4, 96], strides = [1, 1]} : vector<4x128xf32> to vector<4x96xf32>
    %83 = arith.negf %82 : vector<4x96xf32>
    %84 = math.exp %83 : vector<4x96xf32>
    %cst_21 = arith.constant 1.000000e+00 : f32
    %85 = vector.broadcast %cst_21 : f32 to vector<4x96xf32>
    %86 = arith.addf %85, %84 : vector<4x96xf32>
    %87 = arith.divf %85, %86 : vector<4x96xf32>
    %88 = vector.extract_strided_slice %87 {offsets = [0, 0], sizes = [4, 32], strides = [1, 1]} : vector<4x96xf32> to vector<4x32xf32>
    %89 = vector.extract_strided_slice %87 {offsets = [0, 32], sizes = [4, 32], strides = [1, 1]} : vector<4x96xf32> to vector<4x32xf32>
    %90 = vector.extract_strided_slice %87 {offsets = [0, 64], sizes = [4, 32], strides = [1, 1]} : vector<4x96xf32> to vector<4x32xf32>
    %91 = vector.extract_strided_slice %81 {offsets = [0, 96], sizes = [4, 32], strides = [1, 1]} : vector<4x128xf32> to vector<4x32xf32>
    %92 = math.tanh %91 : vector<4x32xf32>
    %93 = arith.mulf %89, %54 : vector<4x32xf32>
    %94 = arith.mulf %88, %92 : vector<4x32xf32>
    %95 = arith.addf %93, %94 : vector<4x32xf32>
    %96 = math.tanh %95 : vector<4x32xf32>
    %97 = arith.mulf %90, %96 : vector<4x32xf32>
    %98 = vector.broadcast %69 : i32 to vector<4x1xi32>
    %99 = arith.cmpi sge, %98, %3 : vector<4x1xi32>
    %100 = vector.broadcast %69 : i32 to vector<4x1xi32>
    %101 = arith.cmpi slt, %100, %4 : vector<4x1xi32>
    %102 = arith.andi %99, %101 : vector<4x1xi1>
    %103 = arith.extui %102 : vector<4x1xi1> to vector<4x1xi32>
    %104 = arith.sitofp %103 : vector<4x1xi32> to vector<4x1xf32>
    %105 = vector.broadcast %104 : vector<4x1xf32> to vector<4x32xf32>
    %106 = arith.mulf %105, %95 : vector<4x32xf32>
    %cst_22 = arith.constant 1.000000e+00 : f32
    %107 = vector.broadcast %cst_22 : f32 to vector<4x1xf32>
    %108 = arith.subf %107, %104 : vector<4x1xf32>
    %109 = vector.broadcast %108 : vector<4x1xf32> to vector<4x32xf32>
    %110 = arith.mulf %109, %54 : vector<4x32xf32>
    %111 = arith.addf %106, %110 : vector<4x32xf32>
    %112 = vector.broadcast %104 : vector<4x1xf32> to vector<4x32xf32>
    %113 = arith.mulf %112, %97 : vector<4x32xf32>
    %cst_23 = arith.constant 1.000000e+00 : f32
    %114 = vector.broadcast %cst_23 : f32 to vector<4x1xf32>
    %115 = arith.subf %114, %104 : vector<4x1xf32>
    %116 = vector.broadcast %115 : vector<4x1xf32> to vector<4x32xf32>
    %117 = arith.mulf %116, %61 : vector<4x32xf32>
    %118 = arith.addf %113, %117 : vector<4x32xf32>
    %119 = vector.broadcast %104 : vector<4x1xf32> to vector<4x32xf32>
    %120 = arith.mulf %118, %119 : vector<4x32xf32>
    %121 = arith.index_cast %c1_i32 : i32 to index
    %c0_24 = arith.constant 0 : index
    %c0_25 = arith.constant 0 : index
    %122 = vector.load %arg4[%121, %c0_24, %c0_25] : memref<7x4x32xf32, #tpu.memory_space<vmem>>, vector<1x4x32xf32>
    %123 = vector.shape_cast %122 : vector<1x4x32xf32> to vector<4x32xf32>
    %124 = vector.shape_cast %120 : vector<4x32xf32> to vector<1x4x32xf32>
    tpu.vector_store %arg4[%121, %c0_24, %c0_25], %124 {strides = array<i32>} : memref<7x4x32xf32, #tpu.memory_space<vmem>>, vector<1x4x32xf32>,
    %c2_i32_26 = arith.constant 2 : i32
    %c7_i32_27 = arith.constant 7 : i32
    %125 = arith.muli %arg0, %c7_i32_27 : i32
    %126 = arith.addi %125, %c2_i32_26 : i32
    %127 = arith.truncf %118 : vector<4x32xf32> to vector<4x32xbf16>
    %cst_28 = arith.constant dense<0.000000e+00> : vector<4x256xf32>
    %128 = tpu.matmul %127, %5, %cst_28 {dimension_numbers = #tpu.dot_dimension_numbers<[1], [0], [0], [1], [0, 0, 1, 1], [], []>} : vector<4x32xbf16>, vector<32x256xf32>, vector<4x256xf32> -> vector<4x256xf32>
    %129 = vector.extract_strided_slice %128 {offsets = [0, 0], sizes = [4, 128], strides = [1, 1]} : vector<4x256xf32> to vector<4x128xf32>
    %130 = vector.extract_strided_slice %128 {offsets = [0, 128], sizes = [4, 128], strides = [1, 1]} : vector<4x256xf32> to vector<4x128xf32>
    %131 = vector.shape_cast %8 : vector<4x1xi1> to vector<4x1xi1>
    %132 = vector.broadcast %131 : vector<4x1xi1> to vector<4x128xi1>
    %133 = arith.select %132, %129, %130 : vector<4x128xi1>, vector<4x128xf32>
    %134 = arith.index_cast %c2_i32_26 : i32 to index
    %c0_29 = arith.constant 0 : index
    %c0_30 = arith.constant 0 : index
    %135 = vector.load %arg2[%134, %c0_29, %c0_30] : memref<7x4x128xbf16, #tpu.memory_space<vmem>>, vector<1x4x128xbf16>
    %136 = vector.shape_cast %135 : vector<1x4x128xbf16> to vector<4x128xbf16>
    %137 = arith.extf %136 : vector<4x128xbf16> to vector<4x128xf32>
    %138 = arith.addf %137, %133 : vector<4x128xf32>
    %139 = vector.extract_strided_slice %138 {offsets = [0, 0], sizes = [4, 96], strides = [1, 1]} : vector<4x128xf32> to vector<4x96xf32>
    %140 = arith.negf %139 : vector<4x96xf32>
    %141 = math.exp %140 : vector<4x96xf32>
    %cst_31 = arith.constant 1.000000e+00 : f32
    %142 = vector.broadcast %cst_31 : f32 to vector<4x96xf32>
    %143 = arith.addf %142, %141 : vector<4x96xf32>
    %144 = arith.divf %142, %143 : vector<4x96xf32>
    %145 = vector.extract_strided_slice %144 {offsets = [0, 0], sizes = [4, 32], strides = [1, 1]} : vector<4x96xf32> to vector<4x32xf32>
    %146 = vector.extract_strided_slice %144 {offsets = [0, 32], sizes = [4, 32], strides = [1, 1]} : vector<4x96xf32> to vector<4x32xf32>
    %147 = vector.extract_strided_slice %144 {offsets = [0, 64], sizes = [4, 32], strides = [1, 1]} : vector<4x96xf32> to vector<4x32xf32>
    %148 = vector.extract_strided_slice %138 {offsets = [0, 96], sizes = [4, 32], strides = [1, 1]} : vector<4x128xf32> to vector<4x32xf32>
    %149 = math.tanh %148 : vector<4x32xf32>
    %150 = arith.mulf %146, %111 : vector<4x32xf32>
    %151 = arith.mulf %145, %149 : vector<4x32xf32>
    %152 = arith.addf %150, %151 : vector<4x32xf32>
    %153 = math.tanh %152 : vector<4x32xf32>
    %154 = arith.mulf %147, %153 : vector<4x32xf32>
    %155 = vector.broadcast %126 : i32 to vector<4x1xi32>
    %156 = arith.cmpi sge, %155, %3 : vector<4x1xi32>
    %157 = vector.broadcast %126 : i32 to vector<4x1xi32>
    %158 = arith.cmpi slt, %157, %4 : vector<4x1xi32>
    %159 = arith.andi %156, %158 : vector<4x1xi1>
    %160 = arith.extui %159 : vector<4x1xi1> to vector<4x1xi32>
    %161 = arith.sitofp %160 : vector<4x1xi32> to vector<4x1xf32>
    %162 = vector.broadcast %161 : vector<4x1xf32> to vector<4x32xf32>
    %163 = arith.mulf %162, %152 : vector<4x32xf32>
    %cst_32 = arith.constant 1.000000e+00 : f32
    %164 = vector.broadcast %cst_32 : f32 to vector<4x1xf32>
    %165 = arith.subf %164, %161 : vector<4x1xf32>
    %166 = vector.broadcast %165 : vector<4x1xf32> to vector<4x32xf32>
    %167 = arith.mulf %166, %111 : vector<4x32xf32>
    %168 = arith.addf %163, %167 : vector<4x32xf32>
    %169 = vector.broadcast %161 : vector<4x1xf32> to vector<4x32xf32>
    %170 = arith.mulf %169, %154 : vector<4x32xf32>
    %cst_33 = arith.constant 1.000000e+00 : f32
    %171 = vector.broadcast %cst_33 : f32 to vector<4x1xf32>
    %172 = arith.subf %171, %161 : vector<4x1xf32>
    %173 = vector.broadcast %172 : vector<4x1xf32> to vector<4x32xf32>
    %174 = arith.mulf %173, %118 : vector<4x32xf32>
    %175 = arith.addf %170, %174 : vector<4x32xf32>
    %176 = vector.broadcast %161 : vector<4x1xf32> to vector<4x32xf32>
    %177 = arith.mulf %175, %176 : vector<4x32xf32>
    %178 = arith.index_cast %c2_i32_26 : i32 to index
    %c0_34 = arith.constant 0 : index
    %c0_35 = arith.constant 0 : index
    %179 = vector.load %arg4[%178, %c0_34, %c0_35] : memref<7x4x32xf32, #tpu.memory_space<vmem>>, vector<1x4x32xf32>
    %180 = vector.shape_cast %179 : vector<1x4x32xf32> to vector<4x32xf32>
    %181 = vector.shape_cast %177 : vector<4x32xf32> to vector<1x4x32xf32>
    tpu.vector_store %arg4[%178, %c0_34, %c0_35], %181 {strides = array<i32>} : memref<7x4x32xf32, #tpu.memory_space<vmem>>, vector<1x4x32xf32>,
    %c3_i32 = arith.constant 3 : i32
    %c7_i32_36 = arith.constant 7 : i32
    %182 = arith.muli %arg0, %c7_i32_36 : i32
    %183 = arith.addi %182, %c3_i32 : i32
    %184 = arith.truncf %175 : vector<4x32xf32> to vector<4x32xbf16>
    %cst_37 = arith.constant dense<0.000000e+00> : vector<4x256xf32>
    %185 = tpu.matmul %184, %5, %cst_37 {dimension_numbers = #tpu.dot_dimension_numbers<[1], [0], [0], [1], [0, 0, 1, 1], [], []>} : vector<4x32xbf16>, vector<32x256xf32>, vector<4x256xf32> -> vector<4x256xf32>
    %186 = vector.extract_strided_slice %185 {offsets = [0, 0], sizes = [4, 128], strides = [1, 1]} : vector<4x256xf32> to vector<4x128xf32>
    %187 = vector.extract_strided_slice %185 {offsets = [0, 128], sizes = [4, 128], strides = [1, 1]} : vector<4x256xf32> to vector<4x128xf32>
    %188 = vector.shape_cast %8 : vector<4x1xi1> to vector<4x1xi1>
    %189 = vector.broadcast %188 : vector<4x1xi1> to vector<4x128xi1>
    %190 = arith.select %189, %186, %187 : vector<4x128xi1>, vector<4x128xf32>
    %191 = arith.index_cast %c3_i32 : i32 to index
    %c0_38 = arith.constant 0 : index
    %c0_39 = arith.constant 0 : index
    %192 = vector.load %arg2[%191, %c0_38, %c0_39] : memref<7x4x128xbf16, #tpu.memory_space<vmem>>, vector<1x4x128xbf16>
    %193 = vector.shape_cast %192 : vector<1x4x128xbf16> to vector<4x128xbf16>
    %194 = arith.extf %193 : vector<4x128xbf16> to vector<4x128xf32>
    %195 = arith.addf %194, %190 : vector<4x128xf32>
    %196 = vector.extract_strided_slice %195 {offsets = [0, 0], sizes = [4, 96], strides = [1, 1]} : vector<4x128xf32> to vector<4x96xf32>
    %197 = arith.negf %196 : vector<4x96xf32>
    %198 = math.exp %197 : vector<4x96xf32>
    %cst_40 = arith.constant 1.000000e+00 : f32
    %199 = vector.broadcast %cst_40 : f32 to vector<4x96xf32>
    %200 = arith.addf %199, %198 : vector<4x96xf32>
    %201 = arith.divf %199, %200 : vector<4x96xf32>
    %202 = vector.extract_strided_slice %201 {offsets = [0, 0], sizes = [4, 32], strides = [1, 1]} : vector<4x96xf32> to vector<4x32xf32>
    %203 = vector.extract_strided_slice %201 {offsets = [0, 32], sizes = [4, 32], strides = [1, 1]} : vector<4x96xf32> to vector<4x32xf32>
    %204 = vector.extract_strided_slice %201 {offsets = [0, 64], sizes = [4, 32], strides = [1, 1]} : vector<4x96xf32> to vector<4x32xf32>
    %205 = vector.extract_strided_slice %195 {offsets = [0, 96], sizes = [4, 32], strides = [1, 1]} : vector<4x128xf32> to vector<4x32xf32>
    %206 = math.tanh %205 : vector<4x32xf32>
    %207 = arith.mulf %203, %168 : vector<4x32xf32>
    %208 = arith.mulf %202, %206 : vector<4x32xf32>
    %209 = arith.addf %207, %208 : vector<4x32xf32>
    %210 = math.tanh %209 : vector<4x32xf32>
    %211 = arith.mulf %204, %210 : vector<4x32xf32>
    %212 = vector.broadcast %183 : i32 to vector<4x1xi32>
    %213 = arith.cmpi sge, %212, %3 : vector<4x1xi32>
    %214 = vector.broadcast %183 : i32 to vector<4x1xi32>
    %215 = arith.cmpi slt, %214, %4 : vector<4x1xi32>
    %216 = arith.andi %213, %215 : vector<4x1xi1>
    %217 = arith.extui %216 : vector<4x1xi1> to vector<4x1xi32>
    %218 = arith.sitofp %217 : vector<4x1xi32> to vector<4x1xf32>
    %219 = vector.broadcast %218 : vector<4x1xf32> to vector<4x32xf32>
    %220 = arith.mulf %219, %209 : vector<4x32xf32>
    %cst_41 = arith.constant 1.000000e+00 : f32
    %221 = vector.broadcast %cst_41 : f32 to vector<4x1xf32>
    %222 = arith.subf %221, %218 : vector<4x1xf32>
    %223 = vector.broadcast %222 : vector<4x1xf32> to vector<4x32xf32>
    %224 = arith.mulf %223, %168 : vector<4x32xf32>
    %225 = arith.addf %220, %224 : vector<4x32xf32>
    %226 = vector.broadcast %218 : vector<4x1xf32> to vector<4x32xf32>
    %227 = arith.mulf %226, %211 : vector<4x32xf32>
    %cst_42 = arith.constant 1.000000e+00 : f32
    %228 = vector.broadcast %cst_42 : f32 to vector<4x1xf32>
    %229 = arith.subf %228, %218 : vector<4x1xf32>
    %230 = vector.broadcast %229 : vector<4x1xf32> to vector<4x32xf32>
    %231 = arith.mulf %230, %175 : vector<4x32xf32>
    %232 = arith.addf %227, %231 : vector<4x32xf32>
    %233 = vector.broadcast %218 : vector<4x1xf32> to vector<4x32xf32>
    %234 = arith.mulf %232, %233 : vector<4x32xf32>
    %235 = arith.index_cast %c3_i32 : i32 to index
    %c0_43 = arith.constant 0 : index
    %c0_44 = arith.constant 0 : index
    %236 = vector.load %arg4[%235, %c0_43, %c0_44] : memref<7x4x32xf32, #tpu.memory_space<vmem>>, vector<1x4x32xf32>
    %237 = vector.shape_cast %236 : vector<1x4x32xf32> to vector<4x32xf32>
    %238 = vector.shape_cast %234 : vector<4x32xf32> to vector<1x4x32xf32>
    tpu.vector_store %arg4[%235, %c0_43, %c0_44], %238 {strides = array<i32>} : memref<7x4x32xf32, #tpu.memory_space<vmem>>, vector<1x4x32xf32>,
    %c4_i32 = arith.constant 4 : i32
    %c7_i32_45 = arith.constant 7 : i32
    %239 = arith.muli %arg0, %c7_i32_45 : i32
    %240 = arith.addi %239, %c4_i32 : i32
    %241 = arith.truncf %232 : vector<4x32xf32> to vector<4x32xbf16>
    %cst_46 = arith.constant dense<0.000000e+00> : vector<4x256xf32>
    %242 = tpu.matmul %241, %5, %cst_46 {dimension_numbers = #tpu.dot_dimension_numbers<[1], [0], [0], [1], [0, 0, 1, 1], [], []>} : vector<4x32xbf16>, vector<32x256xf32>, vector<4x256xf32> -> vector<4x256xf32>
    %243 = vector.extract_strided_slice %242 {offsets = [0, 0], sizes = [4, 128], strides = [1, 1]} : vector<4x256xf32> to vector<4x128xf32>
    %244 = vector.extract_strided_slice %242 {offsets = [0, 128], sizes = [4, 128], strides = [1, 1]} : vector<4x256xf32> to vector<4x128xf32>
    %245 = vector.shape_cast %8 : vector<4x1xi1> to vector<4x1xi1>
    %246 = vector.broadcast %245 : vector<4x1xi1> to vector<4x128xi1>
    %247 = arith.select %246, %243, %244 : vector<4x128xi1>, vector<4x128xf32>
    %248 = arith.index_cast %c4_i32 : i32 to index
    %c0_47 = arith.constant 0 : index
    %c0_48 = arith.constant 0 : index
    %249 = vector.load %arg2[%248, %c0_47, %c0_48] : memref<7x4x128xbf16, #tpu.memory_space<vmem>>, vector<1x4x128xbf16>
    %250 = vector.shape_cast %249 : vector<1x4x128xbf16> to vector<4x128xbf16>
    %251 = arith.extf %250 : vector<4x128xbf16> to vector<4x128xf32>
    %252 = arith.addf %251, %247 : vector<4x128xf32>
    %253 = vector.extract_strided_slice %252 {offsets = [0, 0], sizes = [4, 96], strides = [1, 1]} : vector<4x128xf32> to vector<4x96xf32>
    %254 = arith.negf %253 : vector<4x96xf32>
    %255 = math.exp %254 : vector<4x96xf32>
    %cst_49 = arith.constant 1.000000e+00 : f32
    %256 = vector.broadcast %cst_49 : f32 to vector<4x96xf32>
    %257 = arith.addf %256, %255 : vector<4x96xf32>
    %258 = arith.divf %256, %257 : vector<4x96xf32>
    %259 = vector.extract_strided_slice %258 {offsets = [0, 0], sizes = [4, 32], strides = [1, 1]} : vector<4x96xf32> to vector<4x32xf32>
    %260 = vector.extract_strided_slice %258 {offsets = [0, 32], sizes = [4, 32], strides = [1, 1]} : vector<4x96xf32> to vector<4x32xf32>
    %261 = vector.extract_strided_slice %258 {offsets = [0, 64], sizes = [4, 32], strides = [1, 1]} : vector<4x96xf32> to vector<4x32xf32>
    %262 = vector.extract_strided_slice %252 {offsets = [0, 96], sizes = [4, 32], strides = [1, 1]} : vector<4x128xf32> to vector<4x32xf32>
    %263 = math.tanh %262 : vector<4x32xf32>
    %264 = arith.mulf %260, %225 : vector<4x32xf32>
    %265 = arith.mulf %259, %263 : vector<4x32xf32>
    %266 = arith.addf %264, %265 : vector<4x32xf32>
    %267 = math.tanh %266 : vector<4x32xf32>
    %268 = arith.mulf %261, %267 : vector<4x32xf32>
    %269 = vector.broadcast %240 : i32 to vector<4x1xi32>
    %270 = arith.cmpi sge, %269, %3 : vector<4x1xi32>
    %271 = vector.broadcast %240 : i32 to vector<4x1xi32>
    %272 = arith.cmpi slt, %271, %4 : vector<4x1xi32>
    %273 = arith.andi %270, %272 : vector<4x1xi1>
    %274 = arith.extui %273 : vector<4x1xi1> to vector<4x1xi32>
    %275 = arith.sitofp %274 : vector<4x1xi32> to vector<4x1xf32>
    %276 = vector.broadcast %275 : vector<4x1xf32> to vector<4x32xf32>
    %277 = arith.mulf %276, %266 : vector<4x32xf32>
    %cst_50 = arith.constant 1.000000e+00 : f32
    %278 = vector.broadcast %cst_50 : f32 to vector<4x1xf32>
    %279 = arith.subf %278, %275 : vector<4x1xf32>
    %280 = vector.broadcast %279 : vector<4x1xf32> to vector<4x32xf32>
    %281 = arith.mulf %280, %225 : vector<4x32xf32>
    %282 = arith.addf %277, %281 : vector<4x32xf32>
    %283 = vector.broadcast %275 : vector<4x1xf32> to vector<4x32xf32>
    %284 = arith.mulf %283, %268 : vector<4x32xf32>
    %cst_51 = arith.constant 1.000000e+00 : f32
    %285 = vector.broadcast %cst_51 : f32 to vector<4x1xf32>
    %286 = arith.subf %285, %275 : vector<4x1xf32>
    %287 = vector.broadcast %286 : vector<4x1xf32> to vector<4x32xf32>
    %288 = arith.mulf %287, %232 : vector<4x32xf32>
    %289 = arith.addf %284, %288 : vector<4x32xf32>
    %290 = vector.broadcast %275 : vector<4x1xf32> to vector<4x32xf32>
    %291 = arith.mulf %289, %290 : vector<4x32xf32>
    %292 = arith.index_cast %c4_i32 : i32 to index
    %c0_52 = arith.constant 0 : index
    %c0_53 = arith.constant 0 : index
    %293 = vector.load %arg4[%292, %c0_52, %c0_53] : memref<7x4x32xf32, #tpu.memory_space<vmem>>, vector<1x4x32xf32>
    %294 = vector.shape_cast %293 : vector<1x4x32xf32> to vector<4x32xf32>
    %295 = vector.shape_cast %291 : vector<4x32xf32> to vector<1x4x32xf32>
    tpu.vector_store %arg4[%292, %c0_52, %c0_53], %295 {strides = array<i32>} : memref<7x4x32xf32, #tpu.memory_space<vmem>>, vector<1x4x32xf32>,
    %c5_i32 = arith.constant 5 : i32
    %c7_i32_54 = arith.constant 7 : i32
    %296 = arith.muli %arg0, %c7_i32_54 : i32
    %297 = arith.addi %296, %c5_i32 : i32
    %298 = arith.truncf %289 : vector<4x32xf32> to vector<4x32xbf16>
    %cst_55 = arith.constant dense<0.000000e+00> : vector<4x256xf32>
    %299 = tpu.matmul %298, %5, %cst_55 {dimension_numbers = #tpu.dot_dimension_numbers<[1], [0], [0], [1], [0, 0, 1, 1], [], []>} : vector<4x32xbf16>, vector<32x256xf32>, vector<4x256xf32> -> vector<4x256xf32>
    %300 = vector.extract_strided_slice %299 {offsets = [0, 0], sizes = [4, 128], strides = [1, 1]} : vector<4x256xf32> to vector<4x128xf32>
    %301 = vector.extract_strided_slice %299 {offsets = [0, 128], sizes = [4, 128], strides = [1, 1]} : vector<4x256xf32> to vector<4x128xf32>
    %302 = vector.shape_cast %8 : vector<4x1xi1> to vector<4x1xi1>
    %303 = vector.broadcast %302 : vector<4x1xi1> to vector<4x128xi1>
    %304 = arith.select %303, %300, %301 : vector<4x128xi1>, vector<4x128xf32>
    %305 = arith.index_cast %c5_i32 : i32 to index
    %c0_56 = arith.constant 0 : index
    %c0_57 = arith.constant 0 : index
    %306 = vector.load %arg2[%305, %c0_56, %c0_57] : memref<7x4x128xbf16, #tpu.memory_space<vmem>>, vector<1x4x128xbf16>
    %307 = vector.shape_cast %306 : vector<1x4x128xbf16> to vector<4x128xbf16>
    %308 = arith.extf %307 : vector<4x128xbf16> to vector<4x128xf32>
    %309 = arith.addf %308, %304 : vector<4x128xf32>
    %310 = vector.extract_strided_slice %309 {offsets = [0, 0], sizes = [4, 96], strides = [1, 1]} : vector<4x128xf32> to vector<4x96xf32>
    %311 = arith.negf %310 : vector<4x96xf32>
    %312 = math.exp %311 : vector<4x96xf32>
    %cst_58 = arith.constant 1.000000e+00 : f32
    %313 = vector.broadcast %cst_58 : f32 to vector<4x96xf32>
    %314 = arith.addf %313, %312 : vector<4x96xf32>
    %315 = arith.divf %313, %314 : vector<4x96xf32>
    %316 = vector.extract_strided_slice %315 {offsets = [0, 0], sizes = [4, 32], strides = [1, 1]} : vector<4x96xf32> to vector<4x32xf32>
    %317 = vector.extract_strided_slice %315 {offsets = [0, 32], sizes = [4, 32], strides = [1, 1]} : vector<4x96xf32> to vector<4x32xf32>
    %318 = vector.extract_strided_slice %315 {offsets = [0, 64], sizes = [4, 32], strides = [1, 1]} : vector<4x96xf32> to vector<4x32xf32>
    %319 = vector.extract_strided_slice %309 {offsets = [0, 96], sizes = [4, 32], strides = [1, 1]} : vector<4x128xf32> to vector<4x32xf32>
    %320 = math.tanh %319 : vector<4x32xf32>
    %321 = arith.mulf %317, %282 : vector<4x32xf32>
    %322 = arith.mulf %316, %320 : vector<4x32xf32>
    %323 = arith.addf %321, %322 : vector<4x32xf32>
    %324 = math.tanh %323 : vector<4x32xf32>
    %325 = arith.mulf %318, %324 : vector<4x32xf32>
    %326 = vector.broadcast %297 : i32 to vector<4x1xi32>
    %327 = arith.cmpi sge, %326, %3 : vector<4x1xi32>
    %328 = vector.broadcast %297 : i32 to vector<4x1xi32>
    %329 = arith.cmpi slt, %328, %4 : vector<4x1xi32>
    %330 = arith.andi %327, %329 : vector<4x1xi1>
    %331 = arith.extui %330 : vector<4x1xi1> to vector<4x1xi32>
    %332 = arith.sitofp %331 : vector<4x1xi32> to vector<4x1xf32>
    %333 = vector.broadcast %332 : vector<4x1xf32> to vector<4x32xf32>
    %334 = arith.mulf %333, %323 : vector<4x32xf32>
    %cst_59 = arith.constant 1.000000e+00 : f32
    %335 = vector.broadcast %cst_59 : f32 to vector<4x1xf32>
    %336 = arith.subf %335, %332 : vector<4x1xf32>
    %337 = vector.broadcast %336 : vector<4x1xf32> to vector<4x32xf32>
    %338 = arith.mulf %337, %282 : vector<4x32xf32>
    %339 = arith.addf %334, %338 : vector<4x32xf32>
    %340 = vector.broadcast %332 : vector<4x1xf32> to vector<4x32xf32>
    %341 = arith.mulf %340, %325 : vector<4x32xf32>
    %cst_60 = arith.constant 1.000000e+00 : f32
    %342 = vector.broadcast %cst_60 : f32 to vector<4x1xf32>
    %343 = arith.subf %342, %332 : vector<4x1xf32>
    %344 = vector.broadcast %343 : vector<4x1xf32> to vector<4x32xf32>
    %345 = arith.mulf %344, %289 : vector<4x32xf32>
    %346 = arith.addf %341, %345 : vector<4x32xf32>
    %347 = vector.broadcast %332 : vector<4x1xf32> to vector<4x32xf32>
    %348 = arith.mulf %346, %347 : vector<4x32xf32>
    %349 = arith.index_cast %c5_i32 : i32 to index
    %c0_61 = arith.constant 0 : index
    %c0_62 = arith.constant 0 : index
    %350 = vector.load %arg4[%349, %c0_61, %c0_62] : memref<7x4x32xf32, #tpu.memory_space<vmem>>, vector<1x4x32xf32>
    %351 = vector.shape_cast %350 : vector<1x4x32xf32> to vector<4x32xf32>
    %352 = vector.shape_cast %348 : vector<4x32xf32> to vector<1x4x32xf32>
    tpu.vector_store %arg4[%349, %c0_61, %c0_62], %352 {strides = array<i32>} : memref<7x4x32xf32, #tpu.memory_space<vmem>>, vector<1x4x32xf32>,
    %c6_i32 = arith.constant 6 : i32
    %c7_i32_63 = arith.constant 7 : i32
    %353 = arith.muli %arg0, %c7_i32_63 : i32
    %354 = arith.addi %353, %c6_i32 : i32
    %355 = arith.truncf %346 : vector<4x32xf32> to vector<4x32xbf16>
    %cst_64 = arith.constant dense<0.000000e+00> : vector<4x256xf32>
    %356 = tpu.matmul %355, %5, %cst_64 {dimension_numbers = #tpu.dot_dimension_numbers<[1], [0], [0], [1], [0, 0, 1, 1], [], []>} : vector<4x32xbf16>, vector<32x256xf32>, vector<4x256xf32> -> vector<4x256xf32>
    %357 = vector.extract_strided_slice %356 {offsets = [0, 0], sizes = [4, 128], strides = [1, 1]} : vector<4x256xf32> to vector<4x128xf32>
    %358 = vector.extract_strided_slice %356 {offsets = [0, 128], sizes = [4, 128], strides = [1, 1]} : vector<4x256xf32> to vector<4x128xf32>
    %359 = vector.shape_cast %8 : vector<4x1xi1> to vector<4x1xi1>
    %360 = vector.broadcast %359 : vector<4x1xi1> to vector<4x128xi1>
    %361 = arith.select %360, %357, %358 : vector<4x128xi1>, vector<4x128xf32>
    %362 = arith.index_cast %c6_i32 : i32 to index
    %c0_65 = arith.constant 0 : index
    %c0_66 = arith.constant 0 : index
    %363 = vector.load %arg2[%362, %c0_65, %c0_66] : memref<7x4x128xbf16, #tpu.memory_space<vmem>>, vector<1x4x128xbf16>
    %364 = vector.shape_cast %363 : vector<1x4x128xbf16> to vector<4x128xbf16>
    %365 = arith.extf %364 : vector<4x128xbf16> to vector<4x128xf32>
    %366 = arith.addf %365, %361 : vector<4x128xf32>
    %367 = vector.extract_strided_slice %366 {offsets = [0, 0], sizes = [4, 96], strides = [1, 1]} : vector<4x128xf32> to vector<4x96xf32>
    %368 = arith.negf %367 : vector<4x96xf32>
    %369 = math.exp %368 : vector<4x96xf32>
    %cst_67 = arith.constant 1.000000e+00 : f32
    %370 = vector.broadcast %cst_67 : f32 to vector<4x96xf32>
    %371 = arith.addf %370, %369 : vector<4x96xf32>
    %372 = arith.divf %370, %371 : vector<4x96xf32>
    %373 = vector.extract_strided_slice %372 {offsets = [0, 0], sizes = [4, 32], strides = [1, 1]} : vector<4x96xf32> to vector<4x32xf32>
    %374 = vector.extract_strided_slice %372 {offsets = [0, 32], sizes = [4, 32], strides = [1, 1]} : vector<4x96xf32> to vector<4x32xf32>
    %375 = vector.extract_strided_slice %372 {offsets = [0, 64], sizes = [4, 32], strides = [1, 1]} : vector<4x96xf32> to vector<4x32xf32>
    %376 = vector.extract_strided_slice %366 {offsets = [0, 96], sizes = [4, 32], strides = [1, 1]} : vector<4x128xf32> to vector<4x32xf32>
    %377 = math.tanh %376 : vector<4x32xf32>
    %378 = arith.mulf %374, %339 : vector<4x32xf32>
    %379 = arith.mulf %373, %377 : vector<4x32xf32>
    %380 = arith.addf %378, %379 : vector<4x32xf32>
    %381 = math.tanh %380 : vector<4x32xf32>
    %382 = arith.mulf %375, %381 : vector<4x32xf32>
    %383 = vector.broadcast %354 : i32 to vector<4x1xi32>
    %384 = arith.cmpi sge, %383, %3 : vector<4x1xi32>
    %385 = vector.broadcast %354 : i32 to vector<4x1xi32>
    %386 = arith.cmpi slt, %385, %4 : vector<4x1xi32>
    %387 = arith.andi %384, %386 : vector<4x1xi1>
    %388 = arith.extui %387 : vector<4x1xi1> to vector<4x1xi32>
    %389 = arith.sitofp %388 : vector<4x1xi32> to vector<4x1xf32>
    %390 = vector.broadcast %389 : vector<4x1xf32> to vector<4x32xf32>
    %391 = arith.mulf %390, %380 : vector<4x32xf32>
    %cst_68 = arith.constant 1.000000e+00 : f32
    %392 = vector.broadcast %cst_68 : f32 to vector<4x1xf32>
    %393 = arith.subf %392, %389 : vector<4x1xf32>
    %394 = vector.broadcast %393 : vector<4x1xf32> to vector<4x32xf32>
    %395 = arith.mulf %394, %339 : vector<4x32xf32>
    %396 = arith.addf %391, %395 : vector<4x32xf32>
    %397 = vector.broadcast %389 : vector<4x1xf32> to vector<4x32xf32>
    %398 = arith.mulf %397, %382 : vector<4x32xf32>
    %cst_69 = arith.constant 1.000000e+00 : f32
    %399 = vector.broadcast %cst_69 : f32 to vector<4x1xf32>
    %400 = arith.subf %399, %389 : vector<4x1xf32>
    %401 = vector.broadcast %400 : vector<4x1xf32> to vector<4x32xf32>
    %402 = arith.mulf %401, %346 : vector<4x32xf32>
    %403 = arith.addf %398, %402 : vector<4x32xf32>
    %404 = vector.broadcast %389 : vector<4x1xf32> to vector<4x32xf32>
    %405 = arith.mulf %403, %404 : vector<4x32xf32>
    %406 = arith.index_cast %c6_i32 : i32 to index
    %c0_70 = arith.constant 0 : index
    %c0_71 = arith.constant 0 : index
    %407 = vector.load %arg4[%406, %c0_70, %c0_71] : memref<7x4x32xf32, #tpu.memory_space<vmem>>, vector<1x4x32xf32>
    %408 = vector.shape_cast %407 : vector<1x4x32xf32> to vector<4x32xf32>
    %409 = vector.shape_cast %405 : vector<4x32xf32> to vector<1x4x32xf32>
    tpu.vector_store %arg4[%406, %c0_70, %c0_71], %409 {strides = array<i32>} : memref<7x4x32xf32, #tpu.memory_space<vmem>>, vector<1x4x32xf32>,
    %c7_i32_72 = arith.constant 7 : i32
    %c0_73 = arith.constant 0 : index
    %c0_74 = arith.constant 0 : index
    %410 = vector.load %arg5[%c0_73, %c0_74] : memref<4x32xf32, #tpu.memory_space<vmem>>, vector<4x32xf32>
    tpu.vector_store %arg5[%c0_73, %c0_74], %403 {strides = array<i32>} : memref<4x32xf32, #tpu.memory_space<vmem>>, vector<4x32xf32>,
    %c0_75 = arith.constant 0 : index
    %c0_76 = arith.constant 0 : index
    %411 = vector.load %arg6[%c0_75, %c0_76] : memref<4x32xf32, #tpu.memory_space<vmem>>, vector<4x32xf32>
    tpu.vector_store %arg6[%c0_75, %c0_76], %396 {strides = array<i32>} : memref<4x32xf32, #tpu.memory_space<vmem>>, vector<4x32xf32>,
    return
  }
  func.func @transform_0(%arg0: i32) -> (i32, i32) {
    %c0_i32 = arith.constant 0 : i32
    %c0_i32_0 = arith.constant 0 : i32
    %c0_i32_1 = arith.constant 0 : i32
    return %c0_i32, %c0_i32_0 : i32, i32
  }
  func.func @transform_1(%arg0: i32) -> (i32, i32, i32) {
    %c0_i32 = arith.constant 0 : i32
    %c0_i32_0 = arith.constant 0 : i32
    %c0_i32_1 = arith.constant 0 : i32
    return %arg0, %c0_i32, %c0_i32_0 : i32, i32, i32
  }
  func.func @transform_2(%arg0: i32) -> (i32, i32) {
    %c0_i32 = arith.constant 0 : i32
    %c0_i32_0 = arith.constant 0 : i32
    %c0_i32_1 = arith.constant 0 : i32
    return %c0_i32, %c0_i32_0 : i32, i32
  }
  func.func @transform_3(%arg0: i32) -> (i32, i32, i32) {
    %c0_i32 = arith.constant 0 : i32
    %c0_i32_0 = arith.constant 0 : i32
    %c0_i32_1 = arith.constant 0 : i32
    return %arg0, %c0_i32, %c0_i32_0 : i32, i32, i32
  }
}

module attributes {stable_mosaic.version = 11 : i64} {
  func.func @_mlp_head_kernel(%arg0: i32, %arg1: memref<16x32xbf16, #tpu.memory_space<vmem>>, %arg2: memref<32x32xbf16, #tpu.memory_space<vmem>>, %arg3: memref<1x32xf32, #tpu.memory_space<vmem>>, %arg4: memref<32x32xbf16, #tpu.memory_space<vmem>>, %arg5: memref<1x32xf32, #tpu.memory_space<vmem>>, %arg6: memref<32x128xbf16, #tpu.memory_space<vmem>>, %arg7: memref<1x128xf32, #tpu.memory_space<vmem>>, %arg8: memref<16x128xf32, #tpu.memory_space<vmem>>) attributes {dimension_semantics = [#tpu.dimension_semantics<parallel>], iteration_bounds = array<i64: 1>, scalar_prefetch = 0 : i64, scratch_operands = 0 : i64, tpu.core_type = #tpu.core_type<tc>, window_params = [{transform_indices = @transform_0, window_bounds = array<i64: 16, 32>}, {pipeline_mode = #tpu.pipeline_mode<synchronous>, transform_indices = @transform_1, window_bounds = array<i64: 32, 32>}, {pipeline_mode = #tpu.pipeline_mode<synchronous>, transform_indices = @transform_2, window_bounds = array<i64: 1, 32>}, {pipeline_mode = #tpu.pipeline_mode<synchronous>, transform_indices = @transform_3, window_bounds = array<i64: 32, 32>}, {pipeline_mode = #tpu.pipeline_mode<synchronous>, transform_indices = @transform_4, window_bounds = array<i64: 1, 32>}, {pipeline_mode = #tpu.pipeline_mode<synchronous>, transform_indices = @transform_5, window_bounds = array<i64: 32, 128>}, {pipeline_mode = #tpu.pipeline_mode<synchronous>, transform_indices = @transform_6, window_bounds = array<i64: 1, 128>}, {transform_indices = @transform_7, window_bounds = array<i64: 16, 128>}]} {
    %c0 = arith.constant 0 : index
    %c0_0 = arith.constant 0 : index
    %0 = vector.load %arg1[%c0, %c0_0] : memref<16x32xbf16, #tpu.memory_space<vmem>>, vector<16x32xbf16>
    %c0_1 = arith.constant 0 : index
    %c0_2 = arith.constant 0 : index
    %1 = vector.load %arg2[%c0_1, %c0_2] : memref<32x32xbf16, #tpu.memory_space<vmem>>, vector<32x32xbf16>
    %cst = arith.constant dense<0.000000e+00> : vector<16x32xf32>
    %2 = tpu.matmul %0, %1, %cst {dimension_numbers = #tpu.dot_dimension_numbers<[1], [0], [0], [1], [0, 0, 1, 1], [], []>} : vector<16x32xbf16>, vector<32x32xbf16>, vector<16x32xf32> -> vector<16x32xf32>
    %c0_3 = arith.constant 0 : index
    %c0_4 = arith.constant 0 : index
    %3 = vector.load %arg3[%c0_3, %c0_4] : memref<1x32xf32, #tpu.memory_space<vmem>>, vector<1x32xf32>
    %4 = vector.broadcast %3 : vector<1x32xf32> to vector<16x32xf32>
    %5 = arith.addf %2, %4 : vector<16x32xf32>
    %cst_5 = arith.constant 0.000000e+00 : f32
    %6 = vector.broadcast %cst_5 : f32 to vector<16x32xf32>
    %7 = arith.cmpf ogt, %5, %6 : vector<16x32xf32>
    %8 = math.exp %5 : vector<16x32xf32>
    %cst_6 = arith.constant 1.000000e+00 : f32
    %9 = vector.broadcast %cst_6 : f32 to vector<16x32xf32>
    %10 = arith.subf %8, %9 : vector<16x32xf32>
    %cst_7 = arith.constant 1.67326319 : f32
    %11 = vector.broadcast %cst_7 : f32 to vector<16x32xf32>
    %12 = arith.mulf %11, %10 : vector<16x32xf32>
    %13 = arith.select %7, %5, %12 : vector<16x32xi1>, vector<16x32xf32>
    %cst_8 = arith.constant 1.05070102 : f32
    %14 = vector.broadcast %cst_8 : f32 to vector<16x32xf32>
    %15 = arith.mulf %14, %13 : vector<16x32xf32>
    %16 = arith.truncf %15 : vector<16x32xf32> to vector<16x32xbf16>
    %c0_9 = arith.constant 0 : index
    %c0_10 = arith.constant 0 : index
    %17 = vector.load %arg4[%c0_9, %c0_10] : memref<32x32xbf16, #tpu.memory_space<vmem>>, vector<32x32xbf16>
    %cst_11 = arith.constant dense<0.000000e+00> : vector<16x32xf32>
    %18 = tpu.matmul %16, %17, %cst_11 {dimension_numbers = #tpu.dot_dimension_numbers<[1], [0], [0], [1], [0, 0, 1, 1], [], []>} : vector<16x32xbf16>, vector<32x32xbf16>, vector<16x32xf32> -> vector<16x32xf32>
    %c0_12 = arith.constant 0 : index
    %c0_13 = arith.constant 0 : index
    %19 = vector.load %arg5[%c0_12, %c0_13] : memref<1x32xf32, #tpu.memory_space<vmem>>, vector<1x32xf32>
    %20 = vector.broadcast %19 : vector<1x32xf32> to vector<16x32xf32>
    %21 = arith.addf %18, %20 : vector<16x32xf32>
    %cst_14 = arith.constant 0.000000e+00 : f32
    %22 = vector.broadcast %cst_14 : f32 to vector<16x32xf32>
    %23 = arith.cmpf ogt, %21, %22 : vector<16x32xf32>
    %24 = math.exp %21 : vector<16x32xf32>
    %cst_15 = arith.constant 1.000000e+00 : f32
    %25 = vector.broadcast %cst_15 : f32 to vector<16x32xf32>
    %26 = arith.subf %24, %25 : vector<16x32xf32>
    %cst_16 = arith.constant 1.67326319 : f32
    %27 = vector.broadcast %cst_16 : f32 to vector<16x32xf32>
    %28 = arith.mulf %27, %26 : vector<16x32xf32>
    %29 = arith.select %23, %21, %28 : vector<16x32xi1>, vector<16x32xf32>
    %cst_17 = arith.constant 1.05070102 : f32
    %30 = vector.broadcast %cst_17 : f32 to vector<16x32xf32>
    %31 = arith.mulf %30, %29 : vector<16x32xf32>
    %32 = arith.truncf %31 : vector<16x32xf32> to vector<16x32xbf16>
    %c0_18 = arith.constant 0 : index
    %c0_19 = arith.constant 0 : index
    %33 = vector.load %arg6[%c0_18, %c0_19] : memref<32x128xbf16, #tpu.memory_space<vmem>>, vector<32x128xbf16>
    %cst_20 = arith.constant dense<0.000000e+00> : vector<16x128xf32>
    %34 = tpu.matmul %32, %33, %cst_20 {dimension_numbers = #tpu.dot_dimension_numbers<[1], [0], [0], [1], [0, 0, 1, 1], [], []>} : vector<16x32xbf16>, vector<32x128xbf16>, vector<16x128xf32> -> vector<16x128xf32>
    %c0_21 = arith.constant 0 : index
    %c0_22 = arith.constant 0 : index
    %35 = vector.load %arg7[%c0_21, %c0_22] : memref<1x128xf32, #tpu.memory_space<vmem>>, vector<1x128xf32>
    %36 = vector.broadcast %35 : vector<1x128xf32> to vector<16x128xf32>
    %37 = arith.addf %34, %36 : vector<16x128xf32>
    %c0_23 = arith.constant 0 : index
    %c0_24 = arith.constant 0 : index
    %38 = vector.load %arg8[%c0_23, %c0_24] : memref<16x128xf32, #tpu.memory_space<vmem>>, vector<16x128xf32>
    tpu.vector_store %arg8[%c0_23, %c0_24], %37 {strides = array<i32>} : memref<16x128xf32, #tpu.memory_space<vmem>>, vector<16x128xf32>,
    return
  }
  func.func @transform_0(%arg0: i32) -> (i32, i32) {
    %c0_i32 = arith.constant 0 : i32
    %c0_i32_0 = arith.constant 0 : i32
    return %arg0, %c0_i32 : i32, i32
  }
  func.func @transform_1(%arg0: i32) -> (i32, i32) {
    %c0_i32 = arith.constant 0 : i32
    %c0_i32_0 = arith.constant 0 : i32
    %c0_i32_1 = arith.constant 0 : i32
    return %c0_i32, %c0_i32_0 : i32, i32
  }
  func.func @transform_2(%arg0: i32) -> (i32, i32) {
    %c0_i32 = arith.constant 0 : i32
    %c0_i32_0 = arith.constant 0 : i32
    %c0_i32_1 = arith.constant 0 : i32
    return %c0_i32, %c0_i32_0 : i32, i32
  }
  func.func @transform_3(%arg0: i32) -> (i32, i32) {
    %c0_i32 = arith.constant 0 : i32
    %c0_i32_0 = arith.constant 0 : i32
    %c0_i32_1 = arith.constant 0 : i32
    return %c0_i32, %c0_i32_0 : i32, i32
  }
  func.func @transform_4(%arg0: i32) -> (i32, i32) {
    %c0_i32 = arith.constant 0 : i32
    %c0_i32_0 = arith.constant 0 : i32
    %c0_i32_1 = arith.constant 0 : i32
    return %c0_i32, %c0_i32_0 : i32, i32
  }
  func.func @transform_5(%arg0: i32) -> (i32, i32) {
    %c0_i32 = arith.constant 0 : i32
    %c0_i32_0 = arith.constant 0 : i32
    %c0_i32_1 = arith.constant 0 : i32
    return %c0_i32, %c0_i32_0 : i32, i32
  }
  func.func @transform_6(%arg0: i32) -> (i32, i32) {
    %c0_i32 = arith.constant 0 : i32
    %c0_i32_0 = arith.constant 0 : i32
    %c0_i32_1 = arith.constant 0 : i32
    return %c0_i32, %c0_i32_0 : i32, i32
  }
  func.func @transform_7(%arg0: i32) -> (i32, i32) {
    %c0_i32 = arith.constant 0 : i32
    %c0_i32_0 = arith.constant 0 : i32
    return %arg0, %c0_i32 : i32, i32
  }
}

module attributes {stable_mosaic.version = 11 : i64} {
  func.func @_linear_kernel(%arg0: i32, %arg1: memref<16x64xbf16, #tpu.memory_space<vmem>>, %arg2: memref<64x256xbf16, #tpu.memory_space<vmem>>, %arg3: memref<1x256xf32, #tpu.memory_space<vmem>>, %arg4: memref<16x256xbf16, #tpu.memory_space<vmem>>) attributes {dimension_semantics = [#tpu.dimension_semantics<parallel>], iteration_bounds = array<i64: 1>, scalar_prefetch = 0 : i64, scratch_operands = 0 : i64, tpu.core_type = #tpu.core_type<tc>, window_params = [{transform_indices = @transform_0, window_bounds = array<i64: 16, 64>}, {pipeline_mode = #tpu.pipeline_mode<synchronous>, transform_indices = @transform_1, window_bounds = array<i64: 64, 256>}, {pipeline_mode = #tpu.pipeline_mode<synchronous>, transform_indices = @transform_2, window_bounds = array<i64: 1, 256>}, {transform_indices = @transform_3, window_bounds = array<i64: 16, 256>}]} {
    %c0 = arith.constant 0 : index
    %c0_0 = arith.constant 0 : index
    %0 = vector.load %arg1[%c0, %c0_0] : memref<16x64xbf16, #tpu.memory_space<vmem>>, vector<16x64xbf16>
    %c0_1 = arith.constant 0 : index
    %c0_2 = arith.constant 0 : index
    %1 = vector.load %arg2[%c0_1, %c0_2] : memref<64x256xbf16, #tpu.memory_space<vmem>>, vector<64x256xbf16>
    %cst = arith.constant dense<0.000000e+00> : vector<16x256xf32>
    %2 = tpu.matmul %0, %1, %cst {dimension_numbers = #tpu.dot_dimension_numbers<[1], [0], [0], [1], [0, 0, 1, 1], [], []>} : vector<16x64xbf16>, vector<64x256xbf16>, vector<16x256xf32> -> vector<16x256xf32>
    %c0_3 = arith.constant 0 : index
    %c0_4 = arith.constant 0 : index
    %3 = vector.load %arg3[%c0_3, %c0_4] : memref<1x256xf32, #tpu.memory_space<vmem>>, vector<1x256xf32>
    %4 = vector.broadcast %3 : vector<1x256xf32> to vector<16x256xf32>
    %5 = arith.addf %2, %4 : vector<16x256xf32>
    %6 = arith.truncf %5 : vector<16x256xf32> to vector<16x256xbf16>
    %c0_5 = arith.constant 0 : index
    %c0_6 = arith.constant 0 : index
    %7 = vector.load %arg4[%c0_5, %c0_6] : memref<16x256xbf16, #tpu.memory_space<vmem>>, vector<16x256xbf16>
    tpu.vector_store %arg4[%c0_5, %c0_6], %6 {strides = array<i32>} : memref<16x256xbf16, #tpu.memory_space<vmem>>, vector<16x256xbf16>,
    return
  }
  func.func @transform_0(%arg0: i32) -> (i32, i32) {
    %c0_i32 = arith.constant 0 : i32
    %c0_i32_0 = arith.constant 0 : i32
    return %arg0, %c0_i32 : i32, i32
  }
  func.func @transform_1(%arg0: i32) -> (i32, i32) {
    %c0_i32 = arith.constant 0 : i32
    %c0_i32_0 = arith.constant 0 : i32
    %c0_i32_1 = arith.constant 0 : i32
    return %c0_i32, %c0_i32_0 : i32, i32
  }
  func.func @transform_2(%arg0: i32) -> (i32, i32) {
    %c0_i32 = arith.constant 0 : i32
    %c0_i32_0 = arith.constant 0 : i32
    %c0_i32_1 = arith.constant 0 : i32
    return %c0_i32, %c0_i32_0 : i32, i32
  }
  func.func @transform_3(%arg0: i32) -> (i32, i32) {
    %c0_i32 = arith.constant 0 : i32
    %c0_i32_0 = arith.constant 0 : i32
    return %arg0, %c0_i32 : i32, i32
  }
}

</mosaic_0001>

<llo_original>
// kernel: a_base_forward.10
$region0: #{a_base_forward.10}
  #allocation0 [shape = 'u32[]', space=smem, size = 0x4, offset = 0x4, fixed_abs, tag = 'smem constant byte address 0x4 - core index']
  #allocation1 [shape = 'u32[144,128]{1,0:T(1,128)}', space=vmem, size = 0x12000, scoped, tag = 'internal scratch']
  %s0 = inlined_call_operand.vmem [shape: bf16[16,8], index: 0, kind: input, shape index: {}]
  %s1 = inlined_call_operand.vmem [shape: bf16[16,8], index: 1, kind: input, shape index: {}]
  %s2 = inlined_call_operand.vmem [shape: bf16[16,8], index: 2, kind: input, shape index: {}]
  %s3 = inlined_call_operand.vmem [shape: bf16[8,16], index: 3, kind: input, shape index: {}]
  %s4 = inlined_call_operand.vmem [shape: bf16[8,16], index: 4, kind: input, shape index: {}]
  %s5 = inlined_call_operand.vmem [shape: bf16[8,16], index: 5, kind: input, shape index: {}]
  %s6 = inlined_call_operand.vmem [shape: f32[1,16], index: 6, kind: input, shape index: {}]
  %s7 = inlined_call_operand.vmem [shape: bf16[16,16], index: 7, kind: output, shape index: {}]
  %s8 = sld [smem:[#allocation0]]
  $region38: #{a_base_forward.10} parent=0
    _
  %s10 = ssub.s32 1, %s8
  %s11 = scalar_select 0, %s10, %s8
  // Predicated region
  $region2: #{a_base_forward.10} parent=0 // pred_check
    _
  $region3: #{a_base_forward.10} parent=0 // pred_check_branch
    %13 = sbr.rel (0) target = $region5
  $region4: #{a_base_forward.10} parent=0 // pred_region
    _
  $region5: #{a_base_forward.10} parent=0 // pred_fallthru
    _
  // Predicated region
  $region6: #{a_base_forward.10} parent=0 // pred_check
    _
  $region7: #{a_base_forward.10} parent=0 // pred_check_branch
    %15 = sbr.rel (0) target = $region9
  $region8: #{a_base_forward.10} parent=0 // pred_region
    _
  $region9: #{a_base_forward.10} parent=0 // pred_fallthru
    _
  // Predicated region
  $region10: #{a_base_forward.10} parent=0 // pred_check
    _
  $region11: #{a_base_forward.10} parent=0 // pred_check_branch
    %17 = sbr.rel (0) target = $region13
  $region12: #{a_base_forward.10} parent=0 // pred_region
    _
  $region13: #{a_base_forward.10} parent=0 // pred_fallthru
    _
  // Predicated region
  $region14: #{a_base_forward.10} parent=0 // pred_check
    _
  $region15: #{a_base_forward.10} parent=0 // pred_check_branch
    %19 = sbr.rel (0) target = $region17
  $region16: #{a_base_forward.10} parent=0 // pred_region
    _
  $region17: #{a_base_forward.10} parent=0 // pred_fallthru
    _
  // Predicated region
  $region18: #{a_base_forward.10} parent=0 // pred_check
    _
  $region19: #{a_base_forward.10} parent=0 // pred_check_branch
    %21 = sbr.rel (0) target = $region21
  $region20: #{a_base_forward.10} parent=0 // pred_region
    _
  $region21: #{a_base_forward.10} parent=0 // pred_fallthru
    _
  // Predicated region
  $region22: #{a_base_forward.10} parent=0 // pred_check
    _
  $region23: #{a_base_forward.10} parent=0 // pred_check_branch
    %23 = sbr.rel (0) target = $region25
  $region24: #{a_base_forward.10} parent=0 // pred_region
    _
  $region25: #{a_base_forward.10} parent=0 // pred_fallthru
    _
  // Predicated region
  $region26: #{a_base_forward.10} parent=0 // pred_check
    _
  $region27: #{a_base_forward.10} parent=0 // pred_check_branch
    %25 = sbr.rel (0) target = $region29
  $region28: #{a_base_forward.10} parent=0 // pred_region
    _
  $region29: #{a_base_forward.10} parent=0 // pred_fallthru
    _
  %v27 = vld [vmem:[%s0] sm:$0xf]
  %v28 = vld [vmem:[%s0 + $0x4] sm:$0xf]
  %v29 = vld [vmem:[%s3] sm:$0xf]
  %v30 = vld [vmem:[%s1] sm:$0xf]
  %v31 = vld [vmem:[%s1 + $0x4] sm:$0xf]
  %v32 = vld [vmem:[%s4] sm:$0xf]
  %v35 = vunpack.c.l.b16 %v30
  %v36 = vunpack.c.l.b16 %v31
  %v37 = vpack.c.b16 %v36, %v35
  %vm38 = vcmask 64512
  %v40 = vsel %vm38, %v37, 0
  %vm42 = vcmask 1043456
  %v44 = vsel %vm42, %v32, 0
  %46 = vmatprep.subr.bf16.mxu0 0
  %47 = vmatpush1.bf16.msra.mxu0 0
  %48 = vmatprep.subr.bf16.mxu0 0
  %49 = vmatpush1.bf16.msra.mxu0 0
  %50 = vmatprep.subr.bf16.mxu0 0
  %51 = vmatpush1.bf16.msra.mxu0 0
  %52 = vmatprep.subr.bf16.mxu0 0
  %53 = vmatpush1.bf16.msra.mxu0 0
  %54 = vmatprep.subr.bf16.mxu0 0
  %55 = vmatpush1.bf16.msra.mxu0 0
  %56 = vmatprep.subr.bf16.mxu0 0
  %57 = vmatpush1.bf16.msra.mxu0 0
  %58 = vmatprep.subr.bf16.mxu0 0
  %59 = vmatpush1.bf16.msra.mxu0 0
  %60 = vmatprep.subr.bf16.mxu0 0
  %61 = vmatpush1.bf16.msra.mxu0 %v44
  %62 = vmatprep.subr.bf16.mxu0 0
  %63 = vmatpush2.bf16.msra.mxu0 0
  %64 = vmatprep.subr.bf16.mxu0 0
  %65 = vmatpush2.bf16.msra.mxu0 0
  %66 = vmatprep.subr.bf16.mxu0 0
  %67 = vmatpush2.bf16.msra.mxu0 0
  %68 = vmatprep.subr.bf16.mxu0 0
  %69 = vmatpush2.bf16.msra.mxu0 0
  %70 = vmatprep.subr.bf16.mxu0 0
  %71 = vmatpush2.bf16.msra.mxu0 0
  %72 = vmatprep.subr.bf16.mxu0 0
  %73 = vmatpush2.bf16.msra.mxu0 0
  %74 = vmatprep.subr.bf16.mxu0 0
  %75 = vmatpush2.bf16.msra.mxu0 0
  %76 = vmatprep.subr.bf16.mxu0 0
  %77 = vmatpush2.bf16.msra.mxu0 0
  %78 = vmatprep.mubr.bf16.mxu0 0
  %79 = vmatmul.mubr.bf16.gmra.mxu0 %v40
  %v80 = vpop.f32.mrf.mxu0
  %v81 = vadd.f32 0.0, %v80
  %v82 = vpop.f32.mrf.mxu0
  %v83 = vpop.f32.mrf.mxu0
  %v84 = vadd.f32 0.0, %v83
  %v85 = vpop.f32.mrf.mxu0
  %86 = vdwg.mxu0
  %v89 = vunpack.c.l.b16 %v27
  %v90 = vunpack.c.l.b16 %v28
  %v91 = vpack.c.b16 %v90, %v89
  %v93 = vsel %vm38, %v91, 0
  %v96 = vsel %vm42, %v29, 0
  %98 = vmatprep.subr.bf16.mxu0 0
  %99 = vmatpush1.bf16.msra.mxu0 0
  %100 = vmatprep.subr.bf16.mxu0 0
  %101 = vmatpush1.bf16.msra.mxu0 0
  %102 = vmatprep.subr.bf16.mxu0 0
  %103 = vmatpush1.bf16.msra.mxu0 0
  %104 = vmatprep.subr.bf16.mxu0 0
  %105 = vmatpush1.bf16.msra.mxu0 0
  %106 = vmatprep.subr.bf16.mxu0 0
  %107 = vmatpush1.bf16.msra.mxu0 0
  %108 = vmatprep.subr.bf16.mxu0 0
  %109 = vmatpush1.bf16.msra.mxu0 0
  %110 = vmatprep.subr.bf16.mxu0 0
  %111 = vmatpush1.bf16.msra.mxu0 0
  %112 = vmatprep.subr.bf16.mxu0 0
  %113 = vmatpush1.bf16.msra.mxu0 %v96
  %114 = vmatprep.subr.bf16.mxu0 0
  %115 = vmatpush2.bf16.msra.mxu0 0
  %116 = vmatprep.subr.bf16.mxu0 0
  %117 = vmatpush2.bf16.msra.mxu0 0
  %118 = vmatprep.subr.bf16.mxu0 0
  %119 = vmatpush2.bf16.msra.mxu0 0
  %120 = vmatprep.subr.bf16.mxu0 0
  %121 = vmatpush2.bf16.msra.mxu0 0
  %122 = vmatprep.subr.bf16.mxu0 0
  %123 = vmatpush2.bf16.msra.mxu0 0
  %124 = vmatprep.subr.bf16.mxu0 0
  %125 = vmatpush2.bf16.msra.mxu0 0
  %126 = vmatprep.subr.bf16.mxu0 0
  %127 = vmatpush2.bf16.msra.mxu0 0
  %128 = vmatprep.subr.bf16.mxu0 0
  %129 = vmatpush2.bf16.msra.mxu0 0
  %130 = vmatprep.mubr.bf16.mxu0 0
  %131 = vmatmul.mubr.bf16.gmra.mxu0 %v93
  %v132 = vpop.f32.mrf.mxu0
  %v133 = vadd.f32 %v81, %v132
  %v134 = vpop.f32.mrf.mxu0
  %v135 = vpop.f32.mrf.mxu0
  %v136 = vadd.f32 %v84, %v135
  %v137 = vpop.f32.mrf.mxu0
  %138 = vdwg.mxu0
  %v139 = vld [vmem:[%s2] sm:$0xf]
  %v140 = vld [vmem:[%s2 + $0x4] sm:$0xf]
  %v141 = vld [vmem:[%s5] sm:$0xf]
  %v144 = vunpack.c.l.b16 %v139
  %v145 = vunpack.c.l.b16 %v140
  %v146 = vpack.c.b16 %v145, %v144
  %v148 = vsel %vm38, %v146, 0
  %v151 = vsel %vm42, %v141, 0
  %153 = vmatprep.subr.bf16.mxu0 0
  %154 = vmatpush1.bf16.msra.mxu0 0
  %155 = vmatprep.subr.bf16.mxu0 0
  %156 = vmatpush1.bf16.msra.mxu0 0
  %157 = vmatprep.subr.bf16.mxu0 0
  %158 = vmatpush1.bf16.msra.mxu0 0
  %159 = vmatprep.subr.bf16.mxu0 0
  %160 = vmatpush1.bf16.msra.mxu0 0
  %161 = vmatprep.subr.bf16.mxu0 0
  %162 = vmatpush1.bf16.msra.mxu0 0
  %163 = vmatprep.subr.bf16.mxu0 0
  %164 = vmatpush1.bf16.msra.mxu0 0
  %165 = vmatprep.subr.bf16.mxu0 0
  %166 = vmatpush1.bf16.msra.mxu0 0
  %167 = vmatprep.subr.bf16.mxu0 0
  %168 = vmatpush1.bf16.msra.mxu0 %v151
  %169 = vmatprep.subr.bf16.mxu0 0
  %170 = vmatpush2.bf16.msra.mxu0 0
  %171 = vmatprep.subr.bf16.mxu0 0
  %172 = vmatpush2.bf16.msra.mxu0 0
  %173 = vmatprep.subr.bf16.mxu0 0
  %174 = vmatpush2.bf16.msra.mxu0 0
  %175 = vmatprep.subr.bf16.mxu0 0
  %176 = vmatpush2.bf16.msra.mxu0 0
  %177 = vmatprep.subr.bf16.mxu0 0
  %178 = vmatpush2.bf16.msra.mxu0 0
  %179 = vmatprep.subr.bf16.mxu0 0
  %180 = vmatpush2.bf16.msra.mxu0 0
  %181 = vmatprep.subr.bf16.mxu0 0
  %182 = vmatpush2.bf16.msra.mxu0 0
  %183 = vmatprep.subr.bf16.mxu0 0
  %184 = vmatpush2.bf16.msra.mxu0 0
  %185 = vmatprep.mubr.bf16.mxu0 0
  %186 = vmatmul.mubr.bf16.gmra.mxu0 %v148
  %v187 = vpop.f32.mrf.mxu0
  %v188 = vadd.f32 0.0, %v187
  %v189 = vpop.f32.mrf.mxu0
  %v190 = vpop.f32.mrf.mxu0
  %v191 = vadd.f32 0.0, %v190
  %v192 = vpop.f32.mrf.mxu0
  %193 = vdwg.mxu0
  %v194 = vadd.f32 %v133, %v188
  %v195 = vadd.f32 %v136, %v191
  %v196 = vld [vmem:[%s6] sm:$0x1]
  %v198 = vlaneseq
  %v199 = vshrl.u32 %v198, 7
  %v200 = vsub.s32 0, %v199
  %v201 = vrot.slane %v196, %v200
  %v203 = vadd.f32 %v194, %v201
  %v204 = vadd.f32 %v195, %v201
  %vm205 = vcmp.gt.f32.partialorder %v203, 0.0
  %vm206 = vcmp.gt.f32.partialorder %v204, 0.0
  %v207 = vmul.f32 %v203, 1.442695
  %v208 = vpow.pop %v207
  %v209 = vmul.f32 %v204, 1.442695
  %v210 = vpow.pop %v209
  %v211 = vsub.f32 %v208, 1.0
  %v212 = vsub.f32 %v210, 1.0
  %v213 = vsel %vm205, %v203, %v211
  %v214 = vsel %vm206, %v204, %v212
  %v215 = vpack.c.bf16 %v214, %v213
  %v217 = vunpack.c.l.b16 %v215
  %v218 = vunpack.c.h.b16 %v215
  %v219 = vpack.c.b16 %v217, %v217
  %v220 = vpack.c.b16 %v218, %v218
  %vm223 = vcmask 125952
  %224 = vst.msk [vmem:[%s7] sm:$0xf] %vm223, %v219
  %225 = vst.msk [vmem:[%s7 + $0x4] sm:$0xf] %vm223, %v220
  // Predicated region
  $region30: #{a_base_forward.10} parent=0 // pred_check
    _
  $region31: #{a_base_forward.10} parent=0 // pred_check_branch
    %227 = sbr.rel (0) target = $region33
  $region32: #{a_base_forward.10} parent=0 // pred_region
    _
  $region33: #{a_base_forward.10} parent=0 // pred_fallthru
    _
  // Predicated region
  $region34: #{a_base_forward.10} parent=0 // pred_check
    _
  $region35: #{a_base_forward.10} parent=0 // pred_check_branch
    %229 = sbr.rel (0) target = $region37
  $region36: #{a_base_forward.10} parent=0 // pred_region
    _
  $region37: #{a_base_forward.10} parent=0 // pred_fallthru
    _

// kernel: a_base_forward.11
$region0: #{a_base_forward.11}
  #allocation0 [shape = 'u32[]', space=smem, size = 0x4, offset = 0x4, fixed_abs, tag = 'smem constant byte address 0x4 - core index']
  #allocation1 [shape = 'u32[144,128]{1,0:T(1,128)}', space=vmem, size = 0x12000, scoped, tag = 'internal scratch']
  %s0 = inlined_call_operand.vmem [shape: bf16[16,16], index: 0, kind: input, shape index: {}]
  %s1 = inlined_call_operand.vmem [shape: bf16[16,256], index: 1, kind: input, shape index: {}]
  %s2 = inlined_call_operand.vmem [shape: f32[1,256], index: 2, kind: input, shape index: {}]
  %s3 = inlined_call_operand.vmem [shape: bf16[16,256], index: 3, kind: output, shape index: {}]
  %s4 = sld [smem:[#allocation0]]
  $region22: #{a_base_forward.11} parent=0
    _
  %s6 = ssub.s32 1, %s4
  %s7 = scalar_select 0, %s6, %s4
  // Predicated region
  $region2: #{a_base_forward.11} parent=0 // pred_check
    _
  $region3: #{a_base_forward.11} parent=0 // pred_check_branch
    %9 = sbr.rel (0) target = $region5
  $region4: #{a_base_forward.11} parent=0 // pred_region
    _
  $region5: #{a_base_forward.11} parent=0 // pred_fallthru
    _
  // Predicated region
  $region6: #{a_base_forward.11} parent=0 // pred_check
    _
  $region7: #{a_base_forward.11} parent=0 // pred_check_branch
    %11 = sbr.rel (0) target = $region9
  $region8: #{a_base_forward.11} parent=0 // pred_region
    _
  $region9: #{a_base_forward.11} parent=0 // pred_fallthru
    _
  // Predicated region
  $region10: #{a_base_forward.11} parent=0 // pred_check
    _
  $region11: #{a_base_forward.11} parent=0 // pred_check_branch
    %13 = sbr.rel (0) target = $region13
  $region12: #{a_base_forward.11} parent=0 // pred_region
    _
  $region13: #{a_base_forward.11} parent=0 // pred_fallthru
    _
  %v15 = vld [vmem:[%s0] sm:$0xf]
  %v16 = vld [vmem:[%s0 + $0x4] sm:$0xf]
  %v17 = vld [vmem:[%s1] sm:$0xff]
  %v18 = vld [vmem:[%s1 + $0x8] sm:$0xff]
  %v19 = vld [vmem:[%s2] sm:$0x3]
  %v21 = vlaneseq
  %v22 = vshrl.u32 %v21, 7
  %v23 = vsub.s32 0, %v22
  %v24 = vrot.slane %v19, %v23
  %v25 = vlaneseq
  %v26 = vshrl.u32 %v25, 7
  %v27 = vsub.s32 1, %v26
  %v28 = vrot.slane %v19, %v27
  %v33 = vunpack.c.l.b16 %v15
  %v34 = vunpack.c.l.b16 %v16
  %v35 = vpack.c.b16 %v34, %v33
  %v38 = vunpack.c.l.b16 %v17
  %v39 = vunpack.c.h.b16 %v17
  %v40 = vunpack.c.l.b16 %v18
  %v41 = vunpack.c.h.b16 %v18
  %v42 = vpack.c.b16 %v40, %v38
  %v43 = vpack.c.b16 %v41, %v39
  %vm46 = vcmask 130048
  %v48 = vsel %vm46, %v35, 0
  %50 = vmatprep.subr.bf16.mxu0 0
  %51 = vmatpush1.bf16.msra.mxu0 0
  %52 = vmatprep.subr.bf16.mxu0 0
  %53 = vmatpush1.bf16.msra.mxu0 0
  %54 = vmatprep.subr.bf16.mxu0 0
  %55 = vmatpush1.bf16.msra.mxu0 0
  %56 = vmatprep.subr.bf16.mxu0 0
  %57 = vmatpush1.bf16.msra.mxu0 0
  %58 = vmatprep.subr.bf16.mxu0 0
  %59 = vmatpush1.bf16.msra.mxu0 0
  %60 = vmatprep.subr.bf16.mxu0 0
  %61 = vmatpush1.bf16.msra.mxu0 0
  %62 = vmatprep.subr.bf16.mxu0 0
  %63 = vmatpush1.bf16.msra.mxu0 0
  %64 = vmatprep.subr.bf16.mxu0 %v43
  %65 = vmatpush1.bf16.msra.mxu0 %v42
  %66 = vmatprep.subr.bf16.mxu0 0
  %67 = vmatpush2.bf16.msra.mxu0 0
  %68 = vmatprep.subr.bf16.mxu0 0
  %69 = vmatpush2.bf16.msra.mxu0 0
  %70 = vmatprep.subr.bf16.mxu0 0
  %71 = vmatpush2.bf16.msra.mxu0 0
  %72 = vmatprep.subr.bf16.mxu0 0
  %73 = vmatpush2.bf16.msra.mxu0 0
  %74 = vmatprep.subr.bf16.mxu0 0
  %75 = vmatpush2.bf16.msra.mxu0 0
  %76 = vmatprep.subr.bf16.mxu0 0
  %77 = vmatpush2.bf16.msra.mxu0 0
  %78 = vmatprep.subr.bf16.mxu0 0
  %79 = vmatpush2.bf16.msra.mxu0 0
  %80 = vmatprep.subr.bf16.mxu0 0
  %81 = vmatpush2.bf16.msra.mxu0 0
  %82 = vmatprep.mubr.bf16.mxu0 0
  %83 = vmatmul.mubr.bf16.gmra.mxu0 %v48
  %v84 = vpop.f32.mrf.mxu0
  %v85 = vadd.f32 %v24, %v84
  %v86 = vpop.f32.mrf.mxu0
  %v87 = vadd.f32 %v28, %v86
  %v88 = vpop.f32.mrf.mxu0
  %v89 = vadd.f32 %v24, %v88
  %v90 = vpop.f32.mrf.mxu0
  %v91 = vadd.f32 %v28, %v90
  %92 = vdwg.mxu0
  %v93 = vpack.c.bf16 %v89, %v85
  %v94 = vpack.c.bf16 %v91, %v87
  %v97 = vunpack.c.l.b16 %v93
  %v98 = vunpack.c.l.b16 %v94
  %v99 = vunpack.c.h.b16 %v93
  %v100 = vunpack.c.h.b16 %v94
  %v101 = vpack.c.b16 %v98, %v97
  %v102 = vpack.c.b16 %v100, %v99
  %105 = vst [vmem:[%s3] sm:$0xff] %v101
  %106 = vst [vmem:[%s3 + $0x8] sm:$0xff] %v102
  // Predicated region
  $region14: #{a_base_forward.11} parent=0 // pred_check
    _
  $region15: #{a_base_forward.11} parent=0 // pred_check_branch
    %108 = sbr.rel (0) target = $region17
  $region16: #{a_base_forward.11} parent=0 // pred_region
    _
  $region17: #{a_base_forward.11} parent=0 // pred_fallthru
    _
  // Predicated region
  $region18: #{a_base_forward.11} parent=0 // pred_check
    _
  $region19: #{a_base_forward.11} parent=0 // pred_check_branch
    %110 = sbr.rel (0) target = $region21
  $region20: #{a_base_forward.11} parent=0 // pred_region
    _
  $region21: #{a_base_forward.11} parent=0 // pred_fallthru
    _

// kernel: a_base_forward.9
$region0: #{a_base_forward.9}
  #allocation0 [shape = 'u32[]', space=smem, size = 0x4, offset = 0x4, fixed_abs, tag = 'smem constant byte address 0x4 - core index']
  #allocation1 [shape = 'u32[144,128]{1,0:T(1,128)}', space=vmem, size = 0x12000, scoped, tag = 'internal scratch']
  %s0 = inlined_call_operand.vmem [shape: bf16[16,40], index: 0, kind: input, shape index: {}]
  %s1 = inlined_call_operand.vmem [shape: bf16[16,40], index: 1, kind: input, shape index: {}]
  %s2 = inlined_call_operand.vmem [shape: bf16[16,40], index: 2, kind: input, shape index: {}]
  %s3 = inlined_call_operand.vmem [shape: bf16[40,8], index: 3, kind: input, shape index: {}]
  %s4 = inlined_call_operand.vmem [shape: bf16[40,8], index: 4, kind: input, shape index: {}]
  %s5 = inlined_call_operand.vmem [shape: bf16[40,8], index: 5, kind: input, shape index: {}]
  %s6 = inlined_call_operand.vmem [shape: f32[1,8], index: 6, kind: input, shape index: {}]
  %s7 = inlined_call_operand.vmem [shape: bf16[16,8], index: 7, kind: output, shape index: {}]
  %s8 = sld [smem:[#allocation0]]
  $region38: #{a_base_forward.9} parent=0
    _
  %s10 = ssub.s32 1, %s8
  %s11 = scalar_select 0, %s10, %s8
  // Predicated region
  $region2: #{a_base_forward.9} parent=0 // pred_check
    _
  $region3: #{a_base_forward.9} parent=0 // pred_check_branch
    %13 = sbr.rel (0) target = $region5
  $region4: #{a_base_forward.9} parent=0 // pred_region
    _
  $region5: #{a_base_forward.9} parent=0 // pred_fallthru
    _
  // Predicated region
  $region6: #{a_base_forward.9} parent=0 // pred_check
    _
  $region7: #{a_base_forward.9} parent=0 // pred_check_branch
    %15 = sbr.rel (0) target = $region9
  $region8: #{a_base_forward.9} parent=0 // pred_region
    _
  $region9: #{a_base_forward.9} parent=0 // pred_fallthru
    _
  // Predicated region
  $region10: #{a_base_forward.9} parent=0 // pred_check
    _
  $region11: #{a_base_forward.9} parent=0 // pred_check_branch
    %17 = sbr.rel (0) target = $region13
  $region12: #{a_base_forward.9} parent=0 // pred_region
    _
  $region13: #{a_base_forward.9} parent=0 // pred_fallthru
    _
  // Predicated region
  $region14: #{a_base_forward.9} parent=0 // pred_check
    _
  $region15: #{a_base_forward.9} parent=0 // pred_check_branch
    %19 = sbr.rel (0) target = $region17
  $region16: #{a_base_forward.9} parent=0 // pred_region
    _
  $region17: #{a_base_forward.9} parent=0 // pred_fallthru
    _
  // Predicated region
  $region18: #{a_base_forward.9} parent=0 // pred_check
    _
  $region19: #{a_base_forward.9} parent=0 // pred_check_branch
    %21 = sbr.rel (0) target = $region21
  $region20: #{a_base_forward.9} parent=0 // pred_region
    _
  $region21: #{a_base_forward.9} parent=0 // pred_fallthru
    _
  // Predicated region
  $region22: #{a_base_forward.9} parent=0 // pred_check
    _
  $region23: #{a_base_forward.9} parent=0 // pred_check_branch
    %23 = sbr.rel (0) target = $region25
  $region24: #{a_base_forward.9} parent=0 // pred_region
    _
  $region25: #{a_base_forward.9} parent=0 // pred_fallthru
    _
  // Predicated region
  $region26: #{a_base_forward.9} parent=0 // pred_check
    _
  $region27: #{a_base_forward.9} parent=0 // pred_check_branch
    %25 = sbr.rel (0) target = $region29
  $region28: #{a_base_forward.9} parent=0 // pred_region
    _
  $region29: #{a_base_forward.9} parent=0 // pred_fallthru
    _
  %v27 = vld [vmem:[%s0] sm:$0xf]
  %v28 = vld [vmem:[%s0 + $0x4] sm:$0xf]
  %v29 = vld [vmem:[%s3] sm:$0xf]
  %v30 = vld [vmem:[%s3 + $0x4] sm:$0xf]
  %v31 = vld [vmem:[%s3 + $0x8] sm:$0xf]
  %v32 = vld [vmem:[%s3 + $0xc] sm:$0xf]
  %v33 = vld [vmem:[%s3 + $0x10] sm:$0xf]
  %v34 = vld [vmem:[%s1] sm:$0xf]
  %v35 = vld [vmem:[%s1 + $0x4] sm:$0xf]
  %v36 = vld [vmem:[%s4] sm:$0xf]
  %v37 = vld [vmem:[%s4 + $0x4] sm:$0xf]
  %v38 = vld [vmem:[%s4 + $0x8] sm:$0xf]
  %v39 = vld [vmem:[%s4 + $0xc] sm:$0xf]
  %v40 = vld [vmem:[%s4 + $0x10] sm:$0xf]
  %v43 = vunpack.c.l.b16 %v34
  %v44 = vunpack.c.l.b16 %v35
  %v45 = vpack.c.b16 %v44, %v43
  %v51 = vunpack.c.l.b16 %v36
  %v52 = vunpack.c.l.b16 %v37
  %v53 = vunpack.c.l.b16 %v38
  %v54 = vunpack.c.l.b16 %v39
  %v55 = vunpack.c.l.b16 %v40
  %v56 = vpack.c.b16 %v52, %v51
  %v57 = vpack.c.b16 %v54, %v53
  %v58 = vpack.c.b16 %v55, %v55
  %vm61 = vcmask 326656
  %v63 = vsel %vm61, %v45, 0
  %vm65 = vcmask 1043456
  %v67 = vsel %vm65, %v58, 0
  %69 = vmatprep.subr.bf16.mxu0 0
  %70 = vmatpush1.bf16.msra.mxu0 0
  %71 = vmatprep.subr.bf16.mxu0 0
  %72 = vmatpush1.bf16.msra.mxu0 0
  %73 = vmatprep.subr.bf16.mxu0 0
  %74 = vmatpush1.bf16.msra.mxu0 0
  %75 = vmatprep.subr.bf16.mxu0 0
  %76 = vmatpush1.bf16.msra.mxu0 0
  %77 = vmatprep.subr.bf16.mxu0 0
  %78 = vmatpush1.bf16.msra.mxu0 0
  %79 = vmatprep.subr.bf16.mxu0 0
  %80 = vmatpush1.bf16.msra.mxu0 %v67
  %81 = vmatprep.subr.bf16.mxu0 0
  %82 = vmatpush1.bf16.msra.mxu0 %v57
  %83 = vmatprep.subr.bf16.mxu0 0
  %84 = vmatpush1.bf16.msra.mxu0 %v56
  %85 = vmatprep.subr.bf16.mxu0 0
  %86 = vmatpush2.bf16.msra.mxu0 0
  %87 = vmatprep.subr.bf16.mxu0 0
  %88 = vmatpush2.bf16.msra.mxu0 0
  %89 = vmatprep.subr.bf16.mxu0 0
  %90 = vmatpush2.bf16.msra.mxu0 0
  %91 = vmatprep.subr.bf16.mxu0 0
  %92 = vmatpush2.bf16.msra.mxu0 0
  %93 = vmatprep.subr.bf16.mxu0 0
  %94 = vmatpush2.bf16.msra.mxu0 0
  %95 = vmatprep.subr.bf16.mxu0 0
  %96 = vmatpush2.bf16.msra.mxu0 0
  %97 = vmatprep.subr.bf16.mxu0 0
  %98 = vmatpush2.bf16.msra.mxu0 0
  %99 = vmatprep.subr.bf16.mxu0 0
  %100 = vmatpush2.bf16.msra.mxu0 0
  %101 = vmatprep.mubr.bf16.mxu0 0
  %102 = vmatmul.mubr.bf16.gmra.mxu0 %v63
  %v103 = vpop.f32.mrf.mxu0
  %v104 = vadd.f32 0.0, %v103
  %v105 = vpop.f32.mrf.mxu0
  %v106 = vpop.f32.mrf.mxu0
  %v107 = vadd.f32 0.0, %v106
  %v108 = vpop.f32.mrf.mxu0
  %109 = vdwg.mxu0
  %v112 = vunpack.c.l.b16 %v27
  %v113 = vunpack.c.l.b16 %v28
  %v114 = vpack.c.b16 %v113, %v112
  %v120 = vunpack.c.l.b16 %v29
  %v121 = vunpack.c.l.b16 %v30
  %v122 = vunpack.c.l.b16 %v31
  %v123 = vunpack.c.l.b16 %v32
  %v124 = vunpack.c.l.b16 %v33
  %v125 = vpack.c.b16 %v121, %v120
  %v126 = vpack.c.b16 %v123, %v122
  %v127 = vpack.c.b16 %v124, %v124
  %v131 = vsel %vm61, %v114, 0
  %v134 = vsel %vm65, %v127, 0
  %136 = vmatprep.subr.bf16.mxu0 0
  %137 = vmatpush1.bf16.msra.mxu0 0
  %138 = vmatprep.subr.bf16.mxu0 0
  %139 = vmatpush1.bf16.msra.mxu0 0
  %140 = vmatprep.subr.bf16.mxu0 0
  %141 = vmatpush1.bf16.msra.mxu0 0
  %142 = vmatprep.subr.bf16.mxu0 0
  %143 = vmatpush1.bf16.msra.mxu0 0
  %144 = vmatprep.subr.bf16.mxu0 0
  %145 = vmatpush1.bf16.msra.mxu0 0
  %146 = vmatprep.subr.bf16.mxu0 0
  %147 = vmatpush1.bf16.msra.mxu0 %v134
  %148 = vmatprep.subr.bf16.mxu0 0
  %149 = vmatpush1.bf16.msra.mxu0 %v126
  %150 = vmatprep.subr.bf16.mxu0 0
  %151 = vmatpush1.bf16.msra.mxu0 %v125
  %152 = vmatprep.subr.bf16.mxu0 0
  %153 = vmatpush2.bf16.msra.mxu0 0
  %154 = vmatprep.subr.bf16.mxu0 0
  %155 = vmatpush2.bf16.msra.mxu0 0
  %156 = vmatprep.subr.bf16.mxu0 0
  %157 = vmatpush2.bf16.msra.mxu0 0
  %158 = vmatprep.subr.bf16.mxu0 0
  %159 = vmatpush2.bf16.msra.mxu0 0
  %160 = vmatprep.subr.bf16.mxu0 0
  %161 = vmatpush2.bf16.msra.mxu0 0
  %162 = vmatprep.subr.bf16.mxu0 0
  %163 = vmatpush2.bf16.msra.mxu0 0
  %164 = vmatprep.subr.bf16.mxu0 0
  %165 = vmatpush2.bf16.msra.mxu0 0
  %166 = vmatprep.subr.bf16.mxu0 0
  %167 = vmatpush2.bf16.msra.mxu0 0
  %168 = vmatprep.mubr.bf16.mxu0 0
  %169 = vmatmul.mubr.bf16.gmra.mxu0 %v131
  %v170 = vpop.f32.mrf.mxu0
  %v171 = vadd.f32 %v104, %v170
  %v172 = vpop.f32.mrf.mxu0
  %v173 = vpop.f32.mrf.mxu0
  %v174 = vadd.f32 %v107, %v173
  %v175 = vpop.f32.mrf.mxu0
  %176 = vdwg.mxu0
  %v177 = vld [vmem:[%s2] sm:$0xf]
  %v178 = vld [vmem:[%s2 + $0x4] sm:$0xf]
  %v179 = vld [vmem:[%s5] sm:$0xf]
  %v180 = vld [vmem:[%s5 + $0x4] sm:$0xf]
  %v181 = vld [vmem:[%s5 + $0x8] sm:$0xf]
  %v182 = vld [vmem:[%s5 + $0xc] sm:$0xf]
  %v183 = vld [vmem:[%s5 + $0x10] sm:$0xf]
  %v186 = vunpack.c.l.b16 %v177
  %v187 = vunpack.c.l.b16 %v178
  %v188 = vpack.c.b16 %v187, %v186
  %v194 = vunpack.c.l.b16 %v179
  %v195 = vunpack.c.l.b16 %v180
  %v196 = vunpack.c.l.b16 %v181
  %v197 = vunpack.c.l.b16 %v182
  %v198 = vunpack.c.l.b16 %v183
  %v199 = vpack.c.b16 %v195, %v194
  %v200 = vpack.c.b16 %v197, %v196
  %v201 = vpack.c.b16 %v198, %v198
  %v205 = vsel %vm61, %v188, 0
  %v208 = vsel %vm65, %v201, 0
  %210 = vmatprep.subr.bf16.mxu0 0
  %211 = vmatpush1.bf16.msra.mxu0 0
  %212 = vmatprep.subr.bf16.mxu0 0
  %213 = vmatpush1.bf16.msra.mxu0 0
  %214 = vmatprep.subr.bf16.mxu0 0
  %215 = vmatpush1.bf16.msra.mxu0 0
  %216 = vmatprep.subr.bf16.mxu0 0
  %217 = vmatpush1.bf16.msra.mxu0 0
  %218 = vmatprep.subr.bf16.mxu0 0
  %219 = vmatpush1.bf16.msra.mxu0 0
  %220 = vmatprep.subr.bf16.mxu0 0
  %221 = vmatpush1.bf16.msra.mxu0 %v208
  %222 = vmatprep.subr.bf16.mxu0 0
  %223 = vmatpush1.bf16.msra.mxu0 %v200
  %224 = vmatprep.subr.bf16.mxu0 0
  %225 = vmatpush1.bf16.msra.mxu0 %v199
  %226 = vmatprep.subr.bf16.mxu0 0
  %227 = vmatpush2.bf16.msra.mxu0 0
  %228 = vmatprep.subr.bf16.mxu0 0
  %229 = vmatpush2.bf16.msra.mxu0 0
  %230 = vmatprep.subr.bf16.mxu0 0
  %231 = vmatpush2.bf16.msra.mxu0 0
  %232 = vmatprep.subr.bf16.mxu0 0
  %233 = vmatpush2.bf16.msra.mxu0 0
  %234 = vmatprep.subr.bf16.mxu0 0
  %235 = vmatpush2.bf16.msra.mxu0 0
  %236 = vmatprep.subr.bf16.mxu0 0
  %237 = vmatpush2.bf16.msra.mxu0 0
  %238 = vmatprep.subr.bf16.mxu0 0
  %239 = vmatpush2.bf16.msra.mxu0 0
  %240 = vmatprep.subr.bf16.mxu0 0
  %241 = vmatpush2.bf16.msra.mxu0 0
  %242 = vmatprep.mubr.bf16.mxu0 0
  %243 = vmatmul.mubr.bf16.gmra.mxu0 %v205
  %v244 = vpop.f32.mrf.mxu0
  %v245 = vadd.f32 0.0, %v244
  %v246 = vpop.f32.mrf.mxu0
  %v247 = vpop.f32.mrf.mxu0
  %v248 = vadd.f32 0.0, %v247
  %v249 = vpop.f32.mrf.mxu0
  %250 = vdwg.mxu0
  %v251 = vadd.f32 %v171, %v245
  %v252 = vadd.f32 %v174, %v248
  %v253 = vld [vmem:[%s6] sm:$0x1]
  %v255 = vlaneseq
  %v256 = vshrl.u32 %v255, 7
  %v257 = vsub.s32 0, %v256
  %v258 = vrot.slane %v253, %v257
  %v260 = vadd.f32 %v251, %v258
  %v261 = vadd.f32 %v252, %v258
  %vm262 = vcmp.gt.f32.partialorder %v260, 0.0
  %vm263 = vcmp.gt.f32.partialorder %v261, 0.0
  %v264 = vmul.f32 %v260, 1.442695
  %v265 = vpow.pop %v264
  %v266 = vmul.f32 %v261, 1.442695
  %v267 = vpow.pop %v266
  %v268 = vsub.f32 %v265, 1.0
  %v269 = vsub.f32 %v267, 1.0
  %v270 = vsel %vm262, %v260, %v268
  %v271 = vsel %vm263, %v261, %v269
  %v272 = vpack.c.bf16 %v271, %v270
  %v274 = vunpack.c.l.b16 %v272
  %v275 = vunpack.c.h.b16 %v272
  %v276 = vpack.c.b16 %v274, %v274
  %v277 = vpack.c.b16 %v275, %v275
  %vm280 = vcmask 60416
  %281 = vst.msk [vmem:[%s7] sm:$0xf] %vm280, %v276
  %282 = vst.msk [vmem:[%s7 + $0x4] sm:$0xf] %vm280, %v277
  // Predicated region
  $region30: #{a_base_forward.9} parent=0 // pred_check
    _
  $region31: #{a_base_forward.9} parent=0 // pred_check_branch
    %284 = sbr.rel (0) target = $region33
  $region32: #{a_base_forward.9} parent=0 // pred_region
    _
  $region33: #{a_base_forward.9} parent=0 // pred_fallthru
    _
  // Predicated region
  $region34: #{a_base_forward.9} parent=0 // pred_check
    _
  $region35: #{a_base_forward.9} parent=0 // pred_check_branch
    %286 = sbr.rel (0) target = $region37
  $region36: #{a_base_forward.9} parent=0 // pred_region
    _
  $region37: #{a_base_forward.9} parent=0 // pred_fallthru
    _

// kernel: a_base_forward.12
$region0: #{a_base_forward.12}
  #allocation0 [shape = 'u32[]', space=smem, size = 0x4, offset = 0x4, fixed_abs, tag = 'smem constant byte address 0x4 - core index']
  #allocation1 [shape = 'u32[144,128]{1,0:T(1,128)}', space=vmem, size = 0x12000, scoped, tag = 'internal scratch']
  #allocation2 [shape = 'f32[4,32]{1,0:T(4,128)}', space=vmem, size = 0x800, scoped, tag = 'scratch operand']
  #allocation3 [shape = 'f32[4,32]{1,0:T(4,128)}', space=vmem, size = 0x800, scoped, tag = 'scratch operand']
  %s0 = inlined_call_operand.vmem [shape: s32[4,2], index: 0, kind: input, shape index: {}]
  %s1 = inlined_call_operand.vmem [shape: bf16[7,4,128], index: 1, kind: input, shape index: {}]
  %s2 = inlined_call_operand.vmem [shape: f32[32,256], index: 2, kind: input, shape index: {}]
  %s3 = inlined_call_operand.vmem [shape: f32[7,4,32], index: 3, kind: output, shape index: {}]
  %s4 = sld [smem:[#allocation0]]
  $region26: #{a_base_forward.12} parent=0
    _
  %s6 = ssub.s32 1, %s4
  %s7 = scalar_select 0, %s6, %s4
  // Predicated region
  $region2: #{a_base_forward.12} parent=0 // pred_check
    _
  $region3: #{a_base_forward.12} parent=0 // pred_check_branch
    %9 = sbr.rel (0) target = $region5
  $region4: #{a_base_forward.12} parent=0 // pred_region
    _
  $region5: #{a_base_forward.12} parent=0 // pred_fallthru
    _
  // Predicated region
  $region6: #{a_base_forward.12} parent=0 // pred_check
    _
  $region7: #{a_base_forward.12} parent=0 // pred_check_branch
    %11 = sbr.rel (0) target = $region9
  $region8: #{a_base_forward.12} parent=0 // pred_region
    _
  $region9: #{a_base_forward.12} parent=0 // pred_fallthru
    _
  // Predicated region
  $region10: #{a_base_forward.12} parent=0 // pred_check
    _
  $region11: #{a_base_forward.12} parent=0 // pred_check_branch
    %13 = sbr.rel (0) target = $region13
  $region12: #{a_base_forward.12} parent=0 // pred_region
    _
  $region13: #{a_base_forward.12} parent=0 // pred_fallthru
    _
  %p15 = scmp.eq.s32.totalorder 0, 0
  // Predicated region
  $region14: #{a_base_forward.12} parent=0 // pred_check
    %p16 = pneg %p15
  $region15: #{a_base_forward.12} parent=0 // pred_check_branch
    %18 = sbr.rel (%p16) target = $region17
  $region16: #{a_base_forward.12} parent=0 // pred_region
    %vm19 = vcmask 257024
    %20 = vst.msk [vmem:[#allocation2] sm:$0xf] %vm19, 0.0
    %21 = vst.msk [vmem:[#allocation3] sm:$0xf] %vm19, 0.0
  $region17: #{a_base_forward.12} parent=0 // pred_fallthru
    _
  %v22 = vld [vmem:[%s0] sm:$0xf]
  %v23 = vld [vmem:[%s2] sm:$0xff]
  %v24 = vld [vmem:[%s2 + $0x8] sm:$0xff]
  %v25 = vld [vmem:[%s2 + $0x10] sm:$0xff]
  %v26 = vld [vmem:[%s2 + $0x18] sm:$0xff]
  %v27 = vld [vmem:[%s2 + $0x20] sm:$0xff]
  %v28 = vld [vmem:[%s2 + $0x28] sm:$0xff]
  %v29 = vld [vmem:[%s2 + $0x30] sm:$0xff]
  %v30 = vld [vmem:[%s2 + $0x38] sm:$0xff]
  %v31 = vlaneseq
  %v32 = vshrl.u32 %v31, 7
  %vm33 = vcmp.lt.s32.totalorder %v32, 2
  %v34 = vld [vmem:[#allocation2] sm:$0xf]
  %v35 = vld [vmem:[#allocation3] sm:$0xf]
  %s36 = smul.u32 0, 7
  %v37 = vpack.c.bf16 %v34, %v34
  %vm38 = vcmask 261120
  %v40 = vsel %vm38, %v37, 0
  %42 = vmatprep.subr.mxu0 0.0
  %43 = vmatpush1.msra.mxu0 0.0
  %44 = vmatprep.subr.mxu0 0.0
  %45 = vmatpush1.msra.mxu0 0.0
  %46 = vmatprep.subr.mxu0 0.0
  %47 = vmatpush1.msra.mxu0 0.0
  %48 = vmatprep.subr.mxu0 0.0
  %49 = vmatpush1.msra.mxu0 0.0
  %50 = vmatprep.subr.mxu0 0.0
  %51 = vmatpush1.msra.mxu0 0.0
  %52 = vmatprep.subr.mxu0 0.0
  %53 = vmatpush1.msra.mxu0 0.0
  %54 = vmatprep.subr.mxu0 0.0
  %55 = vmatpush1.msra.mxu0 0.0
  %56 = vmatprep.subr.mxu0 0.0
  %57 = vmatpush1.msra.mxu0 0.0
  %58 = vmatprep.subr.mxu0 0.0
  %59 = vmatpush1.msra.mxu0 0.0
  %60 = vmatprep.subr.mxu0 0.0
  %61 = vmatpush1.msra.mxu0 0.0
  %62 = vmatprep.subr.mxu0 0.0
  %63 = vmatpush1.msra.mxu0 0.0
  %64 = vmatprep.subr.mxu0 0.0
  %65 = vmatpush1.msra.mxu0 0.0
  %66 = vmatprep.subr.mxu0 %v30
  %67 = vmatpush1.msra.mxu0 %v29
  %68 = vmatprep.subr.mxu0 %v28
  %69 = vmatpush1.msra.mxu0 %v27
  %70 = vmatprep.subr.mxu0 %v26
  %71 = vmatpush1.msra.mxu0 %v25
  %72 = vmatprep.subr.mxu0 %v24
  %73 = vmatpush1.msra.mxu0 %v23
  %74 = vmatprep.subr.mxu0 0.0
  %75 = vmatpush2.msra.mxu0 0.0
  %76 = vmatprep.subr.mxu0 0.0
  %77 = vmatpush2.msra.mxu0 0.0
  %78 = vmatprep.subr.mxu0 0.0
  %79 = vmatpush2.msra.mxu0 0.0
  %80 = vmatprep.subr.mxu0 0.0
  %81 = vmatpush2.msra.mxu0 0.0
  %82 = vmatprep.subr.mxu0 0.0
  %83 = vmatpush2.msra.mxu0 0.0
  %84 = vmatprep.subr.mxu0 0.0
  %85 = vmatpush2.msra.mxu0 0.0
  %86 = vmatprep.subr.mxu0 0.0
  %87 = vmatpush2.msra.mxu0 0.0
  %88 = vmatprep.subr.mxu0 0.0
  %89 = vmatpush2.msra.mxu0 0.0
  %90 = vmatprep.subr.mxu0 0.0
  %91 = vmatpush2.msra.mxu0 0.0
  %92 = vmatprep.subr.mxu0 0.0
  %93 = vmatpush2.msra.mxu0 0.0
  %94 = vmatprep.subr.mxu0 0.0
  %95 = vmatpush2.msra.mxu0 0.0
  %96 = vmatprep.subr.mxu0 0.0
  %97 = vmatpush2.msra.mxu0 0.0
  %98 = vmatprep.subr.mxu0 0.0
  %99 = vmatpush2.msra.mxu0 0.0
  %100 = vmatprep.subr.mxu0 0.0
  %101 = vmatpush2.msra.mxu0 0.0
  %102 = vmatprep.subr.mxu0 0.0
  %103 = vmatpush2.msra.mxu0 0.0
  %104 = vmatprep.subr.mxu0 0.0
  %105 = vmatpush2.msra.mxu0 0.0
  %106 = vmatprep.mubr.bf16.mxu0 0
  %107 = vmatmul.mubr.bf16.gmra.mxu0 %v40
  %v108 = vpop.f32.mrf.mxu0
  %v109 = vadd.f32 0.0, %v108
  %v110 = vpop.f32.mrf.mxu0
  %v111 = vadd.f32 0.0, %v110
  %v112 = vpop.f32.mrf.mxu0
  %v113 = vpop.f32.mrf.mxu0
  %114 = vdwg.mxu0
  %v115 = vsel %vm33, 1, 0
  %vm116 = vcmp.eq.s32.totalorder %v115, 1
  %v117 = vsel %vm116, %v109, %v111
  %v118 = vld [vmem:[%s1] sm:$0x3]
  %v119 = vunpack.c.l.bf16 %v118
  %v120 = vadd.f32 %v119, %v117
  %v121 = vxor.u32 %v120, 2147483648
  %v122 = vmul.f32 %v121, 1.442695
  %v123 = vpow.pop %v122
  %v124 = vadd.f32 %v123, 1.0
  %v125 = vrcp.pop %v124
  %v126 = vmul.f32 1.0, %v125
  %v127 = vtanh.pop %v120
  %129 = vrot.lane.b32.xlu0 %v35, 32
  %v130 = vpop.permute.xlu0 %129
  %v132 = vmul.f32 %v126, %v130
  %134 = vrot.lane.b32.xlu0 %v127, 32
  %v135 = vpop.permute.xlu0 %134
  %v137 = vmul.f32 %v126, %v135
  %139 = vrot.lane.b32.xlu0 %v137, 32
  %v140 = vpop.permute.xlu0 %139
  %v142 = vadd.f32 %v132, %v140
  %v143 = vtanh.pop %v142
  %145 = vrot.lane.b32.xlu0 %v143, 32
  %v146 = vpop.permute.xlu0 %145
  %v148 = vmul.f32 %v126, %v146
  %v149 = vstv %s36
  %vm150 = vcmp.ge.s32.totalorder %v149, %v22
  %vm151 = vcmp.lt.s32.totalorder %v149, %v22
  %v152 = vsel %vm151, 1, 0
  %153 = vrot.lane.b32.xlu0 %v152, 127
  %v154 = vpop.permute.xlu0 %153
  %vm155 = vcmp.ne.s32.totalorder %v154, 0
  %vm156 = vmand %vm150, %vm155
  %v157 = vsel %vm156, 1, 0
  %v158 = vcvt.s32.f32 %v157
  %160 = vset.pattern.permute.xlu0 0
  %161 = vperm.xlu0 %160, %v158
  %v162 = vpop.permute.xlu0 %161
  %165 = vrot.lane.b32.xlu0 %v142, 96
  %v166 = vpop.permute.xlu0 %165
  %v168 = vmul.f32 %v162, %v166
  %v169 = vsub.f32 1.0, %v158
  %171 = vset.pattern.permute.xlu0 0
  %172 = vperm.xlu0 %171, %v169
  %v173 = vpop.permute.xlu0 %172
  %v175 = vmul.f32 %v173, %v35
  %v176 = vadd.f32 %v168, %v175
  %178 = vrot.lane.b32.xlu0 %v148, 64
  %v179 = vpop.permute.xlu0 %178
  %v181 = vmul.f32 %v162, %v179
  %v182 = vmul.f32 %v173, %v34
  %v183 = vadd.f32 %v181, %v182
  %v184 = vmul.f32 %v183, %v162
  %vm185 = vcmask 257024
  %186 = vst.msk [vmem:[%s3] sm:$0xf] %vm185, %v184
  %s187 = sadd.s32 %s36, 1
  %v188 = vpack.c.bf16 %v183, %v183
  %v190 = vsel %vm38, %v188, 0
  %192 = vmatprep.subr.mxu0 0.0
  %193 = vmatpush1.msra.mxu0 0.0
  %194 = vmatprep.subr.mxu0 0.0
  %195 = vmatpush1.msra.mxu0 0.0
  %196 = vmatprep.subr.mxu0 0.0
  %197 = vmatpush1.msra.mxu0 0.0
  %198 = vmatprep.subr.mxu0 0.0
  %199 = vmatpush1.msra.mxu0 0.0
  %200 = vmatprep.subr.mxu0 0.0
  %201 = vmatpush1.msra.mxu0 0.0
  %202 = vmatprep.subr.mxu0 0.0
  %203 = vmatpush1.msra.mxu0 0.0
  %204 = vmatprep.subr.mxu0 0.0
  %205 = vmatpush1.msra.mxu0 0.0
  %206 = vmatprep.subr.mxu0 0.0
  %207 = vmatpush1.msra.mxu0 0.0
  %208 = vmatprep.subr.mxu0 0.0
  %209 = vmatpush1.msra.mxu0 0.0
  %210 = vmatprep.subr.mxu0 0.0
  %211 = vmatpush1.msra.mxu0 0.0
  %212 = vmatprep.subr.mxu0 0.0
  %213 = vmatpush1.msra.mxu0 0.0
  %214 = vmatprep.subr.mxu0 0.0
  %215 = vmatpush1.msra.mxu0 0.0
  %216 = vmatprep.subr.mxu0 %v30
  %217 = vmatpush1.msra.mxu0 %v29
  %218 = vmatprep.subr.mxu0 %v28
  %219 = vmatpush1.msra.mxu0 %v27
  %220 = vmatprep.subr.mxu0 %v26
  %221 = vmatpush1.msra.mxu0 %v25
  %222 = vmatprep.subr.mxu0 %v24
  %223 = vmatpush1.msra.mxu0 %v23
  %224 = vmatprep.subr.mxu0 0.0
  %225 = vmatpush2.msra.mxu0 0.0
  %226 = vmatprep.subr.mxu0 0.0
  %227 = vmatpush2.msra.mxu0 0.0
  %228 = vmatprep.subr.mxu0 0.0
  %229 = vmatpush2.msra.mxu0 0.0
  %230 = vmatprep.subr.mxu0 0.0
  %231 = vmatpush2.msra.mxu0 0.0
  %232 = vmatprep.subr.mxu0 0.0
  %233 = vmatpush2.msra.mxu0 0.0
  %234 = vmatprep.subr.mxu0 0.0
  %235 = vmatpush2.msra.mxu0 0.0
  %236 = vmatprep.subr.mxu0 0.0
  %237 = vmatpush2.msra.mxu0 0.0
  %238 = vmatprep.subr.mxu0 0.0
  %239 = vmatpush2.msra.mxu0 0.0
  %240 = vmatprep.subr.mxu0 0.0
  %241 = vmatpush2.msra.mxu0 0.0
  %242 = vmatprep.subr.mxu0 0.0
  %243 = vmatpush2.msra.mxu0 0.0
  %244 = vmatprep.subr.mxu0 0.0
  %245 = vmatpush2.msra.mxu0 0.0
  %246 = vmatprep.subr.mxu0 0.0
  %247 = vmatpush2.msra.mxu0 0.0
  %248 = vmatprep.subr.mxu0 0.0
  %249 = vmatpush2.msra.mxu0 0.0
  %250 = vmatprep.subr.mxu0 0.0
  %251 = vmatpush2.msra.mxu0 0.0
  %252 = vmatprep.subr.mxu0 0.0
  %253 = vmatpush2.msra.mxu0 0.0
  %254 = vmatprep.subr.mxu0 0.0
  %255 = vmatpush2.msra.mxu0 0.0
  %256 = vmatprep.mubr.bf16.mxu0 0
  %257 = vmatmul.mubr.bf16.gmra.mxu0 %v190
  %v258 = vpop.f32.mrf.mxu0
  %v259 = vadd.f32 0.0, %v258
  %v260 = vpop.f32.mrf.mxu0
  %v261 = vadd.f32 0.0, %v260
  %v262 = vpop.f32.mrf.mxu0
  %v263 = vpop.f32.mrf.mxu0
  %264 = vdwg.mxu0
  %v265 = vsel %vm116, %v259, %v261
  %s266 = scalar_lea.vmem %s1, 2
  %v267 = vld [vmem:[%s266] sm:$0x3]
  %v268 = vunpack.c.l.bf16 %v267
  %v269 = vadd.f32 %v268, %v265
  %v270 = vxor.u32 %v269, 2147483648
  %v271 = vmul.f32 %v270, 1.442695
  %v272 = vpow.pop %v271
  %v273 = vadd.f32 %v272, 1.0
  %v274 = vrcp.pop %v273
  %v275 = vmul.f32 1.0, %v274
  %v276 = vtanh.pop %v269
  %278 = vrot.lane.b32.xlu0 %v176, 32
  %v279 = vpop.permute.xlu0 %278
  %v281 = vmul.f32 %v275, %v279
  %283 = vrot.lane.b32.xlu0 %v276, 32
  %v284 = vpop.permute.xlu0 %283
  %v286 = vmul.f32 %v275, %v284
  %288 = vrot.lane.b32.xlu0 %v286, 32
  %v289 = vpop.permute.xlu0 %288
  %v291 = vadd.f32 %v281, %v289
  %v292 = vtanh.pop %v291
  %294 = vrot.lane.b32.xlu0 %v292, 32
  %v295 = vpop.permute.xlu0 %294
  %v297 = vmul.f32 %v275, %v295
  %v298 = vstv %s187
  %vm299 = vcmp.ge.s32.totalorder %v298, %v22
  %vm300 = vcmp.lt.s32.totalorder %v298, %v22
  %v301 = vsel %vm300, 1, 0
  %302 = vrot.lane.b32.xlu0 %v301, 127
  %v303 = vpop.permute.xlu0 %302
  %vm304 = vcmp.ne.s32.totalorder %v303, 0
  %vm305 = vmand %vm299, %vm304
  %v306 = vsel %vm305, 1, 0
  %v307 = vcvt.s32.f32 %v306
  %309 = vset.pattern.permute.xlu0 0
  %310 = vperm.xlu0 %309, %v307
  %v311 = vpop.permute.xlu0 %310
  %314 = vrot.lane.b32.xlu0 %v291, 96
  %v315 = vpop.permute.xlu0 %314
  %v317 = vmul.f32 %v311, %v315
  %v318 = vsub.f32 1.0, %v307
  %320 = vset.pattern.permute.xlu0 0
  %321 = vperm.xlu0 %320, %v318
  %v322 = vpop.permute.xlu0 %321
  %v324 = vmul.f32 %v322, %v176
  %v325 = vadd.f32 %v317, %v324
  %327 = vrot.lane.b32.xlu0 %v297, 64
  %v328 = vpop.permute.xlu0 %327
  %v330 = vmul.f32 %v311, %v328
  %v331 = vmul.f32 %v322, %v183
  %v332 = vadd.f32 %v330, %v331
  %v333 = vmul.f32 %v332, %v311
  %s334 = scalar_lea.vmem %s3, 4
  %335 = vst.msk [vmem:[%s334] sm:$0xf] %vm185, %v333
  %s336 = sadd.s32 %s36, 2
  %v337 = vpack.c.bf16 %v332, %v332
  %v339 = vsel %vm38, %v337, 0
  %341 = vmatprep.subr.mxu0 0.0
  %342 = vmatpush1.msra.mxu0 0.0
  %343 = vmatprep.subr.mxu0 0.0
  %344 = vmatpush1.msra.mxu0 0.0
  %345 = vmatprep.subr.mxu0 0.0
  %346 = vmatpush1.msra.mxu0 0.0
  %347 = vmatprep.subr.mxu0 0.0
  %348 = vmatpush1.msra.mxu0 0.0
  %349 = vmatprep.subr.mxu0 0.0
  %350 = vmatpush1.msra.mxu0 0.0
  %351 = vmatprep.subr.mxu0 0.0
  %352 = vmatpush1.msra.mxu0 0.0
  %353 = vmatprep.subr.mxu0 0.0
  %354 = vmatpush1.msra.mxu0 0.0
  %355 = vmatprep.subr.mxu0 0.0
  %356 = vmatpush1.msra.mxu0 0.0
  %357 = vmatprep.subr.mxu0 0.0
  %358 = vmatpush1.msra.mxu0 0.0
  %359 = vmatprep.subr.mxu0 0.0
  %360 = vmatpush1.msra.mxu0 0.0
  %361 = vmatprep.subr.mxu0 0.0
  %362 = vmatpush1.msra.mxu0 0.0
  %363 = vmatprep.subr.mxu0 0.0
  %364 = vmatpush1.msra.mxu0 0.0
  %365 = vmatprep.subr.mxu0 %v30
  %366 = vmatpush1.msra.mxu0 %v29
  %367 = vmatprep.subr.mxu0 %v28
  %368 = vmatpush1.msra.mxu0 %v27
  %369 = vmatprep.subr.mxu0 %v26
  %370 = vmatpush1.msra.mxu0 %v25
  %371 = vmatprep.subr.mxu0 %v24
  %372 = vmatpush1.msra.mxu0 %v23
  %373 = vmatprep.subr.mxu0 0.0
  %374 = vmatpush2.msra.mxu0 0.0
  %375 = vmatprep.subr.mxu0 0.0
  %376 = vmatpush2.msra.mxu0 0.0
  %377 = vmatprep.subr.mxu0 0.0
  %378 = vmatpush2.msra.mxu0 0.0
  %379 = vmatprep.subr.mxu0 0.0
  %380 = vmatpush2.msra.mxu0 0.0
  %381 = vmatprep.subr.mxu0 0.0
  %382 = vmatpush2.msra.mxu0 0.0
  %383 = vmatprep.subr.mxu0 0.0
  %384 = vmatpush2.msra.mxu0 0.0
  %385 = vmatprep.subr.mxu0 0.0
  %386 = vmatpush2.msra.mxu0 0.0
  %387 = vmatprep.subr.mxu0 0.0
  %388 = vmatpush2.msra.mxu0 0.0
  %389 = vmatprep.subr.mxu0 0.0
  %390 = vmatpush2.msra.mxu0 0.0
  %391 = vmatprep.subr.mxu0 0.0
  %392 = vmatpush2.msra.mxu0 0.0
  %393 = vmatprep.subr.mxu0 0.0
  %394 = vmatpush2.msra.mxu0 0.0
  %395 = vmatprep.subr.mxu0 0.0
  %396 = vmatpush2.msra.mxu0 0.0
  %397 = vmatprep.subr.mxu0 0.0
  %398 = vmatpush2.msra.mxu0 0.0
  %399 = vmatprep.subr.mxu0 0.0
  %400 = vmatpush2.msra.mxu0 0.0
  %401 = vmatprep.subr.mxu0 0.0
  %402 = vmatpush2.msra.mxu0 0.0
  %403 = vmatprep.subr.mxu0 0.0
  %404 = vmatpush2.msra.mxu0 0.0
  %405 = vmatprep.mubr.bf16.mxu0 0
  %406 = vmatmul.mubr.bf16.gmra.mxu0 %v339
  %v407 = vpop.f32.mrf.mxu0
  %v408 = vadd.f32 0.0, %v407
  %v409 = vpop.f32.mrf.mxu0
  %v410 = vadd.f32 0.0, %v409
  %v411 = vpop.f32.mrf.mxu0
  %v412 = vpop.f32.mrf.mxu0
  %413 = vdwg.mxu0
  %v414 = vsel %vm116, %v408, %v410
  %s415 = scalar_lea.vmem %s1, 4
  %v416 = vld [vmem:[%s415] sm:$0x3]
  %v417 = vunpack.c.l.bf16 %v416
  %v418 = vadd.f32 %v417, %v414
  %v419 = vxor.u32 %v418, 2147483648
  %v420 = vmul.f32 %v419, 1.442695
  %v421 = vpow.pop %v420
  %v422 = vadd.f32 %v421, 1.0
  %v423 = vrcp.pop %v422
  %v424 = vmul.f32 1.0, %v423
  %v425 = vtanh.pop %v418
  %427 = vrot.lane.b32.xlu0 %v325, 32
  %v428 = vpop.permute.xlu0 %427
  %v430 = vmul.f32 %v424, %v428
  %432 = vrot.lane.b32.xlu0 %v425, 32
  %v433 = vpop.permute.xlu0 %432
  %v435 = vmul.f32 %v424, %v433
  %437 = vrot.lane.b32.xlu0 %v435, 32
  %v438 = vpop.permute.xlu0 %437
  %v440 = vadd.f32 %v430, %v438
  %v441 = vtanh.pop %v440
  %443 = vrot.lane.b32.xlu0 %v441, 32
  %v444 = vpop.permute.xlu0 %443
  %v446 = vmul.f32 %v424, %v444
  %v447 = vstv %s336
  %vm448 = vcmp.ge.s32.totalorder %v447, %v22
  %vm449 = vcmp.lt.s32.totalorder %v447, %v22
  %v450 = vsel %vm449, 1, 0
  %451 = vrot.lane.b32.xlu0 %v450, 127
  %v452 = vpop.permute.xlu0 %451
  %vm453 = vcmp.ne.s32.totalorder %v452, 0
  %vm454 = vmand %vm448, %vm453
  %v455 = vsel %vm454, 1, 0
  %v456 = vcvt.s32.f32 %v455
  %458 = vset.pattern.permute.xlu0 0
  %459 = vperm.xlu0 %458, %v456
  %v460 = vpop.permute.xlu0 %459
  %463 = vrot.lane.b32.xlu0 %v440, 96
  %v464 = vpop.permute.xlu0 %463
  %v466 = vmul.f32 %v460, %v464
  %v467 = vsub.f32 1.0, %v456
  %469 = vset.pattern.permute.xlu0 0
  %470 = vperm.xlu0 %469, %v467
  %v471 = vpop.permute.xlu0 %470
  %v473 = vmul.f32 %v471, %v325
  %v474 = vadd.f32 %v466, %v473
  %476 = vrot.lane.b32.xlu0 %v446, 64
  %v477 = vpop.permute.xlu0 %476
  %v479 = vmul.f32 %v460, %v477
  %v480 = vmul.f32 %v471, %v332
  %v481 = vadd.f32 %v479, %v480
  %v482 = vmul.f32 %v481, %v460
  %s483 = scalar_lea.vmem %s3, 8
  %484 = vst.msk [vmem:[%s483] sm:$0xf] %vm185, %v482
  %s485 = sadd.s32 %s36, 3
  %v486 = vpack.c.bf16 %v481, %v481
  %v488 = vsel %vm38, %v486, 0
  %490 = vmatprep.subr.mxu0 0.0
  %491 = vmatpush1.msra.mxu0 0.0
  %492 = vmatprep.subr.mxu0 0.0
  %493 = vmatpush1.msra.mxu0 0.0
  %494 = vmatprep.subr.mxu0 0.0
  %495 = vmatpush1.msra.mxu0 0.0
  %496 = vmatprep.subr.mxu0 0.0
  %497 = vmatpush1.msra.mxu0 0.0
  %498 = vmatprep.subr.mxu0 0.0
  %499 = vmatpush1.msra.mxu0 0.0
  %500 = vmatprep.subr.mxu0 0.0
  %501 = vmatpush1.msra.mxu0 0.0
  %502 = vmatprep.subr.mxu0 0.0
  %503 = vmatpush1.msra.mxu0 0.0
  %504 = vmatprep.subr.mxu0 0.0
  %505 = vmatpush1.msra.mxu0 0.0
  %506 = vmatprep.subr.mxu0 0.0
  %507 = vmatpush1.msra.mxu0 0.0
  %508 = vmatprep.subr.mxu0 0.0
  %509 = vmatpush1.msra.mxu0 0.0
  %510 = vmatprep.subr.mxu0 0.0
  %511 = vmatpush1.msra.mxu0 0.0
  %512 = vmatprep.subr.mxu0 0.0
  %513 = vmatpush1.msra.mxu0 0.0
  %514 = vmatprep.subr.mxu0 %v30
  %515 = vmatpush1.msra.mxu0 %v29
  %516 = vmatprep.subr.mxu0 %v28
  %517 = vmatpush1.msra.mxu0 %v27
  %518 = vmatprep.subr.mxu0 %v26
  %519 = vmatpush1.msra.mxu0 %v25
  %520 = vmatprep.subr.mxu0 %v24
  %521 = vmatpush1.msra.mxu0 %v23
  %522 = vmatprep.subr.mxu0 0.0
  %523 = vmatpush2.msra.mxu0 0.0
  %524 = vmatprep.subr.mxu0 0.0
  %525 = vmatpush2.msra.mxu0 0.0
  %526 = vmatprep.subr.mxu0 0.0
  %527 = vmatpush2.msra.mxu0 0.0
  %528 = vmatprep.subr.mxu0 0.0
  %529 = vmatpush2.msra.mxu0 0.0
  %530 = vmatprep.subr.mxu0 0.0
  %531 = vmatpush2.msra.mxu0 0.0
  %532 = vmatprep.subr.mxu0 0.0
  %533 = vmatpush2.msra.mxu0 0.0
  %534 = vmatprep.subr.mxu0 0.0
  %535 = vmatpush2.msra.mxu0 0.0
  %536 = vmatprep.subr.mxu0 0.0
  %537 = vmatpush2.msra.mxu0 0.0
  %538 = vmatprep.subr.mxu0 0.0
  %539 = vmatpush2.msra.mxu0 0.0
  %540 = vmatprep.subr.mxu0 0.0
  %541 = vmatpush2.msra.mxu0 0.0
  %542 = vmatprep.subr.mxu0 0.0
  %543 = vmatpush2.msra.mxu0 0.0
  %544 = vmatprep.subr.mxu0 0.0
  %545 = vmatpush2.msra.mxu0 0.0
  %546 = vmatprep.subr.mxu0 0.0
  %547 = vmatpush2.msra.mxu0 0.0
  %548 = vmatprep.subr.mxu0 0.0
  %549 = vmatpush2.msra.mxu0 0.0
  %550 = vmatprep.subr.mxu0 0.0
  %551 = vmatpush2.msra.mxu0 0.0
  %552 = vmatprep.subr.mxu0 0.0
  %553 = vmatpush2.msra.mxu0 0.0
  %554 = vmatprep.mubr.bf16.mxu0 0
  %555 = vmatmul.mubr.bf16.gmra.mxu0 %v488
  %v556 = vpop.f32.mrf.mxu0
  %v557 = vadd.f32 0.0, %v556
  %v558 = vpop.f32.mrf.mxu0
  %v559 = vadd.f32 0.0, %v558
  %v560 = vpop.f32.mrf.mxu0
  %v561 = vpop.f32.mrf.mxu0
  %562 = vdwg.mxu0
  %v563 = vsel %vm116, %v557, %v559
  %s564 = scalar_lea.vmem %s1, 6
  %v565 = vld [vmem:[%s564] sm:$0x3]
  %v566 = vunpack.c.l.bf16 %v565
  %v567 = vadd.f32 %v566, %v563
  %v568 = vxor.u32 %v567, 2147483648
  %v569 = vmul.f32 %v568, 1.442695
  %v570 = vpow.pop %v569
  %v571 = vadd.f32 %v570, 1.0
  %v572 = vrcp.pop %v571
  %v573 = vmul.f32 1.0, %v572
  %v574 = vtanh.pop %v567
  %576 = vrot.lane.b32.xlu0 %v474, 32
  %v577 = vpop.permute.xlu0 %576
  %v579 = vmul.f32 %v573, %v577
  %581 = vrot.lane.b32.xlu0 %v574, 32
  %v582 = vpop.permute.xlu0 %581
  %v584 = vmul.f32 %v573, %v582
  %586 = vrot.lane.b32.xlu0 %v584, 32
  %v587 = vpop.permute.xlu0 %586
  %v589 = vadd.f32 %v579, %v587
  %v590 = vtanh.pop %v589
  %592 = vrot.lane.b32.xlu0 %v590, 32
  %v593 = vpop.permute.xlu0 %592
  %v595 = vmul.f32 %v573, %v593
  %v596 = vstv %s485
  %vm597 = vcmp.ge.s32.totalorder %v596, %v22
  %vm598 = vcmp.lt.s32.totalorder %v596, %v22
  %v599 = vsel %vm598, 1, 0
  %600 = vrot.lane.b32.xlu0 %v599, 127
  %v601 = vpop.permute.xlu0 %600
  %vm602 = vcmp.ne.s32.totalorder %v601, 0
  %vm603 = vmand %vm597, %vm602
  %v604 = vsel %vm603, 1, 0
  %v605 = vcvt.s32.f32 %v604
  %607 = vset.pattern.permute.xlu0 0
  %608 = vperm.xlu0 %607, %v605
  %v609 = vpop.permute.xlu0 %608
  %612 = vrot.lane.b32.xlu0 %v589, 96
  %v613 = vpop.permute.xlu0 %612
  %v615 = vmul.f32 %v609, %v613
  %v616 = vsub.f32 1.0, %v605
  %618 = vset.pattern.permute.xlu0 0
  %619 = vperm.xlu0 %618, %v616
  %v620 = vpop.permute.xlu0 %619
  %v622 = vmul.f32 %v620, %v474
  %v623 = vadd.f32 %v615, %v622
  %625 = vrot.lane.b32.xlu0 %v595, 64
  %v626 = vpop.permute.xlu0 %625
  %v628 = vmul.f32 %v609, %v626
  %v629 = vmul.f32 %v620, %v481
  %v630 = vadd.f32 %v628, %v629
  %v631 = vmul.f32 %v630, %v609
  %s632 = scalar_lea.vmem %s3, 12
  %633 = vst.msk [vmem:[%s632] sm:$0xf] %vm185, %v631
  %s634 = sadd.s32 %s36, 4
  %v635 = vpack.c.bf16 %v630, %v630
  %v637 = vsel %vm38, %v635, 0
  %639 = vmatprep.subr.mxu0 0.0
  %640 = vmatpush1.msra.mxu0 0.0
  %641 = vmatprep.subr.mxu0 0.0
  %642 = vmatpush1.msra.mxu0 0.0
  %643 = vmatprep.subr.mxu0 0.0
  %644 = vmatpush1.msra.mxu0 0.0
  %645 = vmatprep.subr.mxu0 0.0
  %646 = vmatpush1.msra.mxu0 0.0
  %647 = vmatprep.subr.mxu0 0.0
  %648 = vmatpush1.msra.mxu0 0.0
  %649 = vmatprep.subr.mxu0 0.0
  %650 = vmatpush1.msra.mxu0 0.0
  %651 = vmatprep.subr.mxu0 0.0
  %652 = vmatpush1.msra.mxu0 0.0
  %653 = vmatprep.subr.mxu0 0.0
  %654 = vmatpush1.msra.mxu0 0.0
  %655 = vmatprep.subr.mxu0 0.0
  %656 = vmatpush1.msra.mxu0 0.0
  %657 = vmatprep.subr.mxu0 0.0
  %658 = vmatpush1.msra.mxu0 0.0
  %659 = vmatprep.subr.mxu0 0.0
  %660 = vmatpush1.msra.mxu0 0.0
  %661 = vmatprep.subr.mxu0 0.0
  %662 = vmatpush1.msra.mxu0 0.0
  %663 = vmatprep.subr.mxu0 %v30
  %664 = vmatpush1.msra.mxu0 %v29
  %665 = vmatprep.subr.mxu0 %v28
  %666 = vmatpush1.msra.mxu0 %v27
  %667 = vmatprep.subr.mxu0 %v26
  %668 = vmatpush1.msra.mxu0 %v25
  %669 = vmatprep.subr.mxu0 %v24
  %670 = vmatpush1.msra.mxu0 %v23
  %671 = vmatprep.subr.mxu0 0.0
  %672 = vmatpush2.msra.mxu0 0.0
  %673 = vmatprep.subr.mxu0 0.0
  %674 = vmatpush2.msra.mxu0 0.0
  %675 = vmatprep.subr.mxu0 0.0
  %676 = vmatpush2.msra.mxu0 0.0
  %677 = vmatprep.subr.mxu0 0.0
  %678 = vmatpush2.msra.mxu0 0.0
  %679 = vmatprep.subr.mxu0 0.0
  %680 = vmatpush2.msra.mxu0 0.0
  %681 = vmatprep.subr.mxu0 0.0
  %682 = vmatpush2.msra.mxu0 0.0
  %683 = vmatprep.subr.mxu0 0.0
  %684 = vmatpush2.msra.mxu0 0.0
  %685 = vmatprep.subr.mxu0 0.0
  %686 = vmatpush2.msra.mxu0 0.0
  %687 = vmatprep.subr.mxu0 0.0
  %688 = vmatpush2.msra.mxu0 0.0
  %689 = vmatprep.subr.mxu0 0.0
  %690 = vmatpush2.msra.mxu0 0.0
  %691 = vmatprep.subr.mxu0 0.0
  %692 = vmatpush2.msra.mxu0 0.0
  %693 = vmatprep.subr.mxu0 0.0
  %694 = vmatpush2.msra.mxu0 0.0
  %695 = vmatprep.subr.mxu0 0.0
  %696 = vmatpush2.msra.mxu0 0.0
  %697 = vmatprep.subr.mxu0 0.0
  %698 = vmatpush2.msra.mxu0 0.0
  %699 = vmatprep.subr.mxu0 0.0
  %700 = vmatpush2.msra.mxu0 0.0
  %701 = vmatprep.subr.mxu0 0.0
  %702 = vmatpush2.msra.mxu0 0.0
  %703 = vmatprep.mubr.bf16.mxu0 0
  %704 = vmatmul.mubr.bf16.gmra.mxu0 %v637
  %v705 = vpop.f32.mrf.mxu0
  %v706 = vadd.f32 0.0, %v705
  %v707 = vpop.f32.mrf.mxu0
  %v708 = vadd.f32 0.0, %v707
  %v709 = vpop.f32.mrf.mxu0
  %v710 = vpop.f32.mrf.mxu0
  %711 = vdwg.mxu0
  %v712 = vsel %vm116, %v706, %v708
  %s713 = scalar_lea.vmem %s1, 8
  %v714 = vld [vmem:[%s713] sm:$0x3]
  %v715 = vunpack.c.l.bf16 %v714
  %v716 = vadd.f32 %v715, %v712
  %v717 = vxor.u32 %v716, 2147483648
  %v718 = vmul.f32 %v717, 1.442695
  %v719 = vpow.pop %v718
  %v720 = vadd.f32 %v719, 1.0
  %v721 = vrcp.pop %v720
  %v722 = vmul.f32 1.0, %v721
  %v723 = vtanh.pop %v716
  %725 = vrot.lane.b32.xlu0 %v623, 32
  %v726 = vpop.permute.xlu0 %725
  %v728 = vmul.f32 %v722, %v726
  %730 = vrot.lane.b32.xlu0 %v723, 32
  %v731 = vpop.permute.xlu0 %730
  %v733 = vmul.f32 %v722, %v731
  %735 = vrot.lane.b32.xlu0 %v733, 32
  %v736 = vpop.permute.xlu0 %735
  %v738 = vadd.f32 %v728, %v736
  %v739 = vtanh.pop %v738
  %741 = vrot.lane.b32.xlu0 %v739, 32
  %v742 = vpop.permute.xlu0 %741
  %v744 = vmul.f32 %v722, %v742
  %v745 = vstv %s634
  %vm746 = vcmp.ge.s32.totalorder %v745, %v22
  %vm747 = vcmp.lt.s32.totalorder %v745, %v22
  %v748 = vsel %vm747, 1, 0
  %749 = vrot.lane.b32.xlu0 %v748, 127
  %v750 = vpop.permute.xlu0 %749
  %vm751 = vcmp.ne.s32.totalorder %v750, 0
  %vm752 = vmand %vm746, %vm751
  %v753 = vsel %vm752, 1, 0
  %v754 = vcvt.s32.f32 %v753
  %756 = vset.pattern.permute.xlu0 0
  %757 = vperm.xlu0 %756, %v754
  %v758 = vpop.permute.xlu0 %757
  %761 = vrot.lane.b32.xlu0 %v738, 96
  %v762 = vpop.permute.xlu0 %761
  %v764 = vmul.f32 %v758, %v762
  %v765 = vsub.f32 1.0, %v754
  %767 = vset.pattern.permute.xlu0 0
  %768 = vperm.xlu0 %767, %v765
  %v769 = vpop.permute.xlu0 %768
  %v771 = vmul.f32 %v769, %v623
  %v772 = vadd.f32 %v764, %v771
  %774 = vrot.lane.b32.xlu0 %v744, 64
  %v775 = vpop.permute.xlu0 %774
  %v777 = vmul.f32 %v758, %v775
  %v778 = vmul.f32 %v769, %v630
  %v779 = vadd.f32 %v777, %v778
  %v780 = vmul.f32 %v779, %v758
  %s781 = scalar_lea.vmem %s3, 16
  %782 = vst.msk [vmem:[%s781] sm:$0xf] %vm185, %v780
  %s783 = sadd.s32 %s36, 5
  %v784 = vpack.c.bf16 %v779, %v779
  %v786 = vsel %vm38, %v784, 0
  %788 = vmatprep.subr.mxu0 0.0
  %789 = vmatpush1.msra.mxu0 0.0
  %790 = vmatprep.subr.mxu0 0.0
  %791 = vmatpush1.msra.mxu0 0.0
  %792 = vmatprep.subr.mxu0 0.0
  %793 = vmatpush1.msra.mxu0 0.0
  %794 = vmatprep.subr.mxu0 0.0
  %795 = vmatpush1.msra.mxu0 0.0
  %796 = vmatprep.subr.mxu0 0.0
  %797 = vmatpush1.msra.mxu0 0.0
  %798 = vmatprep.subr.mxu0 0.0
  %799 = vmatpush1.msra.mxu0 0.0
  %800 = vmatprep.subr.mxu0 0.0
  %801 = vmatpush1.msra.mxu0 0.0
  %802 = vmatprep.subr.mxu0 0.0
  %803 = vmatpush1.msra.mxu0 0.0
  %804 = vmatprep.subr.mxu0 0.0
  %805 = vmatpush1.msra.mxu0 0.0
  %806 = vmatprep.subr.mxu0 0.0
  %807 = vmatpush1.msra.mxu0 0.0
  %808 = vmatprep.subr.mxu0 0.0
  %809 = vmatpush1.msra.mxu0 0.0
  %810 = vmatprep.subr.mxu0 0.0
  %811 = vmatpush1.msra.mxu0 0.0
  %812 = vmatprep.subr.mxu0 %v30
  %813 = vmatpush1.msra.mxu0 %v29
  %814 = vmatprep.subr.mxu0 %v28
  %815 = vmatpush1.msra.mxu0 %v27
  %816 = vmatprep.subr.mxu0 %v26
  %817 = vmatpush1.msra.mxu0 %v25
  %818 = vmatprep.subr.mxu0 %v24
  %819 = vmatpush1.msra.mxu0 %v23
  %820 = vmatprep.subr.mxu0 0.0
  %821 = vmatpush2.msra.mxu0 0.0
  %822 = vmatprep.subr.mxu0 0.0
  %823 = vmatpush2.msra.mxu0 0.0
  %824 = vmatprep.subr.mxu0 0.0
  %825 = vmatpush2.msra.mxu0 0.0
  %826 = vmatprep.subr.mxu0 0.0
  %827 = vmatpush2.msra.mxu0 0.0
  %828 = vmatprep.subr.mxu0 0.0
  %829 = vmatpush2.msra.mxu0 0.0
  %830 = vmatprep.subr.mxu0 0.0
  %831 = vmatpush2.msra.mxu0 0.0
  %832 = vmatprep.subr.mxu0 0.0
  %833 = vmatpush2.msra.mxu0 0.0
  %834 = vmatprep.subr.mxu0 0.0
  %835 = vmatpush2.msra.mxu0 0.0
  %836 = vmatprep.subr.mxu0 0.0
  %837 = vmatpush2.msra.mxu0 0.0
  %838 = vmatprep.subr.mxu0 0.0
  %839 = vmatpush2.msra.mxu0 0.0
  %840 = vmatprep.subr.mxu0 0.0
  %841 = vmatpush2.msra.mxu0 0.0
  %842 = vmatprep.subr.mxu0 0.0
  %843 = vmatpush2.msra.mxu0 0.0
  %844 = vmatprep.subr.mxu0 0.0
  %845 = vmatpush2.msra.mxu0 0.0
  %846 = vmatprep.subr.mxu0 0.0
  %847 = vmatpush2.msra.mxu0 0.0
  %848 = vmatprep.subr.mxu0 0.0
  %849 = vmatpush2.msra.mxu0 0.0
  %850 = vmatprep.subr.mxu0 0.0
  %851 = vmatpush2.msra.mxu0 0.0
  %852 = vmatprep.mubr.bf16.mxu0 0
  %853 = vmatmul.mubr.bf16.gmra.mxu0 %v786
  %v854 = vpop.f32.mrf.mxu0
  %v855 = vadd.f32 0.0, %v854
  %v856 = vpop.f32.mrf.mxu0
  %v857 = vadd.f32 0.0, %v856
  %v858 = vpop.f32.mrf.mxu0
  %v859 = vpop.f32.mrf.mxu0
  %860 = vdwg.mxu0
  %v861 = vsel %vm116, %v855, %v857
  %s862 = scalar_lea.vmem %s1, 10
  %v863 = vld [vmem:[%s862] sm:$0x3]
  %v864 = vunpack.c.l.bf16 %v863
  %v865 = vadd.f32 %v864, %v861
  %v866 = vxor.u32 %v865, 2147483648
  %v867 = vmul.f32 %v866, 1.442695
  %v868 = vpow.pop %v867
  %v869 = vadd.f32 %v868, 1.0
  %v870 = vrcp.pop %v869
  %v871 = vmul.f32 1.0, %v870
  %v872 = vtanh.pop %v865
  %874 = vrot.lane.b32.xlu0 %v772, 32
  %v875 = vpop.permute.xlu0 %874
  %v877 = vmul.f32 %v871, %v875
  %879 = vrot.lane.b32.xlu0 %v872, 32
  %v880 = vpop.permute.xlu0 %879
  %v882 = vmul.f32 %v871, %v880
  %884 = vrot.lane.b32.xlu0 %v882, 32
  %v885 = vpop.permute.xlu0 %884
  %v887 = vadd.f32 %v877, %v885
  %v888 = vtanh.pop %v887
  %890 = vrot.lane.b32.xlu0 %v888, 32
  %v891 = vpop.permute.xlu0 %890
  %v893 = vmul.f32 %v871, %v891
  %v894 = vstv %s783
  %vm895 = vcmp.ge.s32.totalorder %v894, %v22
  %vm896 = vcmp.lt.s32.totalorder %v894, %v22
  %v897 = vsel %vm896, 1, 0
  %898 = vrot.lane.b32.xlu0 %v897, 127
  %v899 = vpop.permute.xlu0 %898
  %vm900 = vcmp.ne.s32.totalorder %v899, 0
  %vm901 = vmand %vm895, %vm900
  %v902 = vsel %vm901, 1, 0
  %v903 = vcvt.s32.f32 %v902
  %905 = vset.pattern.permute.xlu0 0
  %906 = vperm.xlu0 %905, %v903
  %v907 = vpop.permute.xlu0 %906
  %910 = vrot.lane.b32.xlu0 %v887, 96
  %v911 = vpop.permute.xlu0 %910
  %v913 = vmul.f32 %v907, %v911
  %v914 = vsub.f32 1.0, %v903
  %916 = vset.pattern.permute.xlu0 0
  %917 = vperm.xlu0 %916, %v914
  %v918 = vpop.permute.xlu0 %917
  %v920 = vmul.f32 %v918, %v772
  %v921 = vadd.f32 %v913, %v920
  %923 = vrot.lane.b32.xlu0 %v893, 64
  %v924 = vpop.permute.xlu0 %923
  %v926 = vmul.f32 %v907, %v924
  %v927 = vmul.f32 %v918, %v779
  %v928 = vadd.f32 %v926, %v927
  %v929 = vmul.f32 %v928, %v907
  %s930 = scalar_lea.vmem %s3, 20
  %931 = vst.msk [vmem:[%s930] sm:$0xf] %vm185, %v929
  %s932 = sadd.s32 %s36, 6
  %v933 = vpack.c.bf16 %v928, %v928
  %v935 = vsel %vm38, %v933, 0
  %937 = vmatprep.subr.mxu0 0.0
  %938 = vmatpush1.msra.mxu0 0.0
  %939 = vmatprep.subr.mxu0 0.0
  %940 = vmatpush1.msra.mxu0 0.0
  %941 = vmatprep.subr.mxu0 0.0
  %942 = vmatpush1.msra.mxu0 0.0
  %943 = vmatprep.subr.mxu0 0.0
  %944 = vmatpush1.msra.mxu0 0.0
  %945 = vmatprep.subr.mxu0 0.0
  %946 = vmatpush1.msra.mxu0 0.0
  %947 = vmatprep.subr.mxu0 0.0
  %948 = vmatpush1.msra.mxu0 0.0
  %949 = vmatprep.subr.mxu0 0.0
  %950 = vmatpush1.msra.mxu0 0.0
  %951 = vmatprep.subr.mxu0 0.0
  %952 = vmatpush1.msra.mxu0 0.0
  %953 = vmatprep.subr.mxu0 0.0
  %954 = vmatpush1.msra.mxu0 0.0
  %955 = vmatprep.subr.mxu0 0.0
  %956 = vmatpush1.msra.mxu0 0.0
  %957 = vmatprep.subr.mxu0 0.0
  %958 = vmatpush1.msra.mxu0 0.0
  %959 = vmatprep.subr.mxu0 0.0
  %960 = vmatpush1.msra.mxu0 0.0
  %961 = vmatprep.subr.mxu0 %v30
  %962 = vmatpush1.msra.mxu0 %v29
  %963 = vmatprep.subr.mxu0 %v28
  %964 = vmatpush1.msra.mxu0 %v27
  %965 = vmatprep.subr.mxu0 %v26
  %966 = vmatpush1.msra.mxu0 %v25
  %967 = vmatprep.subr.mxu0 %v24
  %968 = vmatpush1.msra.mxu0 %v23
  %969 = vmatprep.subr.mxu0 0.0
  %970 = vmatpush2.msra.mxu0 0.0
  %971 = vmatprep.subr.mxu0 0.0
  %972 = vmatpush2.msra.mxu0 0.0
  %973 = vmatprep.subr.mxu0 0.0
  %974 = vmatpush2.msra.mxu0 0.0
  %975 = vmatprep.subr.mxu0 0.0
  %976 = vmatpush2.msra.mxu0 0.0
  %977 = vmatprep.subr.mxu0 0.0
  %978 = vmatpush2.msra.mxu0 0.0
  %979 = vmatprep.subr.mxu0 0.0
  %980 = vmatpush2.msra.mxu0 0.0
  %981 = vmatprep.subr.mxu0 0.0
  %982 = vmatpush2.msra.mxu0 0.0
  %983 = vmatprep.subr.mxu0 0.0
  %984 = vmatpush2.msra.mxu0 0.0
  %985 = vmatprep.subr.mxu0 0.0
  %986 = vmatpush2.msra.mxu0 0.0
  %987 = vmatprep.subr.mxu0 0.0
  %988 = vmatpush2.msra.mxu0 0.0
  %989 = vmatprep.subr.mxu0 0.0
  %990 = vmatpush2.msra.mxu0 0.0
  %991 = vmatprep.subr.mxu0 0.0
  %992 = vmatpush2.msra.mxu0 0.0
  %993 = vmatprep.subr.mxu0 0.0
  %994 = vmatpush2.msra.mxu0 0.0
  %995 = vmatprep.subr.mxu0 0.0
  %996 = vmatpush2.msra.mxu0 0.0
  %997 = vmatprep.subr.mxu0 0.0
  %998 = vmatpush2.msra.mxu0 0.0
  %999 = vmatprep.subr.mxu0 0.0
  %1000 = vmatpush2.msra.mxu0 0.0
  %1001 = vmatprep.mubr.bf16.mxu0 0
  %1002 = vmatmul.mubr.bf16.gmra.mxu0 %v935
  %v1003 = vpop.f32.mrf.mxu0
  %v1004 = vadd.f32 0.0, %v1003
  %v1005 = vpop.f32.mrf.mxu0
  %v1006 = vadd.f32 0.0, %v1005
  %v1007 = vpop.f32.mrf.mxu0
  %v1008 = vpop.f32.mrf.mxu0
  %1009 = vdwg.mxu0
  %v1010 = vsel %vm116, %v1004, %v1006
  %s1011 = scalar_lea.vmem %s1, 12
  %v1012 = vld [vmem:[%s1011] sm:$0x3]
  %v1013 = vunpack.c.l.bf16 %v1012
  %v1014 = vadd.f32 %v1013, %v1010
  %v1015 = vxor.u32 %v1014, 2147483648
  %v1016 = vmul.f32 %v1015, 1.442695
  %v1017 = vpow.pop %v1016
  %v1018 = vadd.f32 %v1017, 1.0
  %v1019 = vrcp.pop %v1018
  %v1020 = vmul.f32 1.0, %v1019
  %v1021 = vtanh.pop %v1014
  %1023 = vrot.lane.b32.xlu0 %v921, 32
  %v1024 = vpop.permute.xlu0 %1023
  %v1026 = vmul.f32 %v1020, %v1024
  %1028 = vrot.lane.b32.xlu0 %v1021, 32
  %v1029 = vpop.permute.xlu0 %1028
  %v1031 = vmul.f32 %v1020, %v1029
  %1033 = vrot.lane.b32.xlu0 %v1031, 32
  %v1034 = vpop.permute.xlu0 %1033
  %v1036 = vadd.f32 %v1026, %v1034
  %v1037 = vtanh.pop %v1036
  %1039 = vrot.lane.b32.xlu0 %v1037, 32
  %v1040 = vpop.permute.xlu0 %1039
  %v1042 = vmul.f32 %v1020, %v1040
  %v1043 = vstv %s932
  %vm1044 = vcmp.ge.s32.totalorder %v1043, %v22
  %vm1045 = vcmp.lt.s32.totalorder %v1043, %v22
  %v1046 = vsel %vm1045, 1, 0
  %1047 = vrot.lane.b32.xlu0 %v1046, 127
  %v1048 = vpop.permute.xlu0 %1047
  %vm1049 = vcmp.ne.s32.totalorder %v1048, 0
  %vm1050 = vmand %vm1044, %vm1049
  %v1051 = vsel %vm1050, 1, 0
  %v1052 = vcvt.s32.f32 %v1051
  %1054 = vset.pattern.permute.xlu0 0
  %1055 = vperm.xlu0 %1054, %v1052
  %v1056 = vpop.permute.xlu0 %1055
  %1059 = vrot.lane.b32.xlu0 %v1036, 96
  %v1060 = vpop.permute.xlu0 %1059
  %v1062 = vmul.f32 %v1056, %v1060
  %v1063 = vsub.f32 1.0, %v1052
  %1065 = vset.pattern.permute.xlu0 0
  %1066 = vperm.xlu0 %1065, %v1063
  %v1067 = vpop.permute.xlu0 %1066
  %v1069 = vmul.f32 %v1067, %v921
  %v1070 = vadd.f32 %v1062, %v1069
  %1072 = vrot.lane.b32.xlu0 %v1042, 64
  %v1073 = vpop.permute.xlu0 %1072
  %v1075 = vmul.f32 %v1056, %v1073
  %v1076 = vmul.f32 %v1067, %v928
  %v1077 = vadd.f32 %v1075, %v1076
  %v1078 = vmul.f32 %v1077, %v1056
  %s1079 = scalar_lea.vmem %s3, 24
  %1080 = vst.msk [vmem:[%s1079] sm:$0xf] %vm185, %v1078
  %1081 = vst.msk [vmem:[#allocation2] sm:$0xf] %vm185, %v1077
  %1082 = vst.msk [vmem:[#allocation3] sm:$0xf] %vm185, %v1070
  // Predicated region
  $region18: #{a_base_forward.12} parent=0 // pred_check
    _
  $region19: #{a_base_forward.12} parent=0 // pred_check_branch
    %1084 = sbr.rel (0) target = $region21
  $region20: #{a_base_forward.12} parent=0 // pred_region
    _
  $region21: #{a_base_forward.12} parent=0 // pred_fallthru
    _
  // Predicated region
  $region22: #{a_base_forward.12} parent=0 // pred_check
    _
  $region23: #{a_base_forward.12} parent=0 // pred_check_branch
    %1086 = sbr.rel (0) target = $region25
  $region24: #{a_base_forward.12} parent=0 // pred_region
    _
  $region25: #{a_base_forward.12} parent=0 // pred_fallthru
    _

// kernel: a_base_forward.13
$region0: #{a_base_forward.13}
  #allocation0 [shape = 'u32[]', space=smem, size = 0x4, offset = 0x4, fixed_abs, tag = 'smem constant byte address 0x4 - core index']
  #allocation1 [shape = 'u32[144,128]{1,0:T(1,128)}', space=vmem, size = 0x12000, scoped, tag = 'internal scratch']
  %s0 = inlined_call_operand.vmem [shape: bf16[16,64], index: 0, kind: input, shape index: {}]
  %s1 = inlined_call_operand.vmem [shape: bf16[64,256], index: 1, kind: input, shape index: {}]
  %s2 = inlined_call_operand.vmem [shape: f32[1,256], index: 2, kind: input, shape index: {}]
  %s3 = inlined_call_operand.vmem [shape: bf16[16,256], index: 3, kind: output, shape index: {}]
  %s4 = sld [smem:[#allocation0]]
  $region22: #{a_base_forward.13} parent=0
    _
  %s6 = ssub.s32 1, %s4
  %s7 = scalar_select 0, %s6, %s4
  // Predicated region
  $region2: #{a_base_forward.13} parent=0 // pred_check
    _
  $region3: #{a_base_forward.13} parent=0 // pred_check_branch
    %9 = sbr.rel (0) target = $region5
  $region4: #{a_base_forward.13} parent=0 // pred_region
    _
  $region5: #{a_base_forward.13} parent=0 // pred_fallthru
    _
  // Predicated region
  $region6: #{a_base_forward.13} parent=0 // pred_check
    _
  $region7: #{a_base_forward.13} parent=0 // pred_check_branch
    %11 = sbr.rel (0) target = $region9
  $region8: #{a_base_forward.13} parent=0 // pred_region
    _
  $region9: #{a_base_forward.13} parent=0 // pred_fallthru
    _
  // Predicated region
  $region10: #{a_base_forward.13} parent=0 // pred_check
    _
  $region11: #{a_base_forward.13} parent=0 // pred_check_branch
    %13 = sbr.rel (0) target = $region13
  $region12: #{a_base_forward.13} parent=0 // pred_region
    _
  $region13: #{a_base_forward.13} parent=0 // pred_fallthru
    _
  %v15 = vld [vmem:[%s0] sm:$0xf]
  %v16 = vld [vmem:[%s0 + $0x4] sm:$0xf]
  %v17 = vld [vmem:[%s1] sm:$0xff]
  %v18 = vld [vmem:[%s1 + $0x8] sm:$0xff]
  %v19 = vld [vmem:[%s1 + $0x10] sm:$0xff]
  %v20 = vld [vmem:[%s1 + $0x18] sm:$0xff]
  %v21 = vld [vmem:[%s1 + $0x20] sm:$0xff]
  %v22 = vld [vmem:[%s1 + $0x28] sm:$0xff]
  %v23 = vld [vmem:[%s1 + $0x30] sm:$0xff]
  %v24 = vld [vmem:[%s1 + $0x38] sm:$0xff]
  %v25 = vld [vmem:[%s2] sm:$0x3]
  %v27 = vlaneseq
  %v28 = vshrl.u32 %v27, 7
  %v29 = vsub.s32 0, %v28
  %v30 = vrot.slane %v25, %v29
  %v31 = vlaneseq
  %v32 = vshrl.u32 %v31, 7
  %v33 = vsub.s32 1, %v32
  %v34 = vrot.slane %v25, %v33
  %v39 = vunpack.c.l.b16 %v15
  %v40 = vunpack.c.l.b16 %v16
  %v41 = vpack.c.b16 %v40, %v39
  %v50 = vunpack.c.l.b16 %v17
  %v51 = vunpack.c.h.b16 %v17
  %v52 = vunpack.c.l.b16 %v18
  %v53 = vunpack.c.h.b16 %v18
  %v54 = vunpack.c.l.b16 %v19
  %v55 = vunpack.c.h.b16 %v19
  %v56 = vunpack.c.l.b16 %v20
  %v57 = vunpack.c.h.b16 %v20
  %v58 = vunpack.c.l.b16 %v21
  %v59 = vunpack.c.h.b16 %v21
  %v60 = vunpack.c.l.b16 %v22
  %v61 = vunpack.c.h.b16 %v22
  %v62 = vunpack.c.l.b16 %v23
  %v63 = vunpack.c.h.b16 %v23
  %v64 = vunpack.c.l.b16 %v24
  %v65 = vunpack.c.h.b16 %v24
  %v66 = vpack.c.b16 %v52, %v50
  %v67 = vpack.c.b16 %v53, %v51
  %v68 = vpack.c.b16 %v56, %v54
  %v69 = vpack.c.b16 %v57, %v55
  %v70 = vpack.c.b16 %v60, %v58
  %v71 = vpack.c.b16 %v61, %v59
  %v72 = vpack.c.b16 %v64, %v62
  %v73 = vpack.c.b16 %v65, %v63
  %vm82 = vcmask 523264
  %v84 = vsel %vm82, %v41, 0
  %86 = vmatprep.subr.bf16.mxu0 0
  %87 = vmatpush1.bf16.msra.mxu0 0
  %88 = vmatprep.subr.bf16.mxu0 0
  %89 = vmatpush1.bf16.msra.mxu0 0
  %90 = vmatprep.subr.bf16.mxu0 0
  %91 = vmatpush1.bf16.msra.mxu0 0
  %92 = vmatprep.subr.bf16.mxu0 0
  %93 = vmatpush1.bf16.msra.mxu0 0
  %94 = vmatprep.subr.bf16.mxu0 %v73
  %95 = vmatpush1.bf16.msra.mxu0 %v72
  %96 = vmatprep.subr.bf16.mxu0 %v71
  %97 = vmatpush1.bf16.msra.mxu0 %v70
  %98 = vmatprep.subr.bf16.mxu0 %v69
  %99 = vmatpush1.bf16.msra.mxu0 %v68
  %100 = vmatprep.subr.bf16.mxu0 %v67
  %101 = vmatpush1.bf16.msra.mxu0 %v66
  %102 = vmatprep.subr.bf16.mxu0 0
  %103 = vmatpush2.bf16.msra.mxu0 0
  %104 = vmatprep.subr.bf16.mxu0 0
  %105 = vmatpush2.bf16.msra.mxu0 0
  %106 = vmatprep.subr.bf16.mxu0 0
  %107 = vmatpush2.bf16.msra.mxu0 0
  %108 = vmatprep.subr.bf16.mxu0 0
  %109 = vmatpush2.bf16.msra.mxu0 0
  %110 = vmatprep.subr.bf16.mxu0 0
  %111 = vmatpush2.bf16.msra.mxu0 0
  %112 = vmatprep.subr.bf16.mxu0 0
  %113 = vmatpush2.bf16.msra.mxu0 0
  %114 = vmatprep.subr.bf16.mxu0 0
  %115 = vmatpush2.bf16.msra.mxu0 0
  %116 = vmatprep.subr.bf16.mxu0 0
  %117 = vmatpush2.bf16.msra.mxu0 0
  %118 = vmatprep.mubr.bf16.mxu0 0
  %119 = vmatmul.mubr.bf16.gmra.mxu0 %v84
  %v120 = vpop.f32.mrf.mxu0
  %v121 = vadd.f32 %v30, %v120
  %v122 = vpop.f32.mrf.mxu0
  %v123 = vadd.f32 %v34, %v122
  %v124 = vpop.f32.mrf.mxu0
  %v125 = vadd.f32 %v30, %v124
  %v126 = vpop.f32.mrf.mxu0
  %v127 = vadd.f32 %v34, %v126
  %128 = vdwg.mxu0
  %v129 = vpack.c.bf16 %v125, %v121
  %v130 = vpack.c.bf16 %v127, %v123
  %v133 = vunpack.c.l.b16 %v129
  %v134 = vunpack.c.l.b16 %v130
  %v135 = vunpack.c.h.b16 %v129
  %v136 = vunpack.c.h.b16 %v130
  %v137 = vpack.c.b16 %v134, %v133
  %v138 = vpack.c.b16 %v136, %v135
  %141 = vst [vmem:[%s3] sm:$0xff] %v137
  %142 = vst [vmem:[%s3 + $0x8] sm:$0xff] %v138
  // Predicated region
  $region14: #{a_base_forward.13} parent=0 // pred_check
    _
  $region15: #{a_base_forward.13} parent=0 // pred_check_branch
    %144 = sbr.rel (0) target = $region17
  $region16: #{a_base_forward.13} parent=0 // pred_region
    _
  $region17: #{a_base_forward.13} parent=0 // pred_fallthru
    _
  // Predicated region
  $region18: #{a_base_forward.13} parent=0 // pred_check
    _
  $region19: #{a_base_forward.13} parent=0 // pred_check_branch
    %146 = sbr.rel (0) target = $region21
  $region20: #{a_base_forward.13} parent=0 // pred_region
    _
  $region21: #{a_base_forward.13} parent=0 // pred_fallthru
    _

// kernel: a_base_forward.17
$region0: #{a_base_forward.17}
  #allocation0 [shape = 'u32[]', space=smem, size = 0x4, offset = 0x4, fixed_abs, tag = 'smem constant byte address 0x4 - core index']
  #allocation1 [shape = 'u32[144,128]{1,0:T(1,128)}', space=vmem, size = 0x12000, scoped, tag = 'internal scratch']
  %s0 = inlined_call_operand.vmem [shape: bf16[16,32], index: 0, kind: input, shape index: {}]
  %s1 = inlined_call_operand.vmem [shape: bf16[32,32], index: 1, kind: input, shape index: {}]
  %s2 = inlined_call_operand.vmem [shape: f32[1,32], index: 2, kind: input, shape index: {}]
  %s3 = inlined_call_operand.vmem [shape: bf16[32,32], index: 3, kind: input, shape index: {}]
  %s4 = inlined_call_operand.vmem [shape: f32[1,32], index: 4, kind: input, shape index: {}]
  %s5 = inlined_call_operand.vmem [shape: bf16[32,128], index: 5, kind: input, shape index: {}]
  %s6 = inlined_call_operand.vmem [shape: f32[1,128], index: 6, kind: input, shape index: {}]
  %s7 = inlined_call_operand.vmem [shape: f32[16,128], index: 7, kind: output, shape index: {}]
  %s8 = sld [smem:[#allocation0]]
  $region38: #{a_base_forward.17} parent=0
    _
  %s10 = ssub.s32 1, %s8
  %s11 = scalar_select 0, %s10, %s8
  // Predicated region
  $region2: #{a_base_forward.17} parent=0 // pred_check
    _
  $region3: #{a_base_forward.17} parent=0 // pred_check_branch
    %13 = sbr.rel (0) target = $region5
  $region4: #{a_base_forward.17} parent=0 // pred_region
    _
  $region5: #{a_base_forward.17} parent=0 // pred_fallthru
    _
  // Predicated region
  $region6: #{a_base_forward.17} parent=0 // pred_check
    _
  $region7: #{a_base_forward.17} parent=0 // pred_check_branch
    %15 = sbr.rel (0) target = $region9
  $region8: #{a_base_forward.17} parent=0 // pred_region
    _
  $region9: #{a_base_forward.17} parent=0 // pred_fallthru
    _
  // Predicated region
  $region10: #{a_base_forward.17} parent=0 // pred_check
    _
  $region11: #{a_base_forward.17} parent=0 // pred_check_branch
    %17 = sbr.rel (0) target = $region13
  $region12: #{a_base_forward.17} parent=0 // pred_region
    _
  $region13: #{a_base_forward.17} parent=0 // pred_fallthru
    _
  // Predicated region
  $region14: #{a_base_forward.17} parent=0 // pred_check
    _
  $region15: #{a_base_forward.17} parent=0 // pred_check_branch
    %19 = sbr.rel (0) target = $region17
  $region16: #{a_base_forward.17} parent=0 // pred_region
    _
  $region17: #{a_base_forward.17} parent=0 // pred_fallthru
    _
  // Predicated region
  $region18: #{a_base_forward.17} parent=0 // pred_check
    _
  $region19: #{a_base_forward.17} parent=0 // pred_check_branch
    %21 = sbr.rel (0) target = $region21
  $region20: #{a_base_forward.17} parent=0 // pred_region
    _
  $region21: #{a_base_forward.17} parent=0 // pred_fallthru
    _
  // Predicated region
  $region22: #{a_base_forward.17} parent=0 // pred_check
    _
  $region23: #{a_base_forward.17} parent=0 // pred_check_branch
    %23 = sbr.rel (0) target = $region25
  $region24: #{a_base_forward.17} parent=0 // pred_region
    _
  $region25: #{a_base_forward.17} parent=0 // pred_fallthru
    _
  // Predicated region
  $region26: #{a_base_forward.17} parent=0 // pred_check
    _
  $region27: #{a_base_forward.17} parent=0 // pred_check_branch
    %25 = sbr.rel (0) target = $region29
  $region28: #{a_base_forward.17} parent=0 // pred_region
    _
  $region29: #{a_base_forward.17} parent=0 // pred_fallthru
    _
  %v27 = vld [vmem:[%s0] sm:$0xf]
  %v28 = vld [vmem:[%s0 + $0x4] sm:$0xf]
  %v29 = vld [vmem:[%s1] sm:$0xf]
  %v30 = vld [vmem:[%s1 + $0x4] sm:$0xf]
  %v31 = vld [vmem:[%s1 + $0x8] sm:$0xf]
  %v32 = vld [vmem:[%s1 + $0xc] sm:$0xf]
  %v33 = vld [vmem:[%s2] sm:$0x1]
  %v35 = vlaneseq
  %v36 = vshrl.u32 %v35, 7
  %v37 = vsub.s32 0, %v36
  %v38 = vrot.slane %v33, %v37
  %v42 = vunpack.c.l.b16 %v27
  %v43 = vunpack.c.l.b16 %v28
  %v44 = vpack.c.b16 %v43, %v42
  %v49 = vunpack.c.l.b16 %v29
  %v50 = vunpack.c.l.b16 %v30
  %v51 = vunpack.c.l.b16 %v31
  %v52 = vunpack.c.l.b16 %v32
  %v53 = vpack.c.b16 %v50, %v49
  %v54 = vpack.c.b16 %v52, %v51
  %vm57 = vcmask 261120
  %v59 = vsel %vm57, %v44, 0
  %61 = vmatprep.subr.bf16.mxu0 0
  %62 = vmatpush1.bf16.msra.mxu0 0
  %63 = vmatprep.subr.bf16.mxu0 0
  %64 = vmatpush1.bf16.msra.mxu0 0
  %65 = vmatprep.subr.bf16.mxu0 0
  %66 = vmatpush1.bf16.msra.mxu0 0
  %67 = vmatprep.subr.bf16.mxu0 0
  %68 = vmatpush1.bf16.msra.mxu0 0
  %69 = vmatprep.subr.bf16.mxu0 0
  %70 = vmatpush1.bf16.msra.mxu0 0
  %71 = vmatprep.subr.bf16.mxu0 0
  %72 = vmatpush1.bf16.msra.mxu0 0
  %73 = vmatprep.subr.bf16.mxu0 0
  %74 = vmatpush1.bf16.msra.mxu0 %v54
  %75 = vmatprep.subr.bf16.mxu0 0
  %76 = vmatpush1.bf16.msra.mxu0 %v53
  %77 = vmatprep.subr.bf16.mxu0 0
  %78 = vmatpush2.bf16.msra.mxu0 0
  %79 = vmatprep.subr.bf16.mxu0 0
  %80 = vmatpush2.bf16.msra.mxu0 0
  %81 = vmatprep.subr.bf16.mxu0 0
  %82 = vmatpush2.bf16.msra.mxu0 0
  %83 = vmatprep.subr.bf16.mxu0 0
  %84 = vmatpush2.bf16.msra.mxu0 0
  %85 = vmatprep.subr.bf16.mxu0 0
  %86 = vmatpush2.bf16.msra.mxu0 0
  %87 = vmatprep.subr.bf16.mxu0 0
  %88 = vmatpush2.bf16.msra.mxu0 0
  %89 = vmatprep.subr.bf16.mxu0 0
  %90 = vmatpush2.bf16.msra.mxu0 0
  %91 = vmatprep.subr.bf16.mxu0 0
  %92 = vmatpush2.bf16.msra.mxu0 0
  %93 = vmatprep.mubr.bf16.mxu0 0
  %94 = vmatmul.mubr.bf16.gmra.mxu0 %v59
  %v95 = vpop.f32.mrf.mxu0
  %v96 = vadd.f32 %v38, %v95
  %v97 = vpop.f32.mrf.mxu0
  %v98 = vpop.f32.mrf.mxu0
  %v99 = vadd.f32 %v38, %v98
  %v100 = vpop.f32.mrf.mxu0
  %101 = vdwg.mxu0
  %vm102 = vcmp.gt.f32.partialorder %v96, 0.0
  %vm103 = vcmp.gt.f32.partialorder %v99, 0.0
  %v104 = vmul.f32 %v96, 1.442695
  %v105 = vpow.pop %v104
  %v106 = vmul.f32 %v99, 1.442695
  %v107 = vpow.pop %v106
  %v108 = vsub.f32 %v105, 1.0
  %v109 = vsub.f32 %v107, 1.0
  %v110 = vmul.f32 %v108, 1.6732632
  %v111 = vmul.f32 %v109, 1.6732632
  %v112 = vsel %vm102, %v96, %v110
  %v113 = vsel %vm103, %v99, %v111
  %v114 = vmul.f32 %v112, 1.050701
  %v115 = vmul.f32 %v113, 1.050701
  %v116 = vpack.c.bf16 %v115, %v114
  %v117 = vld [vmem:[%s3] sm:$0xf]
  %v118 = vld [vmem:[%s3 + $0x4] sm:$0xf]
  %v119 = vld [vmem:[%s3 + $0x8] sm:$0xf]
  %v120 = vld [vmem:[%s3 + $0xc] sm:$0xf]
  %v121 = vld [vmem:[%s4] sm:$0x1]
  %v123 = vlaneseq
  %v124 = vshrl.u32 %v123, 7
  %v125 = vsub.s32 0, %v124
  %v126 = vrot.slane %v121, %v125
  %v132 = vunpack.c.l.b16 %v117
  %v133 = vunpack.c.l.b16 %v118
  %v134 = vunpack.c.l.b16 %v119
  %v135 = vunpack.c.l.b16 %v120
  %v136 = vpack.c.b16 %v133, %v132
  %v137 = vpack.c.b16 %v135, %v134
  %v141 = vsel %vm57, %v116, 0
  %143 = vmatprep.subr.bf16.mxu0 0
  %144 = vmatpush1.bf16.msra.mxu0 0
  %145 = vmatprep.subr.bf16.mxu0 0
  %146 = vmatpush1.bf16.msra.mxu0 0
  %147 = vmatprep.subr.bf16.mxu0 0
  %148 = vmatpush1.bf16.msra.mxu0 0
  %149 = vmatprep.subr.bf16.mxu0 0
  %150 = vmatpush1.bf16.msra.mxu0 0
  %151 = vmatprep.subr.bf16.mxu0 0
  %152 = vmatpush1.bf16.msra.mxu0 0
  %153 = vmatprep.subr.bf16.mxu0 0
  %154 = vmatpush1.bf16.msra.mxu0 0
  %155 = vmatprep.subr.bf16.mxu0 0
  %156 = vmatpush1.bf16.msra.mxu0 %v137
  %157 = vmatprep.subr.bf16.mxu0 0
  %158 = vmatpush1.bf16.msra.mxu0 %v136
  %159 = vmatprep.subr.bf16.mxu0 0
  %160 = vmatpush2.bf16.msra.mxu0 0
  %161 = vmatprep.subr.bf16.mxu0 0
  %162 = vmatpush2.bf16.msra.mxu0 0
  %163 = vmatprep.subr.bf16.mxu0 0
  %164 = vmatpush2.bf16.msra.mxu0 0
  %165 = vmatprep.subr.bf16.mxu0 0
  %166 = vmatpush2.bf16.msra.mxu0 0
  %167 = vmatprep.subr.bf16.mxu0 0
  %168 = vmatpush2.bf16.msra.mxu0 0
  %169 = vmatprep.subr.bf16.mxu0 0
  %170 = vmatpush2.bf16.msra.mxu0 0
  %171 = vmatprep.subr.bf16.mxu0 0
  %172 = vmatpush2.bf16.msra.mxu0 0
  %173 = vmatprep.subr.bf16.mxu0 0
  %174 = vmatpush2.bf16.msra.mxu0 0
  %175 = vmatprep.mubr.bf16.mxu0 0
  %176 = vmatmul.mubr.bf16.gmra.mxu0 %v141
  %v177 = vpop.f32.mrf.mxu0
  %v178 = vadd.f32 %v126, %v177
  %v179 = vpop.f32.mrf.mxu0
  %v180 = vpop.f32.mrf.mxu0
  %v181 = vadd.f32 %v126, %v180
  %v182 = vpop.f32.mrf.mxu0
  %183 = vdwg.mxu0
  %vm184 = vcmp.gt.f32.partialorder %v178, 0.0
  %vm185 = vcmp.gt.f32.partialorder %v181, 0.0
  %v186 = vmul.f32 %v178, 1.442695
  %v187 = vpow.pop %v186
  %v188 = vmul.f32 %v181, 1.442695
  %v189 = vpow.pop %v188
  %v190 = vsub.f32 %v187, 1.0
  %v191 = vsub.f32 %v189, 1.0
  %v192 = vmul.f32 %v190, 1.6732632
  %v193 = vmul.f32 %v191, 1.6732632
  %v194 = vsel %vm184, %v178, %v192
  %v195 = vsel %vm185, %v181, %v193
  %v196 = vmul.f32 %v194, 1.050701
  %v197 = vmul.f32 %v195, 1.050701
  %v198 = vpack.c.bf16 %v197, %v196
  %v199 = vld [vmem:[%s5] sm:$0xf]
  %v200 = vld [vmem:[%s5 + $0x4] sm:$0xf]
  %v201 = vld [vmem:[%s5 + $0x8] sm:$0xf]
  %v202 = vld [vmem:[%s5 + $0xc] sm:$0xf]
  %v203 = vld [vmem:[%s6] sm:$0x1]
  %v205 = vlaneseq
  %v206 = vshrl.u32 %v205, 7
  %v207 = vsub.s32 0, %v206
  %v208 = vrot.slane %v203, %v207
  %v214 = vunpack.c.l.b16 %v199
  %v215 = vunpack.c.l.b16 %v200
  %v216 = vunpack.c.l.b16 %v201
  %v217 = vunpack.c.l.b16 %v202
  %v218 = vpack.c.b16 %v215, %v214
  %v219 = vpack.c.b16 %v217, %v216
  %v223 = vsel %vm57, %v198, 0
  %225 = vmatprep.subr.bf16.mxu0 0
  %226 = vmatpush1.bf16.msra.mxu0 0
  %227 = vmatprep.subr.bf16.mxu0 0
  %228 = vmatpush1.bf16.msra.mxu0 0
  %229 = vmatprep.subr.bf16.mxu0 0
  %230 = vmatpush1.bf16.msra.mxu0 0
  %231 = vmatprep.subr.bf16.mxu0 0
  %232 = vmatpush1.bf16.msra.mxu0 0
  %233 = vmatprep.subr.bf16.mxu0 0
  %234 = vmatpush1.bf16.msra.mxu0 0
  %235 = vmatprep.subr.bf16.mxu0 0
  %236 = vmatpush1.bf16.msra.mxu0 0
  %237 = vmatprep.subr.bf16.mxu0 0
  %238 = vmatpush1.bf16.msra.mxu0 %v219
  %239 = vmatprep.subr.bf16.mxu0 0
  %240 = vmatpush1.bf16.msra.mxu0 %v218
  %241 = vmatprep.subr.bf16.mxu0 0
  %242 = vmatpush2.bf16.msra.mxu0 0
  %243 = vmatprep.subr.bf16.mxu0 0
  %244 = vmatpush2.bf16.msra.mxu0 0
  %245 = vmatprep.subr.bf16.mxu0 0
  %246 = vmatpush2.bf16.msra.mxu0 0
  %247 = vmatprep.subr.bf16.mxu0 0
  %248 = vmatpush2.bf16.msra.mxu0 0
  %249 = vmatprep.subr.bf16.mxu0 0
  %250 = vmatpush2.bf16.msra.mxu0 0
  %251 = vmatprep.subr.bf16.mxu0 0
  %252 = vmatpush2.bf16.msra.mxu0 0
  %253 = vmatprep.subr.bf16.mxu0 0
  %254 = vmatpush2.bf16.msra.mxu0 0
  %255 = vmatprep.subr.bf16.mxu0 0
  %256 = vmatpush2.bf16.msra.mxu0 0
  %257 = vmatprep.mubr.bf16.mxu0 0
  %258 = vmatmul.mubr.bf16.gmra.mxu0 %v223
  %v259 = vpop.f32.mrf.mxu0
  %v260 = vadd.f32 %v208, %v259
  %v261 = vpop.f32.mrf.mxu0
  %v262 = vpop.f32.mrf.mxu0
  %v263 = vadd.f32 %v208, %v262
  %v264 = vpop.f32.mrf.mxu0
  %265 = vdwg.mxu0
  %266 = vst [vmem:[%s7] sm:$0xff] %v260
  %267 = vst [vmem:[%s7 + $0x8] sm:$0xff] %v263
  // Predicated region
  $region30: #{a_base_forward.17} parent=0 // pred_check
    _
  $region31: #{a_base_forward.17} parent=0 // pred_check_branch
    %269 = sbr.rel (0) target = $region33
  $region32: #{a_base_forward.17} parent=0 // pred_region
    _
  $region33: #{a_base_forward.17} parent=0 // pred_fallthru
    _
  // Predicated region
  $region34: #{a_base_forward.17} parent=0 // pred_check
    _
  $region35: #{a_base_forward.17} parent=0 // pred_check_branch
    %271 = sbr.rel (0) target = $region37
  $region36: #{a_base_forward.17} parent=0 // pred_region
    _
  $region37: #{a_base_forward.17} parent=0 // pred_fallthru
    _

</llo_original>
